<compile_context>
chip_gen: v5e
topology: v5e:2x2
jax: 0.10.0
libtpu: 0.0.40
codegen_flags: <defaults>
</compile_context>

<pallas_src>
import jax
import jax.numpy as jnp
from jax.experimental import pallas as pl
from jax.experimental.pallas import tpu as pltpu

EPS = 1e-5
TM_MM = 256                      # row tile for the MXU matmul passes
TM_EW = 512                      # row tile for the elementwise epilogue (HBM-bound)
VMEM_LIMIT = 48 * 1024 * 1024    # explicit scoped-VMEM limit; safe on v5e/v6e/v7x


def _round_up(x, m):
    return ((x + m - 1) // m) * m


def _pick_tile(dim, candidates=(512, 384, 256, 128)):
    for t in candidates:
        if dim % t == 0:
            return t
    return 128   # all padded dims are multiples of 128


def _pad2d(a, rows, cols):
    r, c = a.shape
    return jnp.pad(a, ((0, rows - r), (0, cols - c)))


def _pad1d(a, n):
    return jnp.pad(a, (0, n - a.shape[0]))


# ---------------------------------------------------------------- Pallas kernels
def _mm_stats_kernel(x_ref, w_ref, o_ref, s_ref, q_ref, acc_ref):
    """out = x @ w (bf16 inputs, f32 accumulate) fused with per-channel sum and
    sum-of-squares of the produced tile (BatchNorm batch statistics)."""
    k = pl.program_id(2)

    @pl.when(k == 0)
    def _():
        acc_ref[...] = jnp.zeros_like(acc_ref)

    acc_ref[...] += jnp.dot(x_ref[...], w_ref[...],
                            preferred_element_type=jnp.float32)

    @pl.when(k == pl.num_programs(2) - 1)
    def _():
        acc = acc_ref[...]
        o_ref[...] = acc
        cs = jnp.sum(acc, axis=0, keepdims=True)          # (1, tn)
        cq = jnp.sum(acc * acc, axis=0, keepdims=True)    # (1, tn)
        s_ref[...] = jnp.broadcast_to(cs, s_ref.shape)    # (8, tn) partial-sum row
        q_ref[...] = jnp.broadcast_to(cq, q_ref.shape)


def matmul_stats(x, w, *, real_m, tm=TM_MM):
    """(M_pad, K_pad)bf16 @ (K_pad, C_pad)bf16 -> f32 output plus batch mean/var.

    Per-M-tile stats partials are written to separate rows (so the M grid axis stays
    'parallel' — both v7x TensorCores get work) and reduced outside the call. Padded
    rows/columns are all-zero so they do not perturb the statistics."""
    M_pad, K_pad = x.shape
    _, C_pad = w.shape
    tk = _pick_tile(K_pad)
    tn = _pick_tile(C_pad, (256, 128))
    n_i, n_j, n_k = M_pad // tm, C_pad // tn, K_pad // tk

    out, s_p, q_p = pl.pallas_call(
        _mm_stats_kernel,
        out_shape=(
            jax.ShapeDtypeStruct((M_pad, C_pad), jnp.float32),
            jax.ShapeDtypeStruct((n_i * 8, C_pad), jnp.float32),
            jax.ShapeDtypeStruct((n_i * 8, C_pad), jnp.float32),
        ),
        grid=(n_i, n_j, n_k),
        in_specs=[
            pl.BlockSpec((tm, tk), lambda i, j, k: (i, k)),
            pl.BlockSpec((tk, tn), lambda i, j, k: (k, j)),
        ],
        out_specs=(
            pl.BlockSpec((tm, tn), lambda i, j, k: (i, j)),
            pl.BlockSpec((8, tn), lambda i, j, k: (i, j)),
            pl.BlockSpec((8, tn), lambda i, j, k: (i, j)),
        ),
        scratch_shapes=[pltpu.VMEM((tm, tn), jnp.float32)],
        compiler_params=pltpu.CompilerParams(
            dimension_semantics=("parallel", "parallel", "arbitrary"),
            vmem_limit_bytes=VMEM_LIMIT,
        ),
    )(x, w)

    sums = jnp.sum(s_p.reshape(n_i, 8, C_pad)[:, 0, :], axis=0)
    ssqs = jnp.sum(q_p.reshape(n_i, 8, C_pad)[:, 0, :], axis=0)
    mean = sums / real_m
    var = jnp.maximum(ssqs / real_m - mean * mean, 0.0)   # clamp against cancellation
    return out, mean, var


def _bn_add_relu_kernel(c_ref, r_ref, s2_ref, t2_ref, sr_ref, tr_ref, o_ref):
    main = c_ref[...] * s2_ref[...] + t2_ref[...]        # bn2(conv2(.))
    res = r_ref[...] * sr_ref[...] + tr_ref[...]         # bn_sc(conv_sc(x))
    o_ref[...] = jnp.maximum(main + res, 0.0)


def _bn_add_relu_id_kernel(c_ref, r_ref, s2_ref, t2_ref, o_ref):
    o_ref[...] = jnp.maximum(c_ref[...] * s2_ref[...] + t2_ref[...] + r_ref[...], 0.0)


def _ew_call(kernel, tensors, vecs, tm):
    M_pad, C_pad = tensors[0].shape
    specs = ([pl.BlockSpec((tm, C_pad), lambda i: (i, 0)) for _ in tensors]
             + [pl.BlockSpec((1, C_pad), lambda i: (0, 0)) for _ in vecs])
    return pl.pallas_call(
        kernel,
        out_shape=jax.ShapeDtypeStruct((M_pad, C_pad), jnp.float32),
        grid=(M_pad // tm,),
        in_specs=specs,
        out_specs=pl.BlockSpec((tm, C_pad), lambda i: (i, 0)),
        compiler_params=pltpu.CompilerParams(
            dimension_semantics=("parallel",),
            vmem_limit_bytes=VMEM_LIMIT,
        ),
    )(*tensors, *[v.reshape(1, -1) for v in vecs])


def bn_add_relu(c2, sc, s2, t2, ss, ts, tm=TM_EW):
    return _ew_call(_bn_add_relu_kernel, (c2, sc), (s2, t2, ss, ts), tm)


def bn_add_relu_identity(c2, sc, s2, t2, tm=TM_EW):
    return _ew_call(_bn_add_relu_id_kernel, (c2, sc), (s2, t2), tm)


# ---------------------------------------------------------------- JAX glue
def im2col_3x3(x_nhwc):
    """3x3, stride 1, pad 1 patches. Column ordering c*9 + (kh*3+kw), matching
    weight.reshape(C_out, C_in*9)."""
    # TODO(synk): replace with an in-kernel halo'd row-streaming conv (manual DMA)
    # so the conv input is not expanded 9x in HBM; kept JAX-side here for safety.
    N, H, W, C = x_nhwc.shape
    xp = jnp.pad(x_nhwc, ((0, 0), (1, 1), (1, 1), (0, 0)))
    slices = [xp[:, kh:kh + H, kw:kw + W, :] for kh in range(3) for kw in range(3)]
    patches = jnp.stack(slices, axis=-1)          # (N, H, W, C, 9)
    return patches.reshape(N * H * W, C * 9)


def bn_affine(mean, var, gamma, beta):
    scale = gamma * jax.lax.rsqrt(var + EPS)
    shift = beta - mean * scale
    return scale, shift


def residual_block_forward(x_nchw, params):
    """Matches ResidualBlock.forward (kernel=3, stride=1, pad=1, training-mode BN).
    Conv biases are omitted: bias followed by training-mode BatchNorm cancels exactly."""
    N, Cin, H, W = x_nchw.shape
    Cout = params["w1"].shape[0]
    M = N * H * W

    C_pad = _round_up(Cout, 128)          # lane-dense output channel dim
    M_pad = _round_up(M, TM_EW)           # multiple of both row tiles (512, 256)

    x = jnp.transpose(x_nchw, (0, 2, 3, 1)).astype(jnp.float32)   # NHWC

    # --- conv1 (3x3) with fused batch stats ---------------------------------
    K1 = Cin * 9
    K1_pad = _round_up(K1, 128)
    p1 = _pad2d(im2col_3x3(x.astype(jnp.bfloat16)), M_pad, K1_pad)
    w1 = _pad2d(params["w1"].reshape(Cout, K1).T.astype(jnp.bfloat16), K1_pad, C_pad)
    c1, m1, v1 = matmul_stats(p1, w1, real_m=M)
    s1, t1 = bn_affine(m1, v1, _pad1d(params["g1"], C_pad),
                       _pad1d(params["beta1"], C_pad))

    # --- bn1 + ReLU folded into conv2's bf16 patch production (single XLA fusion;
    #     no standalone y1 round trip / elementwise pallas_call) ---------------
    y1 = jnp.maximum(c1[:M] * s1 + t1, 0.0).astype(jnp.bfloat16)
    K2 = C_pad * 9                                 # already a multiple of 128
    p2 = _pad2d(im2col_3x3(y1.reshape(N, H, W, C_pad)), M_pad, K2)
    w2_full = jnp.zeros((Cout, C_pad, 3, 3), jnp.float32)
    w2_full = w2_full.at[:, :Cout].set(params["w2"])
    w2 = _pad2d(w2_full.reshape(Cout, K2).T.astype(jnp.bfloat16), K2, C_pad)
    c2, m2, v2 = matmul_stats(p2, w2, real_m=M)
    s2, t2 = bn_affine(m2, v2, _pad1d(params["g2"], C_pad),
                       _pad1d(params["beta2"], C_pad))

    # --- shortcut + fused bn2/add/ReLU epilogue ------------------------------
    if Cin != Cout:
        Ks = _round_up(Cin, 128)
        xs = _pad2d(x.reshape(M, Cin).astype(jnp.bfloat16), M_pad, Ks)
        ws = _pad2d(params["ws"].reshape(Cout, Cin).T.astype(jnp.bfloat16), Ks, C_pad)
        sc, ms, vs = matmul_stats(xs, ws, real_m=M)
        ss, ts = bn_affine(ms, vs, _pad1d(params["gs"], C_pad),
                           _pad1d(params["betas"], C_pad))
        out = bn_add_relu(c2, sc, s2, t2, ss, ts)
    else:
        sc = _pad2d(x.reshape(M, Cin), M_pad, C_pad)   # identity shortcut (f32)
        out = bn_add_relu_identity(c2, sc, s2, t2)

    out = out[:M, :Cout].reshape(N, H, W, Cout)
    return jnp.transpose(out, (0, 3, 1, 2)).astype(x_nchw.dtype)   # back to NCHW


def init_params(key, cin, cout):
    ks = jax.random.split(key, 3)
    f32 = jnp.float32
    return {
        # Conv biases intentionally omitted (exactly absorbed by training-mode BN).
        "w1": 0.1 * jax.random.normal(ks[0], (cout, cin, 3, 3), f32),
        "w2": 0.1 * jax.random.normal(ks[1], (cout, cout, 3, 3), f32),
        "ws": 0.1 * jax.random.normal(ks[2], (cout, cin, 1, 1), f32),
        "g1": jnp.ones((cout,), f32), "beta1": jnp.zeros((cout,), f32),
        "g2": jnp.ones((cout,), f32), "beta2": jnp.zeros((cout,), f32),
        "gs": jnp.ones((cout,), f32), "betas": jnp.zeros((cout,), f32),
    }


if __name__ == "__main__":
    key = jax.random.PRNGKey(0)
    k_x, k_p = jax.random.split(key)
    N, Cin, Cout, H, W = 2, 4, 8, 16, 16          # Cin != Cout -> exercises shortcut conv
    x = jax.random.normal(k_x, (N, Cin, H, W), jnp.float32)
    params = init_params(k_p, Cin, Cout)

    fwd = jax.jit(residual_block_forward)
    out = jax.block_until_ready(fwd(x, params))
    assert out.shape == (N, Cout, H, W)
    assert bool(jnp.all(out >= 0.0))              # final ReLU sanity check
    print("KERNEL_OK")
</pallas_src>

<mosaic_0001>
module attributes {stable_mosaic.version = 11 : i64} {
  func.func @_mm_stats_kernel(%arg0: i32, %arg1: i32, %arg2: i32, %arg3: memref<256x128xbf16, #tpu.memory_space<vmem>>, %arg4: memref<128x128xbf16, #tpu.memory_space<vmem>>, %arg5: memref<256x128xf32, #tpu.memory_space<vmem>>, %arg6: memref<8x128xf32, #tpu.memory_space<vmem>>, %arg7: memref<8x128xf32, #tpu.memory_space<vmem>>, %arg8: memref<256x128xf32, #tpu.memory_space<vmem>>) attributes {dimension_semantics = [#tpu.dimension_semantics<parallel>, #tpu.dimension_semantics<parallel>, #tpu.dimension_semantics<arbitrary>], iteration_bounds = array<i64: 2, 1, 1>, scalar_prefetch = 0 : i64, scratch_operands = 1 : i64, tpu.core_type = #tpu.core_type<tc>, window_params = [{transform_indices = @transform_0, window_bounds = array<i64: 256, 128>}, {transform_indices = @transform_1, window_bounds = array<i64: 128, 128>}, {transform_indices = @transform_2, window_bounds = array<i64: 256, 128>}, {transform_indices = @transform_3, window_bounds = array<i64: 8, 128>}, {transform_indices = @transform_4, window_bounds = array<i64: 8, 128>}]} {
    %c0_i32 = arith.constant 0 : i32
    %0 = arith.cmpi eq, %arg2, %c0_i32 : i32
    %1 = arith.extui %0 : i1 to i32
    %c0_i32_0 = arith.constant 0 : i32
    %2 = arith.cmpi ne, %1, %c0_i32_0 : i32
    scf.if %2 {
      %cst_10 = arith.constant 0.000000e+00 : f32
      %12 = vector.broadcast %cst_10 : f32 to vector<256x128xf32>
      %c0_11 = arith.constant 0 : index
      %c0_12 = arith.constant 0 : index
      %13 = vector.load %arg8[%c0_11, %c0_12] : memref<256x128xf32, #tpu.memory_space<vmem>>, vector<256x128xf32>
      tpu.vector_store %arg8[%c0_11, %c0_12], %12 {strides = array<i32>} : memref<256x128xf32, #tpu.memory_space<vmem>>, vector<256x128xf32>,
    } else {
    }
    %c0 = arith.constant 0 : index
    %c0_1 = arith.constant 0 : index
    %3 = vector.load %arg8[%c0, %c0_1] : memref<256x128xf32, #tpu.memory_space<vmem>>, vector<256x128xf32>
    %c0_2 = arith.constant 0 : index
    %c0_3 = arith.constant 0 : index
    %4 = vector.load %arg3[%c0_2, %c0_3] : memref<256x128xbf16, #tpu.memory_space<vmem>>, vector<256x128xbf16>
    %c0_4 = arith.constant 0 : index
    %c0_5 = arith.constant 0 : index
    %5 = vector.load %arg4[%c0_4, %c0_5] : memref<128x128xbf16, #tpu.memory_space<vmem>>, vector<128x128xbf16>
    %cst = arith.constant dense<0.000000e+00> : vector<256x128xf32>
    %6 = tpu.matmul %4, %5, %cst {dimension_numbers = #tpu.dot_dimension_numbers<[1], [0], [0], [1], [0, 0, 1, 1], [], []>} : vector<256x128xbf16>, vector<128x128xbf16>, vector<256x128xf32> -> vector<256x128xf32>
    %7 = arith.addf %3, %6 : vector<256x128xf32>
    %c0_6 = arith.constant 0 : index
    %c0_7 = arith.constant 0 : index
    %8 = vector.load %arg8[%c0_6, %c0_7] : memref<256x128xf32, #tpu.memory_space<vmem>>, vector<256x128xf32>
    tpu.vector_store %arg8[%c0_6, %c0_7], %7 {strides = array<i32>} : memref<256x128xf32, #tpu.memory_space<vmem>>, vector<256x128xf32>,
    %c0_i32_8 = arith.constant 0 : i32
    %9 = arith.cmpi eq, %arg2, %c0_i32_8 : i32
    %10 = arith.extui %9 : i1 to i32
    %c0_i32_9 = arith.constant 0 : i32
    %11 = arith.cmpi ne, %10, %c0_i32_9 : i32
    scf.if %11 {
      %c0_10 = arith.constant 0 : index
      %c0_11 = arith.constant 0 : index
      %12 = vector.load %arg8[%c0_10, %c0_11] : memref<256x128xf32, #tpu.memory_space<vmem>>, vector<256x128xf32>
      %c0_12 = arith.constant 0 : index
      %c0_13 = arith.constant 0 : index
      %13 = vector.load %arg5[%c0_12, %c0_13] : memref<256x128xf32, #tpu.memory_space<vmem>>, vector<256x128xf32>
      tpu.vector_store %arg5[%c0_12, %c0_13], %12 {strides = array<i32>} : memref<256x128xf32, #tpu.memory_space<vmem>>, vector<256x128xf32>,
      %cst_14 = arith.constant dense<0.000000e+00> : vector<128xf32>
      %14 = vector.multi_reduction <add>, %12, %cst_14 [0] : vector<256x128xf32> to vector<128xf32>
      %15 = vector.shape_cast %14 : vector<128xf32> to vector<1x128xf32>
      %16 = arith.mulf %12, %12 : vector<256x128xf32>
      %cst_15 = arith.constant dense<0.000000e+00> : vector<128xf32>
      %17 = vector.multi_reduction <add>, %16, %cst_15 [0] : vector<256x128xf32> to vector<128xf32>
      %18 = vector.shape_cast %17 : vector<128xf32> to vector<1x128xf32>
      %19 = vector.shape_cast %15 : vector<1x128xf32> to vector<1x128xf32>
      %20 = vector.broadcast %19 : vector<1x128xf32> to vector<8x128xf32>
      %c0_16 = arith.constant 0 : index
      %c0_17 = arith.constant 0 : index
      %21 = vector.load %arg6[%c0_16, %c0_17] : memref<8x128xf32, #tpu.memory_space<vmem>>, vector<8x128xf32>
      tpu.vector_store %arg6[%c0_16, %c0_17], %20 {strides = array<i32>} : memref<8x128xf32, #tpu.memory_space<vmem>>, vector<8x128xf32>,
      %22 = vector.shape_cast %18 : vector<1x128xf32> to vector<1x128xf32>
      %23 = vector.broadcast %22 : vector<1x128xf32> to vector<8x128xf32>
      %c0_18 = arith.constant 0 : index
      %c0_19 = arith.constant 0 : index
      %24 = vector.load %arg7[%c0_18, %c0_19] : memref<8x128xf32, #tpu.memory_space<vmem>>, vector<8x128xf32>
      tpu.vector_store %arg7[%c0_18, %c0_19], %23 {strides = array<i32>} : memref<8x128xf32, #tpu.memory_space<vmem>>, vector<8x128xf32>,
    } else {
    }
    return
  }
  func.func @transform_0(%arg0: i32, %arg1: i32, %arg2: i32) -> (i32, i32) {
    %c0_i32 = arith.constant 0 : i32
    return %arg0, %arg2 : i32, i32
  }
  func.func @transform_1(%arg0: i32, %arg1: i32, %arg2: i32) -> (i32, i32) {
    %c0_i32 = arith.constant 0 : i32
    return %arg2, %arg1 : i32, i32
  }
  func.func @transform_2(%arg0: i32, %arg1: i32, %arg2: i32) -> (i32, i32) {
    %c0_i32 = arith.constant 0 : i32
    return %arg0, %arg1 : i32, i32
  }
  func.func @transform_3(%arg0: i32, %arg1: i32, %arg2: i32) -> (i32, i32) {
    %c0_i32 = arith.constant 0 : i32
    return %arg0, %arg1 : i32, i32
  }
  func.func @transform_4(%arg0: i32, %arg1: i32, %arg2: i32) -> (i32, i32) {
    %c0_i32 = arith.constant 0 : i32
    return %arg0, %arg1 : i32, i32
  }
}

module attributes {stable_mosaic.version = 11 : i64} {
  func.func @_mm_stats_kernel(%arg0: i32, %arg1: i32, %arg2: i32, %arg3: memref<256x384xbf16, #tpu.memory_space<vmem>>, %arg4: memref<384x128xbf16, #tpu.memory_space<vmem>>, %arg5: memref<256x128xf32, #tpu.memory_space<vmem>>, %arg6: memref<8x128xf32, #tpu.memory_space<vmem>>, %arg7: memref<8x128xf32, #tpu.memory_space<vmem>>, %arg8: memref<256x128xf32, #tpu.memory_space<vmem>>) attributes {dimension_semantics = [#tpu.dimension_semantics<parallel>, #tpu.dimension_semantics<parallel>, #tpu.dimension_semantics<arbitrary>], iteration_bounds = array<i64: 2, 1, 3>, scalar_prefetch = 0 : i64, scratch_operands = 1 : i64, tpu.core_type = #tpu.core_type<tc>, window_params = [{transform_indices = @transform_0, window_bounds = array<i64: 256, 384>}, {transform_indices = @transform_1, window_bounds = array<i64: 384, 128>}, {transform_indices = @transform_2, window_bounds = array<i64: 256, 128>}, {transform_indices = @transform_3, window_bounds = array<i64: 8, 128>}, {transform_indices = @transform_4, window_bounds = array<i64: 8, 128>}]} {
    %c0_i32 = arith.constant 0 : i32
    %0 = arith.cmpi eq, %arg2, %c0_i32 : i32
    %1 = arith.extui %0 : i1 to i32
    %c0_i32_0 = arith.constant 0 : i32
    %2 = arith.cmpi ne, %1, %c0_i32_0 : i32
    scf.if %2 {
      %cst_9 = arith.constant 0.000000e+00 : f32
      %12 = vector.broadcast %cst_9 : f32 to vector<256x128xf32>
      %c0_10 = arith.constant 0 : index
      %c0_11 = arith.constant 0 : index
      %13 = vector.load %arg8[%c0_10, %c0_11] : memref<256x128xf32, #tpu.memory_space<vmem>>, vector<256x128xf32>
      tpu.vector_store %arg8[%c0_10, %c0_11], %12 {strides = array<i32>} : memref<256x128xf32, #tpu.memory_space<vmem>>, vector<256x128xf32>,
    } else {
    }
    %c0 = arith.constant 0 : index
    %c0_1 = arith.constant 0 : index
    %3 = vector.load %arg8[%c0, %c0_1] : memref<256x128xf32, #tpu.memory_space<vmem>>, vector<256x128xf32>
    %c0_2 = arith.constant 0 : index
    %c0_3 = arith.constant 0 : index
    %4 = vector.load %arg3[%c0_2, %c0_3] : memref<256x384xbf16, #tpu.memory_space<vmem>>, vector<256x384xbf16>
    %c0_4 = arith.constant 0 : index
    %c0_5 = arith.constant 0 : index
    %5 = vector.load %arg4[%c0_4, %c0_5] : memref<384x128xbf16, #tpu.memory_space<vmem>>, vector<384x128xbf16>
    %cst = arith.constant dense<0.000000e+00> : vector<256x128xf32>
    %6 = tpu.matmul %4, %5, %cst {dimension_numbers = #tpu.dot_dimension_numbers<[1], [0], [0], [1], [0, 0, 1, 1], [], []>} : vector<256x384xbf16>, vector<384x128xbf16>, vector<256x128xf32> -> vector<256x128xf32>
    %7 = arith.addf %3, %6 : vector<256x128xf32>
    %c0_6 = arith.constant 0 : index
    %c0_7 = arith.constant 0 : index
    %8 = vector.load %arg8[%c0_6, %c0_7] : memref<256x128xf32, #tpu.memory_space<vmem>>, vector<256x128xf32>
    tpu.vector_store %arg8[%c0_6, %c0_7], %7 {strides = array<i32>} : memref<256x128xf32, #tpu.memory_space<vmem>>, vector<256x128xf32>,
    %c2_i32 = arith.constant 2 : i32
    %9 = arith.cmpi eq, %arg2, %c2_i32 : i32
    %10 = arith.extui %9 : i1 to i32
    %c0_i32_8 = arith.constant 0 : i32
    %11 = arith.cmpi ne, %10, %c0_i32_8 : i32
    scf.if %11 {
      %c0_9 = arith.constant 0 : index
      %c0_10 = arith.constant 0 : index
      %12 = vector.load %arg8[%c0_9, %c0_10] : memref<256x128xf32, #tpu.memory_space<vmem>>, vector<256x128xf32>
      %c0_11 = arith.constant 0 : index
      %c0_12 = arith.constant 0 : index
      %13 = vector.load %arg5[%c0_11, %c0_12] : memref<256x128xf32, #tpu.memory_space<vmem>>, vector<256x128xf32>
      tpu.vector_store %arg5[%c0_11, %c0_12], %12 {strides = array<i32>} : memref<256x128xf32, #tpu.memory_space<vmem>>, vector<256x128xf32>,
      %cst_13 = arith.constant dense<0.000000e+00> : vector<128xf32>
      %14 = vector.multi_reduction <add>, %12, %cst_13 [0] : vector<256x128xf32> to vector<128xf32>
      %15 = vector.shape_cast %14 : vector<128xf32> to vector<1x128xf32>
      %16 = arith.mulf %12, %12 : vector<256x128xf32>
      %cst_14 = arith.constant dense<0.000000e+00> : vector<128xf32>
      %17 = vector.multi_reduction <add>, %16, %cst_14 [0] : vector<256x128xf32> to vector<128xf32>
      %18 = vector.shape_cast %17 : vector<128xf32> to vector<1x128xf32>
      %19 = vector.shape_cast %15 : vector<1x128xf32> to vector<1x128xf32>
      %20 = vector.broadcast %19 : vector<1x128xf32> to vector<8x128xf32>
      %c0_15 = arith.constant 0 : index
      %c0_16 = arith.constant 0 : index
      %21 = vector.load %arg6[%c0_15, %c0_16] : memref<8x128xf32, #tpu.memory_space<vmem>>, vector<8x128xf32>
      tpu.vector_store %arg6[%c0_15, %c0_16], %20 {strides = array<i32>} : memref<8x128xf32, #tpu.memory_space<vmem>>, vector<8x128xf32>,
      %22 = vector.shape_cast %18 : vector<1x128xf32> to vector<1x128xf32>
      %23 = vector.broadcast %22 : vector<1x128xf32> to vector<8x128xf32>
      %c0_17 = arith.constant 0 : index
      %c0_18 = arith.constant 0 : index
      %24 = vector.load %arg7[%c0_17, %c0_18] : memref<8x128xf32, #tpu.memory_space<vmem>>, vector<8x128xf32>
      tpu.vector_store %arg7[%c0_17, %c0_18], %23 {strides = array<i32>} : memref<8x128xf32, #tpu.memory_space<vmem>>, vector<8x128xf32>,
    } else {
    }
    return
  }
  func.func @transform_0(%arg0: i32, %arg1: i32, %arg2: i32) -> (i32, i32) {
    %c0_i32 = arith.constant 0 : i32
    return %arg0, %arg2 : i32, i32
  }
  func.func @transform_1(%arg0: i32, %arg1: i32, %arg2: i32) -> (i32, i32) {
    %c0_i32 = arith.constant 0 : i32
    return %arg2, %arg1 : i32, i32
  }
  func.func @transform_2(%arg0: i32, %arg1: i32, %arg2: i32) -> (i32, i32) {
    %c0_i32 = arith.constant 0 : i32
    return %arg0, %arg1 : i32, i32
  }
  func.func @transform_3(%arg0: i32, %arg1: i32, %arg2: i32) -> (i32, i32) {
    %c0_i32 = arith.constant 0 : i32
    return %arg0, %arg1 : i32, i32
  }
  func.func @transform_4(%arg0: i32, %arg1: i32, %arg2: i32) -> (i32, i32) {
    %c0_i32 = arith.constant 0 : i32
    return %arg0, %arg1 : i32, i32
  }
}

module attributes {stable_mosaic.version = 11 : i64} {
  func.func @_bn_add_relu_kernel(%arg0: i32, %arg1: memref<512x128xf32, #tpu.memory_space<vmem>>, %arg2: memref<512x128xf32, #tpu.memory_space<vmem>>, %arg3: memref<1x128xf32, #tpu.memory_space<vmem>>, %arg4: memref<1x128xf32, #tpu.memory_space<vmem>>, %arg5: memref<1x128xf32, #tpu.memory_space<vmem>>, %arg6: memref<1x128xf32, #tpu.memory_space<vmem>>, %arg7: memref<512x128xf32, #tpu.memory_space<vmem>>) attributes {dimension_semantics = [#tpu.dimension_semantics<parallel>], iteration_bounds = array<i64: 1>, scalar_prefetch = 0 : i64, scratch_operands = 0 : i64, tpu.core_type = #tpu.core_type<tc>, window_params = [{transform_indices = @transform_0, window_bounds = array<i64: 512, 128>}, {transform_indices = @transform_1, window_bounds = array<i64: 512, 128>}, {pipeline_mode = #tpu.pipeline_mode<synchronous>, transform_indices = @transform_2, window_bounds = array<i64: 1, 128>}, {pipeline_mode = #tpu.pipeline_mode<synchronous>, transform_indices = @transform_3, window_bounds = array<i64: 1, 128>}, {pipeline_mode = #tpu.pipeline_mode<synchronous>, transform_indices = @transform_4, window_bounds = array<i64: 1, 128>}, {pipeline_mode = #tpu.pipeline_mode<synchronous>, transform_indices = @transform_5, window_bounds = array<i64: 1, 128>}, {transform_indices = @transform_6, window_bounds = array<i64: 512, 128>}]} {
    %c0 = arith.constant 0 : index
    %c0_0 = arith.constant 0 : index
    %0 = vector.load %arg1[%c0, %c0_0] : memref<512x128xf32, #tpu.memory_space<vmem>>, vector<512x128xf32>
    %c0_1 = arith.constant 0 : index
    %c0_2 = arith.constant 0 : index
    %1 = vector.load %arg3[%c0_1, %c0_2] : memref<1x128xf32, #tpu.memory_space<vmem>>, vector<1x128xf32>
    %2 = vector.broadcast %1 : vector<1x128xf32> to vector<512x128xf32>
    %3 = arith.mulf %0, %2 : vector<512x128xf32>
    %c0_3 = arith.constant 0 : index
    %c0_4 = arith.constant 0 : index
    %4 = vector.load %arg4[%c0_3, %c0_4] : memref<1x128xf32, #tpu.memory_space<vmem>>, vector<1x128xf32>
    %5 = vector.broadcast %4 : vector<1x128xf32> to vector<512x128xf32>
    %6 = arith.addf %3, %5 : vector<512x128xf32>
    %c0_5 = arith.constant 0 : index
    %c0_6 = arith.constant 0 : index
    %7 = vector.load %arg2[%c0_5, %c0_6] : memref<512x128xf32, #tpu.memory_space<vmem>>, vector<512x128xf32>
    %c0_7 = arith.constant 0 : index
    %c0_8 = arith.constant 0 : index
    %8 = vector.load %arg5[%c0_7, %c0_8] : memref<1x128xf32, #tpu.memory_space<vmem>>, vector<1x128xf32>
    %9 = vector.broadcast %8 : vector<1x128xf32> to vector<512x128xf32>
    %10 = arith.mulf %7, %9 : vector<512x128xf32>
    %c0_9 = arith.constant 0 : index
    %c0_10 = arith.constant 0 : index
    %11 = vector.load %arg6[%c0_9, %c0_10] : memref<1x128xf32, #tpu.memory_space<vmem>>, vector<1x128xf32>
    %12 = vector.broadcast %11 : vector<1x128xf32> to vector<512x128xf32>
    %13 = arith.addf %10, %12 : vector<512x128xf32>
    %14 = arith.addf %6, %13 : vector<512x128xf32>
    %cst = arith.constant 0.000000e+00 : f32
    %15 = vector.broadcast %cst : f32 to vector<512x128xf32>
    %16 = arith.maximumf %14, %15 : vector<512x128xf32>
    %c0_11 = arith.constant 0 : index
    %c0_12 = arith.constant 0 : index
    %17 = vector.load %arg7[%c0_11, %c0_12] : memref<512x128xf32, #tpu.memory_space<vmem>>, vector<512x128xf32>
    tpu.vector_store %arg7[%c0_11, %c0_12], %16 {strides = array<i32>} : memref<512x128xf32, #tpu.memory_space<vmem>>, vector<512x128xf32>,
    return
  }
  func.func @transform_0(%arg0: i32) -> (i32, i32) {
    %c0_i32 = arith.constant 0 : i32
    %c0_i32_0 = arith.constant 0 : i32
    return %arg0, %c0_i32 : i32, i32
  }
  func.func @transform_1(%arg0: i32) -> (i32, i32) {
    %c0_i32 = arith.constant 0 : i32
    %c0_i32_0 = arith.constant 0 : i32
    return %arg0, %c0_i32 : i32, i32
  }
  func.func @transform_2(%arg0: i32) -> (i32, i32) {
    %c0_i32 = arith.constant 0 : i32
    %c0_i32_0 = arith.constant 0 : i32
    %c0_i32_1 = arith.constant 0 : i32
    return %c0_i32, %c0_i32_0 : i32, i32
  }
  func.func @transform_3(%arg0: i32) -> (i32, i32) {
    %c0_i32 = arith.constant 0 : i32
    %c0_i32_0 = arith.constant 0 : i32
    %c0_i32_1 = arith.constant 0 : i32
    return %c0_i32, %c0_i32_0 : i32, i32
  }
  func.func @transform_4(%arg0: i32) -> (i32, i32) {
    %c0_i32 = arith.constant 0 : i32
    %c0_i32_0 = arith.constant 0 : i32
    %c0_i32_1 = arith.constant 0 : i32
    return %c0_i32, %c0_i32_0 : i32, i32
  }
  func.func @transform_5(%arg0: i32) -> (i32, i32) {
    %c0_i32 = arith.constant 0 : i32
    %c0_i32_0 = arith.constant 0 : i32
    %c0_i32_1 = arith.constant 0 : i32
    return %c0_i32, %c0_i32_0 : i32, i32
  }
  func.func @transform_6(%arg0: i32) -> (i32, i32) {
    %c0_i32 = arith.constant 0 : i32
    %c0_i32_0 = arith.constant 0 : i32
    return %arg0, %c0_i32 : i32, i32
  }
}

</mosaic_0001>

<llo_original>
// kernel: residual_block_forward.4
$region0: #{residual_block_forward.4}
  #allocation0 [shape = 'u32[]', space=smem, size = 0x4, offset = 0x4, fixed_abs, tag = 'smem constant byte address 0x4 - core index']
  #allocation1 [shape = 'u32[72,128]{1,0:T(1,128)}', space=vmem, size = 0x9000, scoped, tag = 'internal scratch']
  #allocation2 [shape = 'f32[256,128]{1,0:T(8,128)}', space=vmem, size = 0x20000, scoped, tag = 'scratch operand']
  %s0 = inlined_call_operand.vmem [shape: bf16[512,128], index: 0, kind: input, shape index: {}]
  %s1 = inlined_call_operand.vmem [shape: bf16[128,128], index: 1, kind: input, shape index: {}]
  %s2 = inlined_call_operand.vmem [shape: f32[512,128], index: 2, kind: output, shape index: {0}]
  %s3 = inlined_call_operand.vmem [shape: f32[16,128], index: 3, kind: output, shape index: {1}]
  %s4 = inlined_call_operand.vmem [shape: f32[16,128], index: 4, kind: output, shape index: {2}]
  %5 = xla_tuple %s2, %s3, %s4
  %s6 = sld [smem:[#allocation0]]
  $region65: #{residual_block_forward.4} parent=0
    _
  %s8 = ssub.s32 1, %s6
  %s9 = scalar_select 0, %s8, %s6
  loop: start=0, step=1, limit=4
  $region2: #{residual_block_forward.4} parent=0 // loop_pre_header
    _
  $region3: #{residual_block_forward.4} parent=0 // loop_header
    %s11 = sphi 0, %s15
    %p12 = scmp.ge.s32.totalorder %s11, 4
    %s18 = sphi 0, %s37
    %s19 = sphi 0, %s33
    %s20 = sphi 0, %s29
    %s21 = sphi 0, %s18
    %s22 = sphi 0, %s19
    %s23 = sphi 0, %s20
    %s24 = sphi 0, %s21
    %s25 = sphi 0, %s22
    %s26 = sphi 0, %s23
    %s42 = sphi 0, %s44
    %s45 = sphi 0, %s42
    %s46 = sphi 0, %s45
    %s62 = sphi 0, %s46
    %s70 = sphi 0, %s72
    %s73 = sphi 0, %s70
    %s74 = sphi 0, %s73
    %s90 = sphi 0, %s74
    %s98 = sphi 0, %s100
    %s101 = sphi 0, %s98
    %s102 = sphi 0, %s101
    %s118 = sphi 0, %s102
    %s126 = sphi 0, %s128
    %s129 = sphi 0, %s126
    %s130 = sphi 0, %s129
    %s146 = sphi 0, %s130
    %s154 = sphi 0, %s156
    %s157 = sphi 0, %s154
    %s158 = sphi 0, %s157
    %s174 = sphi 0, %s158
  $region4: #{residual_block_forward.4} parent=0 // loop_header_branch
    %14 = sbr.rel (%p12) target = $region8
  $region5: #{residual_block_forward.4} parent=0 // loop_body
    %s16 = ssub.s32 %s11, 1
    %s17 = ssub.s32 %s11, 2
    %s27 = sadd.s32 1, %s20
    %p28 = scmp.ge.s32.totalorder %s27, 1
    %s29 = scalar_select %p28, 0, %s27
    %s30 = sadd.s32 1, %s19
    %s31 = scalar_select %p28, %s30, %s19
    %p32 = scmp.ge.s32.totalorder %s31, 1
    %s33 = scalar_select %p32, 0, %s31
    %s34 = sadd.s32 1, %s18
    %s35 = scalar_select %p32, %s34, %s18
    %p36 = scmp.ge.s32.totalorder %s35, 2
    %s37 = scalar_select %p36, 0, %s35
    %s38 = ssub.s32 %s18, %s37
    %s39 = ssub.s32 %s20, %s29
    %s40 = sor.u32 %s38, %s39
    %p41 = scmp.eq.s32.totalorder %s40, 0
    %s43 = sadd.s32 %s42, 1
    %s44 = scalar_select %p41, %s42, %s43
    %p47 = pneg %p41
    %p48 = scmp.eq.s32.totalorder %s11, 1
    %p49 = por %p47, %p48
    %p50 = scmp.ne.s32.totalorder %s42, %s45
    %p51 = scmp.eq.s32.totalorder %s11, 0
    %p52 = por %p50, %p51
    %p53 = scmp.ne.s32.totalorder %s42, %s45
    %p54 = scmp.eq.s32.totalorder %s16, 1
    %p55 = por %p53, %p54
    %p56 = scmp.ne.s32.totalorder %s45, %s46
    %p57 = scmp.eq.s32.totalorder %s16, 0
    %p58 = por %p56, %p57
    %p59 = scmp.ne.s32.totalorder %s45, %s46
    %p60 = scmp.eq.s32.totalorder %s17, 1
    %p61 = por %p59, %p60
    %p63 = scmp.ne.s32.totalorder %s46, %s62
    %p64 = scmp.eq.s32.totalorder %s17, 0
    %p65 = por %p63, %p64
    %s66 = ssub.s32 %s20, %s29
    %s67 = ssub.s32 %s19, %s33
    %s68 = sor.u32 %s66, %s67
    %p69 = scmp.eq.s32.totalorder %s68, 0
    %s71 = sadd.s32 %s70, 1
    %s72 = scalar_select %p69, %s70, %s71
    %p75 = pneg %p69
    %p76 = scmp.eq.s32.totalorder %s11, 1
    %p77 = por %p75, %p76
    %p78 = scmp.ne.s32.totalorder %s70, %s73
    %p79 = scmp.eq.s32.totalorder %s11, 0
    %p80 = por %p78, %p79
    %p81 = scmp.ne.s32.totalorder %s70, %s73
    %p82 = scmp.eq.s32.totalorder %s16, 1
    %p83 = por %p81, %p82
    %p84 = scmp.ne.s32.totalorder %s73, %s74
    %p85 = scmp.eq.s32.totalorder %s16, 0
    %p86 = por %p84, %p85
    %p87 = scmp.ne.s32.totalorder %s73, %s74
    %p88 = scmp.eq.s32.totalorder %s17, 1
    %p89 = por %p87, %p88
    %p91 = scmp.ne.s32.totalorder %s74, %s90
    %p92 = scmp.eq.s32.totalorder %s17, 0
    %p93 = por %p91, %p92
    %s94 = ssub.s32 %s18, %s37
    %s95 = ssub.s32 %s19, %s33
    %s96 = sor.u32 %s94, %s95
    %p97 = scmp.eq.s32.totalorder %s96, 0
    %s99 = sadd.s32 %s98, 1
    %s100 = scalar_select %p97, %s98, %s99
    %p103 = pneg %p97
    %p104 = scmp.eq.s32.totalorder %s11, 1
    %p105 = por %p103, %p104
    %p106 = scmp.ne.s32.totalorder %s98, %s101
    %p107 = scmp.eq.s32.totalorder %s11, 0
    %p108 = por %p106, %p107
    %p109 = scmp.ne.s32.totalorder %s98, %s101
    %p110 = scmp.eq.s32.totalorder %s16, 1
    %p111 = por %p109, %p110
    %p112 = scmp.ne.s32.totalorder %s101, %s102
    %p113 = scmp.eq.s32.totalorder %s16, 0
    %p114 = por %p112, %p113
    %p115 = scmp.ne.s32.totalorder %s101, %s102
    %p116 = scmp.eq.s32.totalorder %s17, 1
    %p117 = por %p115, %p116
    %p119 = scmp.ne.s32.totalorder %s102, %s118
    %p120 = scmp.eq.s32.totalorder %s17, 0
    %p121 = por %p119, %p120
    %s122 = ssub.s32 %s18, %s37
    %s123 = ssub.s32 %s19, %s33
    %s124 = sor.u32 %s122, %s123
    %p125 = scmp.eq.s32.totalorder %s124, 0
    %s127 = sadd.s32 %s126, 1
    %s128 = scalar_select %p125, %s126, %s127
    %p131 = pneg %p125
    %p132 = scmp.eq.s32.totalorder %s11, 1
    %p133 = por %p131, %p132
    %p134 = scmp.ne.s32.totalorder %s126, %s129
    %p135 = scmp.eq.s32.totalorder %s11, 0
    %p136 = por %p134, %p135
    %p137 = scmp.ne.s32.totalorder %s126, %s129
    %p138 = scmp.eq.s32.totalorder %s16, 1
    %p139 = por %p137, %p138
    %p140 = scmp.ne.s32.totalorder %s129, %s130
    %p141 = scmp.eq.s32.totalorder %s16, 0
    %p142 = por %p140, %p141
    %p143 = scmp.ne.s32.totalorder %s129, %s130
    %p144 = scmp.eq.s32.totalorder %s17, 1
    %p145 = por %p143, %p144
    %p147 = scmp.ne.s32.totalorder %s130, %s146
    %p148 = scmp.eq.s32.totalorder %s17, 0
    %p149 = por %p147, %p148
    %s150 = ssub.s32 %s18, %s37
    %s151 = ssub.s32 %s19, %s33
    %s152 = sor.u32 %s150, %s151
    %p153 = scmp.eq.s32.totalorder %s152, 0
    %s155 = sadd.s32 %s154, 1
    %s156 = scalar_select %p153, %s154, %s155
    %p159 = pneg %p153
    %p160 = scmp.eq.s32.totalorder %s11, 1
    %p161 = por %p159, %p160
    %p162 = scmp.ne.s32.totalorder %s154, %s157
    %p163 = scmp.eq.s32.totalorder %s11, 0
    %p164 = por %p162, %p163
    %p165 = scmp.ne.s32.totalorder %s154, %s157
    %p166 = scmp.eq.s32.totalorder %s16, 1
    %p167 = por %p165, %p166
    %p168 = scmp.ne.s32.totalorder %s157, %s158
    %p169 = scmp.eq.s32.totalorder %s16, 0
    %p170 = por %p168, %p169
    %p171 = scmp.ne.s32.totalorder %s157, %s158
    %p172 = scmp.eq.s32.totalorder %s17, 1
    %p173 = por %p171, %p172
    %p175 = scmp.ne.s32.totalorder %s158, %s174
    %p176 = scmp.eq.s32.totalorder %s17, 0
    %p177 = por %p175, %p176
    %p178 = scmp.le.s32.totalorder 1, %s11
    %p179 = scmp.lt.s32.totalorder %s11, 3
    %p180 = pnand %p178, %p179
    %p181 = pneg %p180
    // Predicated region
    $region9: #{residual_block_forward.4} parent=5 // pred_check
      _
    $region10: #{residual_block_forward.4} parent=5 // pred_check_branch
      %183 = sbr.rel (%p180) target = $region12
    $region11: #{residual_block_forward.4} parent=5 // pred_region
      %s184 = ssub.s32 %s11, 1
      // Predicated region
      $region13: #{residual_block_forward.4} parent=11 // pred_check
        %p185 = pneg %p86
      $region14: #{residual_block_forward.4} parent=11 // pred_check_branch
        %187 = sbr.rel (%p185) target = $region16
      $region15: #{residual_block_forward.4} parent=11 // pred_region
        %s188 = smul.u32 16, %s23
        %p189 = scmp.lt.s32.totalorder %s188, 15
        %s190 = scalar_select %p189, %s188, 15
        %p191 = scmp.lt.s32.totalorder %s22, 0
        %s192 = scalar_select %p191, %s22, 0
        %s193 = sadd.s32 %s192, %s190
        %s194 = smul.addr %s193, 4
        %s195 = scalar_lea.vmem %s1, %s194
        %s196 = smul.u32 16, %s23
      $region16: #{residual_block_forward.4} parent=11 // pred_fallthru
        _
    $region12: #{residual_block_forward.4} parent=5 // pred_fallthru
      _
    %p197 = scmp.lt.s32.totalorder %s11, 2
    // Predicated region
    $region17: #{residual_block_forward.4} parent=5 // pred_check
      %p198 = pneg %p197
    $region18: #{residual_block_forward.4} parent=5 // pred_check_branch
      %200 = sbr.rel (%p198) target = $region20
    $region19: #{residual_block_forward.4} parent=5 // pred_region
      // Predicated region
      $region21: #{residual_block_forward.4} parent=19 // pred_check
        %p201 = pneg %p52
      $region22: #{residual_block_forward.4} parent=19 // pred_check_branch
        %203 = sbr.rel (%p201) target = $region24
      $region23: #{residual_block_forward.4} parent=19 // pred_region
        %s204 = smul.u32 32, %s18
        %p205 = scmp.lt.s32.totalorder %s204, 63
        %s206 = scalar_select %p205, %s204, 63
        %p207 = scmp.lt.s32.totalorder %s20, 0
        %s208 = scalar_select %p207, %s20, 0
        %s209 = sadd.s32 %s208, %s206
        %s210 = smul.addr %s209, 4
        %s211 = scalar_lea.vmem %s0, %s210
        %s212 = smul.u32 32, %s18
      $region24: #{residual_block_forward.4} parent=19 // pred_fallthru
        _
    $region20: #{residual_block_forward.4} parent=5 // pred_fallthru
      _
    %p213 = scmp.le.s32.totalorder 1, %s11
    %p214 = scmp.lt.s32.totalorder %s11, 3
    %p215 = pnand %p213, %p214
    %p216 = pneg %p215
    // Predicated region
    $region25: #{residual_block_forward.4} parent=5 // pred_check
      _
    $region26: #{residual_block_forward.4} parent=5 // pred_check_branch
      %218 = sbr.rel (%p215) target = $region28
    $region27: #{residual_block_forward.4} parent=5 // pred_region
      %s219 = ssub.s32 %s11, 1
      %s220 = smul.u32 32, %s21
      %p221 = scmp.lt.s32.totalorder %s220, 63
      %s222 = scalar_select %p221, %s220, 63
      %p223 = scmp.lt.s32.totalorder %s23, 0
      %s224 = scalar_select %p223, %s23, 0
      %s225 = sadd.s32 %s224, %s222
      %s226 = smul.addr %s225, 4
      %s227 = scalar_lea.vmem %s0, %s226
      %p228 = pneg %p58
      %p229 = pneg %p55
      %s230 = smul.u32 16, %s23
      %p231 = scmp.lt.s32.totalorder %s230, 15
      %s232 = scalar_select %p231, %s230, 15
      %p233 = scmp.lt.s32.totalorder %s22, 0
      %s234 = scalar_select %p233, %s22, 0
      %s235 = sadd.s32 %s234, %s232
      %s236 = smul.addr %s235, 4
      %s237 = scalar_lea.vmem %s1, %s236
      %p238 = pneg %p86
      %p239 = pneg %p83
      %p240 = pneg %p114
      %p241 = pneg %p111
      %s242 = smul.u32 32, %s21
      %p243 = scmp.lt.s32.totalorder %s242, 63
      %s244 = scalar_select %p243, %s242, 63
      %p245 = scmp.lt.s32.totalorder %s22, 0
      %s246 = scalar_select %p245, %s22, 0
      %s247 = sadd.s32 %s246, %s244
      %s248 = smul.addr %s247, 8
      %s249 = scalar_lea.vmem %s2, %s248
      %p250 = pneg %p142
      %p251 = pneg %p139
      %p252 = scmp.lt.s32.totalorder %s21, 1
      %s253 = scalar_select %p252, %s21, 1
      %p254 = scmp.lt.s32.totalorder %s22, 0
      %s255 = scalar_select %p254, %s22, 0
      %s256 = sadd.s32 %s255, %s253
      %s257 = smul.addr %s256, 8
      %s258 = scalar_lea.vmem %s3, %s257
      %p259 = pneg %p170
      %p260 = pneg %p167
      %p261 = scmp.lt.s32.totalorder %s21, 1
      %s262 = scalar_select %p261, %s21, 1
      %p263 = scmp.lt.s32.totalorder %s22, 0
      %s264 = scalar_select %p263, %s22, 0
      %s265 = sadd.s32 %s264, %s262
      %s266 = smul.addr %s265, 8
      %s267 = scalar_lea.vmem %s4, %s266
      %s268 = smul.u32 32, %s21
      %p269 = scmp.lt.s32.totalorder %s268, 63
      %s270 = scalar_select %p269, %s268, 63
      %p271 = scmp.lt.s32.totalorder %s23, 0
      %s272 = scalar_select %p271, %s23, 0
      %s273 = sadd.s32 %s272, %s270
      %s274 = smul.addr %s273, 4
      %s275 = scalar_lea.vmem %s0, %s274
      %s276 = smul.u32 32, %s21
      %s277 = smul.u32 16, %s23
      %p278 = scmp.lt.s32.totalorder %s277, 15
      %s279 = scalar_select %p278, %s277, 15
      %p280 = scmp.lt.s32.totalorder %s22, 0
      %s281 = scalar_select %p280, %s22, 0
      %s282 = sadd.s32 %s281, %s279
      %s283 = smul.addr %s282, 4
      %s284 = scalar_lea.vmem %s1, %s283
      %s285 = smul.u32 16, %s23
      %s286 = smul.u32 32, %s21
      %p287 = scmp.lt.s32.totalorder %s286, 63
      %s288 = scalar_select %p287, %s286, 63
      %p289 = scmp.lt.s32.totalorder %s22, 0
      %s290 = scalar_select %p289, %s22, 0
      %s291 = sadd.s32 %s290, %s288
      %s292 = smul.addr %s291, 8
      %s293 = scalar_lea.vmem %s2, %s292
      %s294 = smul.u32 32, %s21
      %p295 = scmp.lt.s32.totalorder %s21, 1
      %s296 = scalar_select %p295, %s21, 1
      %p297 = scmp.lt.s32.totalorder %s22, 0
      %s298 = scalar_select %p297, %s22, 0
      %s299 = sadd.s32 %s298, %s296
      %s300 = smul.addr %s299, 8
      %s301 = scalar_lea.vmem %s3, %s300
      %p302 = scmp.lt.s32.totalorder %s21, 1
      %s303 = scalar_select %p302, %s21, 1
      %p304 = scmp.lt.s32.totalorder %s22, 0
      %s305 = scalar_select %p304, %s22, 0
      %s306 = sadd.s32 %s305, %s303
      %s307 = smul.addr %s306, 8
      %s308 = scalar_lea.vmem %s4, %s307
      %p309 = scmp.eq.s32.totalorder %s23, 0
      // Predicated region
      $region29: #{residual_block_forward.4} parent=27 // pred_check
        %p310 = pneg %p309
      $region30: #{residual_block_forward.4} parent=27 // pred_check_branch
        %312 = sbr.rel (%p310) target = $region32
      $region31: #{residual_block_forward.4} parent=27 // pred_region
        %313 = vst [vmem:[#allocation2] sm:$0xff] 0.0
        %314 = vst [vmem:[#allocation2 + $0x8] sm:$0xff] 0.0
        %315 = vst [vmem:[#allocation2 + $0x10] sm:$0xff] 0.0
        %316 = vst [vmem:[#allocation2 + $0x18] sm:$0xff] 0.0
        %317 = vst [vmem:[#allocation2 + $0x20] sm:$0xff] 0.0
        %318 = vst [vmem:[#allocation2 + $0x28] sm:$0xff] 0.0
        %319 = vst [vmem:[#allocation2 + $0x30] sm:$0xff] 0.0
        %320 = vst [vmem:[#allocation2 + $0x38] sm:$0xff] 0.0
        %321 = vst [vmem:[#allocation2 + $0x40] sm:$0xff] 0.0
        %322 = vst [vmem:[#allocation2 + $0x48] sm:$0xff] 0.0
        %323 = vst [vmem:[#allocation2 + $0x50] sm:$0xff] 0.0
        %324 = vst [vmem:[#allocation2 + $0x58] sm:$0xff] 0.0
        %325 = vst [vmem:[#allocation2 + $0x60] sm:$0xff] 0.0
        %326 = vst [vmem:[#allocation2 + $0x68] sm:$0xff] 0.0
        %327 = vst [vmem:[#allocation2 + $0x70] sm:$0xff] 0.0
        %328 = vst [vmem:[#allocation2 + $0x78] sm:$0xff] 0.0
        %329 = vst [vmem:[#allocation2 + $0x80] sm:$0xff] 0.0
        %330 = vst [vmem:[#allocation2 + $0x88] sm:$0xff] 0.0
        %331 = vst [vmem:[#allocation2 + $0x90] sm:$0xff] 0.0
        %332 = vst [vmem:[#allocation2 + $0x98] sm:$0xff] 0.0
        %333 = vst [vmem:[#allocation2 + $0xa0] sm:$0xff] 0.0
        %334 = vst [vmem:[#allocation2 + $0xa8] sm:$0xff] 0.0
        %335 = vst [vmem:[#allocation2 + $0xb0] sm:$0xff] 0.0
        %336 = vst [vmem:[#allocation2 + $0xb8] sm:$0xff] 0.0
        %337 = vst [vmem:[#allocation2 + $0xc0] sm:$0xff] 0.0
        %338 = vst [vmem:[#allocation2 + $0xc8] sm:$0xff] 0.0
        %339 = vst [vmem:[#allocation2 + $0xd0] sm:$0xff] 0.0
        %340 = vst [vmem:[#allocation2 + $0xd8] sm:$0xff] 0.0
        %341 = vst [vmem:[#allocation2 + $0xe0] sm:$0xff] 0.0
        %342 = vst [vmem:[#allocation2 + $0xe8] sm:$0xff] 0.0
        %343 = vst [vmem:[#allocation2 + $0xf0] sm:$0xff] 0.0
        %344 = vst [vmem:[#allocation2 + $0xf8] sm:$0xff] 0.0
      $region32: #{residual_block_forward.4} parent=27 // pred_fallthru
        _
      %v345 = vld [vmem:[#allocation2] sm:$0xff]
      %v346 = vld [vmem:[#allocation2 + $0x8] sm:$0xff]
      %v347 = vld [vmem:[#allocation2 + $0x10] sm:$0xff]
      %v348 = vld [vmem:[#allocation2 + $0x18] sm:$0xff]
      %v349 = vld [vmem:[#allocation2 + $0x20] sm:$0xff]
      %v350 = vld [vmem:[#allocation2 + $0x28] sm:$0xff]
      %v351 = vld [vmem:[#allocation2 + $0x30] sm:$0xff]
      %v352 = vld [vmem:[#allocation2 + $0x38] sm:$0xff]
      %v353 = vld [vmem:[#allocation2 + $0x40] sm:$0xff]
      %v354 = vld [vmem:[#allocation2 + $0x48] sm:$0xff]
      %v355 = vld [vmem:[#allocation2 + $0x50] sm:$0xff]
      %v356 = vld [vmem:[#allocation2 + $0x58] sm:$0xff]
      %v357 = vld [vmem:[#allocation2 + $0x60] sm:$0xff]
      %v358 = vld [vmem:[#allocation2 + $0x68] sm:$0xff]
      %v359 = vld [vmem:[#allocation2 + $0x70] sm:$0xff]
      %v360 = vld [vmem:[#allocation2 + $0x78] sm:$0xff]
      %v361 = vld [vmem:[#allocation2 + $0x80] sm:$0xff]
      %v362 = vld [vmem:[#allocation2 + $0x88] sm:$0xff]
      %v363 = vld [vmem:[#allocation2 + $0x90] sm:$0xff]
      %v364 = vld [vmem:[#allocation2 + $0x98] sm:$0xff]
      %v365 = vld [vmem:[#allocation2 + $0xa0] sm:$0xff]
      %v366 = vld [vmem:[#allocation2 + $0xa8] sm:$0xff]
      %v367 = vld [vmem:[#allocation2 + $0xb0] sm:$0xff]
      %v368 = vld [vmem:[#allocation2 + $0xb8] sm:$0xff]
      %v369 = vld [vmem:[#allocation2 + $0xc0] sm:$0xff]
      %v370 = vld [vmem:[#allocation2 + $0xc8] sm:$0xff]
      %v371 = vld [vmem:[#allocation2 + $0xd0] sm:$0xff]
      %v372 = vld [vmem:[#allocation2 + $0xd8] sm:$0xff]
      %v373 = vld [vmem:[#allocation2 + $0xe0] sm:$0xff]
      %v374 = vld [vmem:[#allocation2 + $0xe8] sm:$0xff]
      %v375 = vld [vmem:[#allocation2 + $0xf0] sm:$0xff]
      %v376 = vld [vmem:[#allocation2 + $0xf8] sm:$0xff]
      %v377 = vld [vmem:[%s275] sm:$0xf]
      %v378 = vld [vmem:[%s275 + $0x4] sm:$0xf]
      %v379 = vld [vmem:[%s275 + $0x8] sm:$0xf]
      %v380 = vld [vmem:[%s275 + $0xc] sm:$0xf]
      %v381 = vld [vmem:[%s275 + $0x10] sm:$0xf]
      %v382 = vld [vmem:[%s275 + $0x14] sm:$0xf]
      %v383 = vld [vmem:[%s275 + $0x18] sm:$0xf]
      %v384 = vld [vmem:[%s275 + $0x1c] sm:$0xf]
      %v385 = vld [vmem:[%s275 + $0x20] sm:$0xf]
      %v386 = vld [vmem:[%s275 + $0x24] sm:$0xf]
      %v387 = vld [vmem:[%s275 + $0x28] sm:$0xf]
      %v388 = vld [vmem:[%s275 + $0x2c] sm:$0xf]
      %v389 = vld [vmem:[%s275 + $0x30] sm:$0xf]
      %v390 = vld [vmem:[%s275 + $0x34] sm:$0xf]
      %v391 = vld [vmem:[%s275 + $0x38] sm:$0xf]
      %v392 = vld [vmem:[%s275 + $0x3c] sm:$0xf]
      %v393 = vld [vmem:[%s275 + $0x40] sm:$0xf]
      %v394 = vld [vmem:[%s275 + $0x44] sm:$0xf]
      %v395 = vld [vmem:[%s275 + $0x48] sm:$0xf]
      %v396 = vld [vmem:[%s275 + $0x4c] sm:$0xf]
      %v397 = vld [vmem:[%s275 + $0x50] sm:$0xf]
      %v398 = vld [vmem:[%s275 + $0x54] sm:$0xf]
      %v399 = vld [vmem:[%s275 + $0x58] sm:$0xf]
      %v400 = vld [vmem:[%s275 + $0x5c] sm:$0xf]
      %v401 = vld [vmem:[%s275 + $0x60] sm:$0xf]
      %v402 = vld [vmem:[%s275 + $0x64] sm:$0xf]
      %v403 = vld [vmem:[%s275 + $0x68] sm:$0xf]
      %v404 = vld [vmem:[%s275 + $0x6c] sm:$0xf]
      %v405 = vld [vmem:[%s275 + $0x70] sm:$0xf]
      %v406 = vld [vmem:[%s275 + $0x74] sm:$0xf]
      %v407 = vld [vmem:[%s275 + $0x78] sm:$0xf]
      %v408 = vld [vmem:[%s275 + $0x7c] sm:$0xf]
      %v409 = vld [vmem:[%s284] sm:$0xf]
      %v410 = vld [vmem:[%s284 + $0x4] sm:$0xf]
      %v411 = vld [vmem:[%s284 + $0x8] sm:$0xf]
      %v412 = vld [vmem:[%s284 + $0xc] sm:$0xf]
      %v413 = vld [vmem:[%s284 + $0x10] sm:$0xf]
      %v414 = vld [vmem:[%s284 + $0x14] sm:$0xf]
      %v415 = vld [vmem:[%s284 + $0x18] sm:$0xf]
      %v416 = vld [vmem:[%s284 + $0x1c] sm:$0xf]
      %v417 = vld [vmem:[%s284 + $0x20] sm:$0xf]
      %v418 = vld [vmem:[%s284 + $0x24] sm:$0xf]
      %v419 = vld [vmem:[%s284 + $0x28] sm:$0xf]
      %v420 = vld [vmem:[%s284 + $0x2c] sm:$0xf]
      %v421 = vld [vmem:[%s284 + $0x30] sm:$0xf]
      %v422 = vld [vmem:[%s284 + $0x34] sm:$0xf]
      %v423 = vld [vmem:[%s284 + $0x38] sm:$0xf]
      %v424 = vld [vmem:[%s284 + $0x3c] sm:$0xf]
      %v457 = vunpack.c.l.b16 %v377
      %v458 = vunpack.c.l.b16 %v378
      %v459 = vunpack.c.l.b16 %v379
      %v460 = vunpack.c.l.b16 %v380
      %v461 = vunpack.c.l.b16 %v381
      %v462 = vunpack.c.l.b16 %v382
      %v463 = vunpack.c.l.b16 %v383
      %v464 = vunpack.c.l.b16 %v384
      %v465 = vunpack.c.l.b16 %v385
      %v466 = vunpack.c.l.b16 %v386
      %v467 = vunpack.c.l.b16 %v387
      %v468 = vunpack.c.l.b16 %v388
      %v469 = vunpack.c.l.b16 %v389
      %v470 = vunpack.c.l.b16 %v390
      %v471 = vunpack.c.l.b16 %v391
      %v472 = vunpack.c.l.b16 %v392
      %v473 = vunpack.c.l.b16 %v393
      %v474 = vunpack.c.l.b16 %v394
      %v475 = vunpack.c.l.b16 %v395
      %v476 = vunpack.c.l.b16 %v396
      %v477 = vunpack.c.l.b16 %v397
      %v478 = vunpack.c.l.b16 %v398
      %v479 = vunpack.c.l.b16 %v399
      %v480 = vunpack.c.l.b16 %v400
      %v481 = vunpack.c.l.b16 %v401
      %v482 = vunpack.c.l.b16 %v402
      %v483 = vunpack.c.l.b16 %v403
      %v484 = vunpack.c.l.b16 %v404
      %v485 = vunpack.c.l.b16 %v405
      %v486 = vunpack.c.l.b16 %v406
      %v487 = vunpack.c.l.b16 %v407
      %v488 = vunpack.c.l.b16 %v408
      %v489 = vpack.c.b16 %v458, %v457
      %v490 = vpack.c.b16 %v460, %v459
      %v491 = vpack.c.b16 %v462, %v461
      %v492 = vpack.c.b16 %v464, %v463
      %v493 = vpack.c.b16 %v466, %v465
      %v494 = vpack.c.b16 %v468, %v467
      %v495 = vpack.c.b16 %v470, %v469
      %v496 = vpack.c.b16 %v472, %v471
      %v497 = vpack.c.b16 %v474, %v473
      %v498 = vpack.c.b16 %v476, %v475
      %v499 = vpack.c.b16 %v478, %v477
      %v500 = vpack.c.b16 %v480, %v479
      %v501 = vpack.c.b16 %v482, %v481
      %v502 = vpack.c.b16 %v484, %v483
      %v503 = vpack.c.b16 %v486, %v485
      %v504 = vpack.c.b16 %v488, %v487
      %v537 = vunpack.c.l.b16 %v409
      %v538 = vunpack.c.l.b16 %v410
      %v539 = vunpack.c.l.b16 %v411
      %v540 = vunpack.c.l.b16 %v412
      %v541 = vunpack.c.l.b16 %v413
      %v542 = vunpack.c.l.b16 %v414
      %v543 = vunpack.c.l.b16 %v415
      %v544 = vunpack.c.l.b16 %v416
      %v545 = vunpack.c.l.b16 %v417
      %v546 = vunpack.c.l.b16 %v418
      %v547 = vunpack.c.l.b16 %v419
      %v548 = vunpack.c.l.b16 %v420
      %v549 = vunpack.c.l.b16 %v421
      %v550 = vunpack.c.l.b16 %v422
      %v551 = vunpack.c.l.b16 %v423
      %v552 = vunpack.c.l.b16 %v424
      %v553 = vpack.c.b16 %v538, %v537
      %v554 = vpack.c.b16 %v540, %v539
      %v555 = vpack.c.b16 %v542, %v541
      %v556 = vpack.c.b16 %v544, %v543
      %v557 = vpack.c.b16 %v546, %v545
      %v558 = vpack.c.b16 %v548, %v547
      %v559 = vpack.c.b16 %v550, %v549
      %v560 = vpack.c.b16 %v552, %v551
      %569 = vmatpush.bf16.msra.mxu0 %v560
      %570 = vmatpush.bf16.msra.mxu0 %v559
      %571 = vmatpush.bf16.msra.mxu0 %v558
      %572 = vmatpush.bf16.msra.mxu0 %v557
      %573 = vmatpush.bf16.msra.mxu0 %v556
      %574 = vmatpush.bf16.msra.mxu0 %v555
      %575 = vmatpush.bf16.msra.mxu0 %v554
      %576 = vmatpush.bf16.msra.mxu0 %v553
      %577 = vmatmul.bf16.gmra.mxu0 %v489
      %v578 = vpop.f32.mrf.mxu0
      %v579 = vadd.f32 0.0, %v578
      %v580 = vpop.f32.mrf.mxu0
      %v581 = vadd.f32 0.0, %v580
      %582 = vmatmul.bf16.gmra.mxu0 %v490
      %v583 = vpop.f32.mrf.mxu0
      %v584 = vadd.f32 0.0, %v583
      %v585 = vpop.f32.mrf.mxu0
      %v586 = vadd.f32 0.0, %v585
      %587 = vmatmul.bf16.gmra.mxu0 %v491
      %v588 = vpop.f32.mrf.mxu0
      %v589 = vadd.f32 0.0, %v588
      %v590 = vpop.f32.mrf.mxu0
      %v591 = vadd.f32 0.0, %v590
      %592 = vmatmul.bf16.gmra.mxu0 %v492
      %v593 = vpop.f32.mrf.mxu0
      %v594 = vadd.f32 0.0, %v593
      %v595 = vpop.f32.mrf.mxu0
      %v596 = vadd.f32 0.0, %v595
      %597 = vmatmul.bf16.gmra.mxu0 %v493
      %v598 = vpop.f32.mrf.mxu0
      %v599 = vadd.f32 0.0, %v598
      %v600 = vpop.f32.mrf.mxu0
      %v601 = vadd.f32 0.0, %v600
      %602 = vmatmul.bf16.gmra.mxu0 %v494
      %v603 = vpop.f32.mrf.mxu0
      %v604 = vadd.f32 0.0, %v603
      %v605 = vpop.f32.mrf.mxu0
      %v606 = vadd.f32 0.0, %v605
      %607 = vmatmul.bf16.gmra.mxu0 %v495
      %v608 = vpop.f32.mrf.mxu0
      %v609 = vadd.f32 0.0, %v608
      %v610 = vpop.f32.mrf.mxu0
      %v611 = vadd.f32 0.0, %v610
      %612 = vmatmul.bf16.gmra.mxu0 %v496
      %v613 = vpop.f32.mrf.mxu0
      %v614 = vadd.f32 0.0, %v613
      %v615 = vpop.f32.mrf.mxu0
      %v616 = vadd.f32 0.0, %v615
      %617 = vmatmul.bf16.gmra.mxu0 %v497
      %v618 = vpop.f32.mrf.mxu0
      %v619 = vadd.f32 0.0, %v618
      %v620 = vpop.f32.mrf.mxu0
      %v621 = vadd.f32 0.0, %v620
      %622 = vmatmul.bf16.gmra.mxu0 %v498
      %v623 = vpop.f32.mrf.mxu0
      %v624 = vadd.f32 0.0, %v623
      %v625 = vpop.f32.mrf.mxu0
      %v626 = vadd.f32 0.0, %v625
      %627 = vmatmul.bf16.gmra.mxu0 %v499
      %v628 = vpop.f32.mrf.mxu0
      %v629 = vadd.f32 0.0, %v628
      %v630 = vpop.f32.mrf.mxu0
      %v631 = vadd.f32 0.0, %v630
      %632 = vmatmul.bf16.gmra.mxu0 %v500
      %v633 = vpop.f32.mrf.mxu0
      %v634 = vadd.f32 0.0, %v633
      %v635 = vpop.f32.mrf.mxu0
      %v636 = vadd.f32 0.0, %v635
      %637 = vmatmul.bf16.gmra.mxu0 %v501
      %v638 = vpop.f32.mrf.mxu0
      %v639 = vadd.f32 0.0, %v638
      %v640 = vpop.f32.mrf.mxu0
      %v641 = vadd.f32 0.0, %v640
      %642 = vmatmul.bf16.gmra.mxu0 %v502
      %v643 = vpop.f32.mrf.mxu0
      %v644 = vadd.f32 0.0, %v643
      %v645 = vpop.f32.mrf.mxu0
      %v646 = vadd.f32 0.0, %v645
      %647 = vmatmul.bf16.gmra.mxu0 %v503
      %v648 = vpop.f32.mrf.mxu0
      %v649 = vadd.f32 0.0, %v648
      %v650 = vpop.f32.mrf.mxu0
      %v651 = vadd.f32 0.0, %v650
      %652 = vmatmul.bf16.gmra.mxu0 %v504
      %v653 = vpop.f32.mrf.mxu0
      %v654 = vadd.f32 0.0, %v653
      %v655 = vpop.f32.mrf.mxu0
      %v656 = vadd.f32 0.0, %v655
      %657 = vdwg.mxu0
      %v658 = vadd.f32 %v345, %v579
      %v659 = vadd.f32 %v346, %v581
      %v660 = vadd.f32 %v347, %v584
      %v661 = vadd.f32 %v348, %v586
      %v662 = vadd.f32 %v349, %v589
      %v663 = vadd.f32 %v350, %v591
      %v664 = vadd.f32 %v351, %v594
      %v665 = vadd.f32 %v352, %v596
      %v666 = vadd.f32 %v353, %v599
      %v667 = vadd.f32 %v354, %v601
      %v668 = vadd.f32 %v355, %v604
      %v669 = vadd.f32 %v356, %v606
      %v670 = vadd.f32 %v357, %v609
      %v671 = vadd.f32 %v358, %v611
      %v672 = vadd.f32 %v359, %v614
      %v673 = vadd.f32 %v360, %v616
      %v674 = vadd.f32 %v361, %v619
      %v675 = vadd.f32 %v362, %v621
      %v676 = vadd.f32 %v363, %v624
      %v677 = vadd.f32 %v364, %v626
      %v678 = vadd.f32 %v365, %v629
      %v679 = vadd.f32 %v366, %v631
      %v680 = vadd.f32 %v367, %v634
      %v681 = vadd.f32 %v368, %v636
      %v682 = vadd.f32 %v369, %v639
      %v683 = vadd.f32 %v370, %v641
      %v684 = vadd.f32 %v371, %v644
      %v685 = vadd.f32 %v372, %v646
      %v686 = vadd.f32 %v373, %v649
      %v687 = vadd.f32 %v374, %v651
      %v688 = vadd.f32 %v375, %v654
      %v689 = vadd.f32 %v376, %v656
      %690 = vst [vmem:[#allocation2] sm:$0xff] %v658
      %691 = vst [vmem:[#allocation2 + $0x8] sm:$0xff] %v659
      %692 = vst [vmem:[#allocation2 + $0x10] sm:$0xff] %v660
      %693 = vst [vmem:[#allocation2 + $0x18] sm:$0xff] %v661
      %694 = vst [vmem:[#allocation2 + $0x20] sm:$0xff] %v662
      %695 = vst [vmem:[#allocation2 + $0x28] sm:$0xff] %v663
      %696 = vst [vmem:[#allocation2 + $0x30] sm:$0xff] %v664
      %697 = vst [vmem:[#allocation2 + $0x38] sm:$0xff] %v665
      %698 = vst [vmem:[#allocation2 + $0x40] sm:$0xff] %v666
      %699 = vst [vmem:[#allocation2 + $0x48] sm:$0xff] %v667
      %700 = vst [vmem:[#allocation2 + $0x50] sm:$0xff] %v668
      %701 = vst [vmem:[#allocation2 + $0x58] sm:$0xff] %v669
      %702 = vst [vmem:[#allocation2 + $0x60] sm:$0xff] %v670
      %703 = vst [vmem:[#allocation2 + $0x68] sm:$0xff] %v671
      %704 = vst [vmem:[#allocation2 + $0x70] sm:$0xff] %v672
      %705 = vst [vmem:[#allocation2 + $0x78] sm:$0xff] %v673
      %706 = vst [vmem:[#allocation2 + $0x80] sm:$0xff] %v674
      %707 = vst [vmem:[#allocation2 + $0x88] sm:$0xff] %v675
      %708 = vst [vmem:[#allocation2 + $0x90] sm:$0xff] %v676
      %709 = vst [vmem:[#allocation2 + $0x98] sm:$0xff] %v677
      %710 = vst [vmem:[#allocation2 + $0xa0] sm:$0xff] %v678
      %711 = vst [vmem:[#allocation2 + $0xa8] sm:$0xff] %v679
      %712 = vst [vmem:[#allocation2 + $0xb0] sm:$0xff] %v680
      %713 = vst [vmem:[#allocation2 + $0xb8] sm:$0xff] %v681
      %714 = vst [vmem:[#allocation2 + $0xc0] sm:$0xff] %v682
      %715 = vst [vmem:[#allocation2 + $0xc8] sm:$0xff] %v683
      %716 = vst [vmem:[#allocation2 + $0xd0] sm:$0xff] %v684
      %717 = vst [vmem:[#allocation2 + $0xd8] sm:$0xff] %v685
      %718 = vst [vmem:[#allocation2 + $0xe0] sm:$0xff] %v686
      %719 = vst [vmem:[#allocation2 + $0xe8] sm:$0xff] %v687
      %720 = vst [vmem:[#allocation2 + $0xf0] sm:$0xff] %v688
      %721 = vst [vmem:[#allocation2 + $0xf8] sm:$0xff] %v689
      // Predicated region
      $region33: #{residual_block_forward.4} parent=27 // pred_check
        %p722 = pneg %p309
      $region34: #{residual_block_forward.4} parent=27 // pred_check_branch
        %724 = sbr.rel (%p722) target = $region36
      $region35: #{residual_block_forward.4} parent=27 // pred_region
        %v725 = vld [vmem:[#allocation2] sm:$0xff]
        %v726 = vld [vmem:[#allocation2 + $0x8] sm:$0xff]
        %v727 = vld [vmem:[#allocation2 + $0x10] sm:$0xff]
        %v728 = vld [vmem:[#allocation2 + $0x18] sm:$0xff]
        %v729 = vld [vmem:[#allocation2 + $0x20] sm:$0xff]
        %v730 = vld [vmem:[#allocation2 + $0x28] sm:$0xff]
        %v731 = vld [vmem:[#allocation2 + $0x30] sm:$0xff]
        %v732 = vld [vmem:[#allocation2 + $0x38] sm:$0xff]
        %v733 = vld [vmem:[#allocation2 + $0x40] sm:$0xff]
        %v734 = vld [vmem:[#allocation2 + $0x48] sm:$0xff]
        %v735 = vld [vmem:[#allocation2 + $0x50] sm:$0xff]
        %v736 = vld [vmem:[#allocation2 + $0x58] sm:$0xff]
        %v737 = vld [vmem:[#allocation2 + $0x60] sm:$0xff]
        %v738 = vld [vmem:[#allocation2 + $0x68] sm:$0xff]
        %v739 = vld [vmem:[#allocation2 + $0x70] sm:$0xff]
        %v740 = vld [vmem:[#allocation2 + $0x78] sm:$0xff]
        %v741 = vld [vmem:[#allocation2 + $0x80] sm:$0xff]
        %v742 = vld [vmem:[#allocation2 + $0x88] sm:$0xff]
        %v743 = vld [vmem:[#allocation2 + $0x90] sm:$0xff]
        %v744 = vld [vmem:[#allocation2 + $0x98] sm:$0xff]
        %v745 = vld [vmem:[#allocation2 + $0xa0] sm:$0xff]
        %v746 = vld [vmem:[#allocation2 + $0xa8] sm:$0xff]
        %v747 = vld [vmem:[#allocation2 + $0xb0] sm:$0xff]
        %v748 = vld [vmem:[#allocation2 + $0xb8] sm:$0xff]
        %v749 = vld [vmem:[#allocation2 + $0xc0] sm:$0xff]
        %v750 = vld [vmem:[#allocation2 + $0xc8] sm:$0xff]
        %v751 = vld [vmem:[#allocation2 + $0xd0] sm:$0xff]
        %v752 = vld [vmem:[#allocation2 + $0xd8] sm:$0xff]
        %v753 = vld [vmem:[#allocation2 + $0xe0] sm:$0xff]
        %v754 = vld [vmem:[#allocation2 + $0xe8] sm:$0xff]
        %v755 = vld [vmem:[#allocation2 + $0xf0] sm:$0xff]
        %v756 = vld [vmem:[#allocation2 + $0xf8] sm:$0xff]
        %757 = vst [vmem:[%s293] sm:$0xff] %v725
        %758 = vst [vmem:[%s293 + $0x8] sm:$0xff] %v726
        %759 = vst [vmem:[%s293 + $0x10] sm:$0xff] %v727
        %760 = vst [vmem:[%s293 + $0x18] sm:$0xff] %v728
        %761 = vst [vmem:[%s293 + $0x20] sm:$0xff] %v729
        %762 = vst [vmem:[%s293 + $0x28] sm:$0xff] %v730
        %763 = vst [vmem:[%s293 + $0x30] sm:$0xff] %v731
        %764 = vst [vmem:[%s293 + $0x38] sm:$0xff] %v732
        %765 = vst [vmem:[%s293 + $0x40] sm:$0xff] %v733
        %766 = vst [vmem:[%s293 + $0x48] sm:$0xff] %v734
        %767 = vst [vmem:[%s293 + $0x50] sm:$0xff] %v735
        %768 = vst [vmem:[%s293 + $0x58] sm:$0xff] %v736
        %769 = vst [vmem:[%s293 + $0x60] sm:$0xff] %v737
        %770 = vst [vmem:[%s293 + $0x68] sm:$0xff] %v738
        %771 = vst [vmem:[%s293 + $0x70] sm:$0xff] %v739
        %772 = vst [vmem:[%s293 + $0x78] sm:$0xff] %v740
        %773 = vst [vmem:[%s293 + $0x80] sm:$0xff] %v741
        %774 = vst [vmem:[%s293 + $0x88] sm:$0xff] %v742
        %775 = vst [vmem:[%s293 + $0x90] sm:$0xff] %v743
        %776 = vst [vmem:[%s293 + $0x98] sm:$0xff] %v744
        %777 = vst [vmem:[%s293 + $0xa0] sm:$0xff] %v745
        %778 = vst [vmem:[%s293 + $0xa8] sm:$0xff] %v746
        %779 = vst [vmem:[%s293 + $0xb0] sm:$0xff] %v747
        %780 = vst [vmem:[%s293 + $0xb8] sm:$0xff] %v748
        %781 = vst [vmem:[%s293 + $0xc0] sm:$0xff] %v749
        %782 = vst [vmem:[%s293 + $0xc8] sm:$0xff] %v750
        %783 = vst [vmem:[%s293 + $0xd0] sm:$0xff] %v751
        %784 = vst [vmem:[%s293 + $0xd8] sm:$0xff] %v752
        %785 = vst [vmem:[%s293 + $0xe0] sm:$0xff] %v753
        %786 = vst [vmem:[%s293 + $0xe8] sm:$0xff] %v754
        %787 = vst [vmem:[%s293 + $0xf0] sm:$0xff] %v755
        %788 = vst [vmem:[%s293 + $0xf8] sm:$0xff] %v756
        %v789 = vadd.f32 %v725, %v726
        %v790 = vadd.f32 %v789, %v727
        %v791 = vadd.f32 %v790, %v728
        %v792 = vadd.f32 %v791, %v729
        %v793 = vadd.f32 %v792, %v730
        %v794 = vadd.f32 %v793, %v731
        %v795 = vadd.f32 %v794, %v732
        %v796 = vadd.f32 %v795, %v733
        %v797 = vadd.f32 %v796, %v734
        %v798 = vadd.f32 %v797, %v735
        %v799 = vadd.f32 %v798, %v736
        %v800 = vadd.f32 %v799, %v737
        %v801 = vadd.f32 %v800, %v738
        %v802 = vadd.f32 %v801, %v739
        %v803 = vadd.f32 %v802, %v740
        %v804 = vadd.f32 %v803, %v741
        %v805 = vadd.f32 %v804, %v742
        %v806 = vadd.f32 %v805, %v743
        %v807 = vadd.f32 %v806, %v744
        %v808 = vadd.f32 %v807, %v745
        %v809 = vadd.f32 %v808, %v746
        %v810 = vadd.f32 %v809, %v747
        %v811 = vadd.f32 %v810, %v748
        %v812 = vadd.f32 %v811, %v749
        %v813 = vadd.f32 %v812, %v750
        %v814 = vadd.f32 %v813, %v751
        %v815 = vadd.f32 %v814, %v752
        %v816 = vadd.f32 %v815, %v753
        %v817 = vadd.f32 %v816, %v754
        %v818 = vadd.f32 %v817, %v755
        %v819 = vadd.f32 %v818, %v756
        %v820 = vrot.slane %v819, 4
        %v821 = vadd.f32 %v819, %v820
        %v822 = vrot.slane %v821, 2
        %v823 = vadd.f32 %v821, %v822
        %v824 = vrot.slane %v823, 1
        %v825 = vadd.f32 %v823, %v824
        %v826 = vmul.f32 %v725, %v725
        %v827 = vmul.f32 %v726, %v726
        %v828 = vmul.f32 %v727, %v727
        %v829 = vmul.f32 %v728, %v728
        %v830 = vmul.f32 %v729, %v729
        %v831 = vmul.f32 %v730, %v730
        %v832 = vmul.f32 %v731, %v731
        %v833 = vmul.f32 %v732, %v732
        %v834 = vmul.f32 %v733, %v733
        %v835 = vmul.f32 %v734, %v734
        %v836 = vmul.f32 %v735, %v735
        %v837 = vmul.f32 %v736, %v736
        %v838 = vmul.f32 %v737, %v737
        %v839 = vmul.f32 %v738, %v738
        %v840 = vmul.f32 %v739, %v739
        %v841 = vmul.f32 %v740, %v740
        %v842 = vmul.f32 %v741, %v741
        %v843 = vmul.f32 %v742, %v742
        %v844 = vmul.f32 %v743, %v743
        %v845 = vmul.f32 %v744, %v744
        %v846 = vmul.f32 %v745, %v745
        %v847 = vmul.f32 %v746, %v746
        %v848 = vmul.f32 %v747, %v747
        %v849 = vmul.f32 %v748, %v748
        %v850 = vmul.f32 %v749, %v749
        %v851 = vmul.f32 %v750, %v750
        %v852 = vmul.f32 %v751, %v751
        %v853 = vmul.f32 %v752, %v752
        %v854 = vmul.f32 %v753, %v753
        %v855 = vmul.f32 %v754, %v754
        %v856 = vmul.f32 %v755, %v755
        %v857 = vmul.f32 %v756, %v756
        %v858 = vadd.f32 %v826, %v827
        %v859 = vadd.f32 %v858, %v828
        %v860 = vadd.f32 %v859, %v829
        %v861 = vadd.f32 %v860, %v830
        %v862 = vadd.f32 %v861, %v831
        %v863 = vadd.f32 %v862, %v832
        %v864 = vadd.f32 %v863, %v833
        %v865 = vadd.f32 %v864, %v834
        %v866 = vadd.f32 %v865, %v835
        %v867 = vadd.f32 %v866, %v836
        %v868 = vadd.f32 %v867, %v837
        %v869 = vadd.f32 %v868, %v838
        %v870 = vadd.f32 %v869, %v839
        %v871 = vadd.f32 %v870, %v840
        %v872 = vadd.f32 %v871, %v841
        %v873 = vadd.f32 %v872, %v842
        %v874 = vadd.f32 %v873, %v843
        %v875 = vadd.f32 %v874, %v844
        %v876 = vadd.f32 %v875, %v845
        %v877 = vadd.f32 %v876, %v846
        %v878 = vadd.f32 %v877, %v847
        %v879 = vadd.f32 %v878, %v848
        %v880 = vadd.f32 %v879, %v849
        %v881 = vadd.f32 %v880, %v850
        %v882 = vadd.f32 %v881, %v851
        %v883 = vadd.f32 %v882, %v852
        %v884 = vadd.f32 %v883, %v853
        %v885 = vadd.f32 %v884, %v854
        %v886 = vadd.f32 %v885, %v855
        %v887 = vadd.f32 %v886, %v856
        %v888 = vadd.f32 %v887, %v857
        %v889 = vrot.slane %v888, 4
        %v890 = vadd.f32 %v888, %v889
        %v891 = vrot.slane %v890, 2
        %v892 = vadd.f32 %v890, %v891
        %v893 = vrot.slane %v892, 1
        %v894 = vadd.f32 %v892, %v893
        %895 = vst [vmem:[%s301] sm:$0xff] %v825
        %896 = vst [vmem:[%s308] sm:$0xff] %v894
      $region36: #{residual_block_forward.4} parent=27 // pred_fallthru
        _
      %s897 = smul.u32 32, %s21
      %p898 = scmp.lt.s32.totalorder %s897, 63
      %s899 = scalar_select %p898, %s897, 63
      %p900 = scmp.lt.s32.totalorder %s22, 0
      %s901 = scalar_select %p900, %s22, 0
      %s902 = sadd.s32 %s901, %s899
      %s903 = smul.addr %s902, 8
      %s904 = scalar_lea.vmem %s2, %s903
      %p905 = scmp.lt.s32.totalorder %s21, 1
      %s906 = scalar_select %p905, %s21, 1
      %p907 = scmp.lt.s32.totalorder %s22, 0
      %s908 = scalar_select %p907, %s22, 0
      %s909 = sadd.s32 %s908, %s906
      %s910 = smul.addr %s909, 8
      %s911 = scalar_lea.vmem %s3, %s910
      %p912 = scmp.lt.s32.totalorder %s21, 1
      %s913 = scalar_select %p912, %s21, 1
      %p914 = scmp.lt.s32.totalorder %s22, 0
      %s915 = scalar_select %p914, %s22, 0
      %s916 = sadd.s32 %s915, %s913
      %s917 = smul.addr %s916, 8
      %s918 = scalar_lea.vmem %s4, %s917
      // Predicated region
      $region37: #{residual_block_forward.4} parent=27 // pred_check
        %p919 = pneg %p111
      $region38: #{residual_block_forward.4} parent=27 // pred_check_branch
        %921 = sbr.rel (%p919) target = $region40
      $region39: #{residual_block_forward.4} parent=27 // pred_region
        %s922 = smul.u32 32, %s21
      $region40: #{residual_block_forward.4} parent=27 // pred_fallthru
        _
      // Predicated region
      $region41: #{residual_block_forward.4} parent=27 // pred_check
        %p923 = pneg %p139
      $region42: #{residual_block_forward.4} parent=27 // pred_check_branch
        %925 = sbr.rel (%p923) target = $region44
      $region43: #{residual_block_forward.4} parent=27 // pred_region
        _
      $region44: #{residual_block_forward.4} parent=27 // pred_fallthru
        _
      // Predicated region
      $region45: #{residual_block_forward.4} parent=27 // pred_check
        %p926 = pneg %p167
      $region46: #{residual_block_forward.4} parent=27 // pred_check_branch
        %928 = sbr.rel (%p926) target = $region48
      $region47: #{residual_block_forward.4} parent=27 // pred_region
        _
      $region48: #{residual_block_forward.4} parent=27 // pred_fallthru
        _
    $region28: #{residual_block_forward.4} parent=5 // pred_fallthru
      _
    %p929 = scmp.le.s32.totalorder 2, %s11
    // Predicated region
    $region49: #{residual_block_forward.4} parent=5 // pred_check
      %p930 = pneg %p929
    $region50: #{residual_block_forward.4} parent=5 // pred_check_branch
      %932 = sbr.rel (%p930) target = $region52
    $region51: #{residual_block_forward.4} parent=5 // pred_region
      %s933 = ssub.s32 %s11, 2
      // Predicated region
      $region53: #{residual_block_forward.4} parent=51 // pred_check
        %p934 = pneg %p117
      $region54: #{residual_block_forward.4} parent=51 // pred_check_branch
        %936 = sbr.rel (%p934) target = $region56
      $region55: #{residual_block_forward.4} parent=51 // pred_region
        %s937 = smul.u32 32, %s24
        %p938 = scmp.lt.s32.totalorder %s937, 63
        %s939 = scalar_select %p938, %s937, 63
        %p940 = scmp.lt.s32.totalorder %s25, 0
        %s941 = scalar_select %p940, %s25, 0
        %s942 = sadd.s32 %s941, %s939
        %s943 = smul.addr %s942, 8
        %s944 = scalar_lea.vmem %s2, %s943
      $region56: #{residual_block_forward.4} parent=51 // pred_fallthru
        _
      // Predicated region
      $region57: #{residual_block_forward.4} parent=51 // pred_check
        %p945 = pneg %p145
      $region58: #{residual_block_forward.4} parent=51 // pred_check_branch
        %947 = sbr.rel (%p945) target = $region60
      $region59: #{residual_block_forward.4} parent=51 // pred_region
        %p948 = scmp.lt.s32.totalorder %s24, 1
        %s949 = scalar_select %p948, %s24, 1
        %p950 = scmp.lt.s32.totalorder %s25, 0
        %s951 = scalar_select %p950, %s25, 0
        %s952 = sadd.s32 %s951, %s949
        %s953 = smul.addr %s952, 8
        %s954 = scalar_lea.vmem %s3, %s953
      $region60: #{residual_block_forward.4} parent=51 // pred_fallthru
        _
      // Predicated region
      $region61: #{residual_block_forward.4} parent=51 // pred_check
        %p955 = pneg %p173
      $region62: #{residual_block_forward.4} parent=51 // pred_check_branch
        %957 = sbr.rel (%p955) target = $region64
      $region63: #{residual_block_forward.4} parent=51 // pred_region
        %p958 = scmp.lt.s32.totalorder %s24, 1
        %s959 = scalar_select %p958, %s24, 1
        %p960 = scmp.lt.s32.totalorder %s25, 0
        %s961 = scalar_select %p960, %s25, 0
        %s962 = sadd.s32 %s961, %s959
        %s963 = smul.addr %s962, 8
        %s964 = scalar_lea.vmem %s4, %s963
      $region64: #{residual_block_forward.4} parent=51 // pred_fallthru
        _
    $region52: #{residual_block_forward.4} parent=5 // pred_fallthru
      _
  $region6: #{residual_block_forward.4} parent=0 // loop_footer
    %s15 = sadd.s32 1, %s11
  $region7: #{residual_block_forward.4} parent=0 // loop_footer_branch
    %10 = sbr.rel target = $region3
  $region8: #{residual_block_forward.4} parent=0 // loop_exit
    _

// kernel: residual_block_forward.5
$region0: #{residual_block_forward.5}
  #allocation0 [shape = 'u32[]', space=smem, size = 0x4, offset = 0x4, fixed_abs, tag = 'smem constant byte address 0x4 - core index']
  #allocation1 [shape = 'u32[72,128]{1,0:T(1,128)}', space=vmem, size = 0x9000, scoped, tag = 'internal scratch']
  #allocation2 [shape = 'f32[256,128]{1,0:T(8,128)}', space=vmem, size = 0x20000, scoped, tag = 'scratch operand']
  %s0 = inlined_call_operand.vmem [shape: bf16[512,1152], index: 0, kind: input, shape index: {}]
  %s1 = inlined_call_operand.vmem [shape: bf16[1152,128], index: 1, kind: input, shape index: {}]
  %s2 = inlined_call_operand.vmem [shape: f32[512,128], index: 2, kind: output, shape index: {0}]
  %s3 = inlined_call_operand.vmem [shape: f32[16,128], index: 3, kind: output, shape index: {1}]
  %s4 = inlined_call_operand.vmem [shape: f32[16,128], index: 4, kind: output, shape index: {2}]
  %5 = xla_tuple %s2, %s3, %s4
  %s6 = sld [smem:[#allocation0]]
  $region91: #{residual_block_forward.5} parent=0
    _
  %s8 = ssub.s32 1, %s6
  %s9 = scalar_select 0, %s8, %s6
  $region1: #{residual_block_forward.5} parent=0
    #allocation3 [shape = 'u8[393216]{0}', space=vmem, size = 0x60000, scoped, tag = 'input window, operand 0']
    loop: start=0, step=1, limit=8
    $region2: #{residual_block_forward.5} parent=1 // loop_pre_header
      _
    $region3: #{residual_block_forward.5} parent=1 // loop_header
      %s11 = sphi 0, %s15
      %p12 = scmp.ge.s32.totalorder %s11, 8
      %s18 = sphi 0, %s37
      %s19 = sphi 0, %s33
      %s20 = sphi 0, %s29
      %s21 = sphi 0, %s18
      %s22 = sphi 0, %s19
      %s23 = sphi 0, %s20
      %s24 = sphi 0, %s21
      %s25 = sphi 0, %s22
      %s26 = sphi 0, %s23
      %s42 = sphi 0, %s44
      %s45 = sphi 0, %s42
      %s46 = sphi 0, %s45
      %s62 = sphi 0, %s46
      %s70 = sphi 0, %s72
      %s73 = sphi 0, %s70
      %s74 = sphi 0, %s73
      %s90 = sphi 0, %s74
      %s98 = sphi 0, %s100
      %s101 = sphi 0, %s98
      %s102 = sphi 0, %s101
      %s118 = sphi 0, %s102
      %s126 = sphi 0, %s128
      %s129 = sphi 0, %s126
      %s130 = sphi 0, %s129
      %s146 = sphi 0, %s130
      %s154 = sphi 0, %s156
      %s157 = sphi 0, %s154
      %s158 = sphi 0, %s157
      %s174 = sphi 0, %s158
    $region4: #{residual_block_forward.5} parent=1 // loop_header_branch
      %14 = sbr.rel (%p12) target = $region8
    $region5: #{residual_block_forward.5} parent=1 // loop_body
      %s16 = ssub.s32 %s11, 1
      %s17 = ssub.s32 %s11, 2
      %s27 = sadd.s32 1, %s20
      %p28 = scmp.ge.s32.totalorder %s27, 3
      %s29 = scalar_select %p28, 0, %s27
      %s30 = sadd.s32 1, %s19
      %s31 = scalar_select %p28, %s30, %s19
      %p32 = scmp.ge.s32.totalorder %s31, 1
      %s33 = scalar_select %p32, 0, %s31
      %s34 = sadd.s32 1, %s18
      %s35 = scalar_select %p32, %s34, %s18
      %p36 = scmp.ge.s32.totalorder %s35, 2
      %s37 = scalar_select %p36, 0, %s35
      %s38 = ssub.s32 %s18, %s37
      %s39 = ssub.s32 %s20, %s29
      %s40 = sor.u32 %s38, %s39
      %p41 = scmp.eq.s32.totalorder %s40, 0
      %s43 = sadd.s32 %s42, 1
      %s44 = scalar_select %p41, %s42, %s43
      %p47 = pneg %p41
      %p48 = scmp.eq.s32.totalorder %s11, 5
      %p49 = por %p47, %p48
      %p50 = scmp.ne.s32.totalorder %s42, %s45
      %p51 = scmp.eq.s32.totalorder %s11, 0
      %p52 = por %p50, %p51
      %p53 = scmp.ne.s32.totalorder %s42, %s45
      %p54 = scmp.eq.s32.totalorder %s16, 5
      %p55 = por %p53, %p54
      %p56 = scmp.ne.s32.totalorder %s45, %s46
      %p57 = scmp.eq.s32.totalorder %s16, 0
      %p58 = por %p56, %p57
      %p59 = scmp.ne.s32.totalorder %s45, %s46
      %p60 = scmp.eq.s32.totalorder %s17, 5
      %p61 = por %p59, %p60
      %p63 = scmp.ne.s32.totalorder %s46, %s62
      %p64 = scmp.eq.s32.totalorder %s17, 0
      %p65 = por %p63, %p64
      %s66 = ssub.s32 %s20, %s29
      %s67 = ssub.s32 %s19, %s33
      %s68 = sor.u32 %s66, %s67
      %p69 = scmp.eq.s32.totalorder %s68, 0
      %s71 = sadd.s32 %s70, 1
      %s72 = scalar_select %p69, %s70, %s71
      %p75 = pneg %p69
      %p76 = scmp.eq.s32.totalorder %s11, 5
      %p77 = por %p75, %p76
      %p78 = scmp.ne.s32.totalorder %s70, %s73
      %p79 = scmp.eq.s32.totalorder %s11, 0
      %p80 = por %p78, %p79
      %p81 = scmp.ne.s32.totalorder %s70, %s73
      %p82 = scmp.eq.s32.totalorder %s16, 5
      %p83 = por %p81, %p82
      %p84 = scmp.ne.s32.totalorder %s73, %s74
      %p85 = scmp.eq.s32.totalorder %s16, 0
      %p86 = por %p84, %p85
      %p87 = scmp.ne.s32.totalorder %s73, %s74
      %p88 = scmp.eq.s32.totalorder %s17, 5
      %p89 = por %p87, %p88
      %p91 = scmp.ne.s32.totalorder %s74, %s90
      %p92 = scmp.eq.s32.totalorder %s17, 0
      %p93 = por %p91, %p92
      %s94 = ssub.s32 %s18, %s37
      %s95 = ssub.s32 %s19, %s33
      %s96 = sor.u32 %s94, %s95
      %p97 = scmp.eq.s32.totalorder %s96, 0
      %s99 = sadd.s32 %s98, 1
      %s100 = scalar_select %p97, %s98, %s99
      %p103 = pneg %p97
      %p104 = scmp.eq.s32.totalorder %s11, 5
      %p105 = por %p103, %p104
      %p106 = scmp.ne.s32.totalorder %s98, %s101
      %p107 = scmp.eq.s32.totalorder %s11, 0
      %p108 = por %p106, %p107
      %p109 = scmp.ne.s32.totalorder %s98, %s101
      %p110 = scmp.eq.s32.totalorder %s16, 5
      %p111 = por %p109, %p110
      %p112 = scmp.ne.s32.totalorder %s101, %s102
      %p113 = scmp.eq.s32.totalorder %s16, 0
      %p114 = por %p112, %p113
      %p115 = scmp.ne.s32.totalorder %s101, %s102
      %p116 = scmp.eq.s32.totalorder %s17, 5
      %p117 = por %p115, %p116
      %p119 = scmp.ne.s32.totalorder %s102, %s118
      %p120 = scmp.eq.s32.totalorder %s17, 0
      %p121 = por %p119, %p120
      %s122 = ssub.s32 %s18, %s37
      %s123 = ssub.s32 %s19, %s33
      %s124 = sor.u32 %s122, %s123
      %p125 = scmp.eq.s32.totalorder %s124, 0
      %s127 = sadd.s32 %s126, 1
      %s128 = scalar_select %p125, %s126, %s127
      %p131 = pneg %p125
      %p132 = scmp.eq.s32.totalorder %s11, 5
      %p133 = por %p131, %p132
      %p134 = scmp.ne.s32.totalorder %s126, %s129
      %p135 = scmp.eq.s32.totalorder %s11, 0
      %p136 = por %p134, %p135
      %p137 = scmp.ne.s32.totalorder %s126, %s129
      %p138 = scmp.eq.s32.totalorder %s16, 5
      %p139 = por %p137, %p138
      %p140 = scmp.ne.s32.totalorder %s129, %s130
      %p141 = scmp.eq.s32.totalorder %s16, 0
      %p142 = por %p140, %p141
      %p143 = scmp.ne.s32.totalorder %s129, %s130
      %p144 = scmp.eq.s32.totalorder %s17, 5
      %p145 = por %p143, %p144
      %p147 = scmp.ne.s32.totalorder %s130, %s146
      %p148 = scmp.eq.s32.totalorder %s17, 0
      %p149 = por %p147, %p148
      %s150 = ssub.s32 %s18, %s37
      %s151 = ssub.s32 %s19, %s33
      %s152 = sor.u32 %s150, %s151
      %p153 = scmp.eq.s32.totalorder %s152, 0
      %s155 = sadd.s32 %s154, 1
      %s156 = scalar_select %p153, %s154, %s155
      %p159 = pneg %p153
      %p160 = scmp.eq.s32.totalorder %s11, 5
      %p161 = por %p159, %p160
      %p162 = scmp.ne.s32.totalorder %s154, %s157
      %p163 = scmp.eq.s32.totalorder %s11, 0
      %p164 = por %p162, %p163
      %p165 = scmp.ne.s32.totalorder %s154, %s157
      %p166 = scmp.eq.s32.totalorder %s16, 5
      %p167 = por %p165, %p166
      %p168 = scmp.ne.s32.totalorder %s157, %s158
      %p169 = scmp.eq.s32.totalorder %s16, 0
      %p170 = por %p168, %p169
      %p171 = scmp.ne.s32.totalorder %s157, %s158
      %p172 = scmp.eq.s32.totalorder %s17, 5
      %p173 = por %p171, %p172
      %p175 = scmp.ne.s32.totalorder %s158, %s174
      %p176 = scmp.eq.s32.totalorder %s17, 0
      %p177 = por %p175, %p176
      %p178 = scmp.le.s32.totalorder 1, %s11
      %p179 = scmp.lt.s32.totalorder %s11, 7
      %p180 = pnand %p178, %p179
      %p181 = pneg %p180
      // Predicated region
      $region9: #{residual_block_forward.5} parent=5 // pred_check
        _
      $region10: #{residual_block_forward.5} parent=5 // pred_check_branch
        %183 = sbr.rel (%p180) target = $region12
      $region11: #{residual_block_forward.5} parent=5 // pred_region
        %s184 = ssub.s32 %s11, 1
      $region12: #{residual_block_forward.5} parent=5 // pred_fallthru
        _
      %p185 = scmp.lt.s32.totalorder %s11, 6
      // Predicated region
      $region13: #{residual_block_forward.5} parent=5 // pred_check
        %p186 = pneg %p185
      $region14: #{residual_block_forward.5} parent=5 // pred_check_branch
        %188 = sbr.rel (%p186) target = $region16
      $region15: #{residual_block_forward.5} parent=5 // pred_region
        // Predicated region
        $region17: #{residual_block_forward.5} parent=15 // pred_check
          %p189 = pneg %p52
        $region18: #{residual_block_forward.5} parent=15 // pred_check_branch
          %191 = sbr.rel (%p189) target = $region20
        $region19: #{residual_block_forward.5} parent=15 // pred_region
          %s192 = sand.u32 %s42, 1
          %s193 = sand.u32 %s42, 1
          %s194 = smul.addr %s193, 384
          %s195 = scalar_lea.vmem [#allocation3], %s194
          %s196 = smul.u32 32, %s18
          %s197 = smul.u32 3, %s20
          %s198 = smul.addr %s196, 9
          %s199 = sadd.s32 %s197, %s198
          %s200 = smul.addr %s199, 4
          %s201 = scalar_lea.vmem %s0, %s200
          // Predicated region
          $region21: #{residual_block_forward.5} parent=19 // pred_check
            _
          $region22: #{residual_block_forward.5} parent=19 // pred_check_branch
            %203 = sbr.rel (0) target = $region24
          $region23: #{residual_block_forward.5} parent=19 // pred_region
            // Predicated region
            $region25: #{residual_block_forward.5} parent=23 // pred_check
              _
            $region26: #{residual_block_forward.5} parent=23 // pred_check_branch
              %205 = sbr.rel (0) target = $region28
            $region27: #{residual_block_forward.5} parent=23 // pred_region
              %s206 = scalar_lea.vmem %s201, 8
              %s207 = scalar_lea.vmem %s195, 8 [#allocation3]
              loop: start=0, step=1, limit=1
              $region29: #{residual_block_forward.5} parent=27 // loop_pre_header
                _
              $region30: #{residual_block_forward.5} parent=27 // loop_header
                %s209 = sphi 0, %s213
                %p210 = scmp.ge.s32.totalorder %s209, 1
                %s214 = sphi %s201, %s201
                %s215 = sphi %s195, %s195
              $region31: #{residual_block_forward.5} parent=27 // loop_header_branch
                %212 = sbr.rel (%p210) target = $region35
              $region32: #{residual_block_forward.5} parent=27 // loop_body
                %v216 = vld [vmem:[%s214] sm:$0xff]
                %217 = vst [vmem:[%s215] sm:$0xff] %v216
                %v218 = vld [vmem:[%s214 + $0x24] sm:$0xff]
                %219 = vst [vmem:[%s215 + $0xc] sm:$0xff] %v218
                %v220 = vld [vmem:[%s214 + $0x48] sm:$0xff]
                %221 = vst [vmem:[%s215 + $0x18] sm:$0xff] %v220
                %v222 = vld [vmem:[%s214 + $0x6c] sm:$0xff]
                %223 = vst [vmem:[%s215 + $0x24] sm:$0xff] %v222
                %v224 = vld [vmem:[%s214 + $0x90] sm:$0xff]
                %225 = vst [vmem:[%s215 + $0x30] sm:$0xff] %v224
                %v226 = vld [vmem:[%s214 + $0xb4] sm:$0xff]
                %227 = vst [vmem:[%s215 + $0x3c] sm:$0xff] %v226
                %v228 = vld [vmem:[%s214 + $0xd8] sm:$0xff]
                %229 = vst [vmem:[%s215 + $0x48] sm:$0xff] %v228
                %v230 = vld [vmem:[%s214 + $0xfc] sm:$0xff]
                %231 = vst [vmem:[%s215 + $0x54] sm:$0xff] %v230
                %v232 = vld [vmem:[%s214 + $0x120] sm:$0xff]
                %233 = vst [vmem:[%s215 + $0x60] sm:$0xff] %v232
                %v234 = vld [vmem:[%s214 + $0x144] sm:$0xff]
                %235 = vst [vmem:[%s215 + $0x6c] sm:$0xff] %v234
                %v236 = vld [vmem:[%s214 + $0x168] sm:$0xff]
                %237 = vst [vmem:[%s215 + $0x78] sm:$0xff] %v236
                %v238 = vld [vmem:[%s214 + $0x18c] sm:$0xff]
                %239 = vst [vmem:[%s215 + $0x84] sm:$0xff] %v238
                %v240 = vld [vmem:[%s214 + $0x1b0] sm:$0xff]
                %241 = vst [vmem:[%s215 + $0x90] sm:$0xff] %v240
                %v242 = vld [vmem:[%s214 + $0x1d4] sm:$0xff]
                %243 = vst [vmem:[%s215 + $0x9c] sm:$0xff] %v242
                %v244 = vld [vmem:[%s214 + $0x1f8] sm:$0xff]
                %245 = vst [vmem:[%s215 + $0xa8] sm:$0xff] %v244
                %v246 = vld [vmem:[%s214 + $0x21c] sm:$0xff]
                %247 = vst [vmem:[%s215 + $0xb4] sm:$0xff] %v246
                %v248 = vld [vmem:[%s214 + $0x240] sm:$0xff]
                %249 = vst [vmem:[%s215 + $0xc0] sm:$0xff] %v248
                %v250 = vld [vmem:[%s214 + $0x264] sm:$0xff]
                %251 = vst [vmem:[%s215 + $0xcc] sm:$0xff] %v250
                %v252 = vld [vmem:[%s214 + $0x288] sm:$0xff]
                %253 = vst [vmem:[%s215 + $0xd8] sm:$0xff] %v252
                %v254 = vld [vmem:[%s214 + $0x2ac] sm:$0xff]
                %255 = vst [vmem:[%s215 + $0xe4] sm:$0xff] %v254
                %v256 = vld [vmem:[%s214 + $0x2d0] sm:$0xff]
                %257 = vst [vmem:[%s215 + $0xf0] sm:$0xff] %v256
                %v258 = vld [vmem:[%s214 + $0x2f4] sm:$0xff]
                %259 = vst [vmem:[%s215 + $0xfc] sm:$0xff] %v258
                %v260 = vld [vmem:[%s214 + $0x318] sm:$0xff]
                %261 = vst [vmem:[%s215 + $0x108] sm:$0xff] %v260
                %v262 = vld [vmem:[%s214 + $0x33c] sm:$0xff]
                %263 = vst [vmem:[%s215 + $0x114] sm:$0xff] %v262
                %v264 = vld [vmem:[%s214 + $0x360] sm:$0xff]
                %265 = vst [vmem:[%s215 + $0x120] sm:$0xff] %v264
                %v266 = vld [vmem:[%s214 + $0x384] sm:$0xff]
                %267 = vst [vmem:[%s215 + $0x12c] sm:$0xff] %v266
                %v268 = vld [vmem:[%s214 + $0x3a8] sm:$0xff]
                %269 = vst [vmem:[%s215 + $0x138] sm:$0xff] %v268
                %v270 = vld [vmem:[%s214 + $0x3cc] sm:$0xff]
                %271 = vst [vmem:[%s215 + $0x144] sm:$0xff] %v270
                %v272 = vld [vmem:[%s214 + $0x3f0] sm:$0xff]
                %273 = vst [vmem:[%s215 + $0x150] sm:$0xff] %v272
                %v274 = vld [vmem:[%s214 + $0x414] sm:$0xff]
                %275 = vst [vmem:[%s215 + $0x15c] sm:$0xff] %v274
                %v276 = vld [vmem:[%s214 + $0x438] sm:$0xff]
                %277 = vst [vmem:[%s215 + $0x168] sm:$0xff] %v276
                %v278 = vld [vmem:[%s214 + $0x45c] sm:$0xff]
                %279 = vst [vmem:[%s215 + $0x174] sm:$0xff] %v278
              $region33: #{residual_block_forward.5} parent=27 // loop_footer
                %s213 = sadd.s32 1, %s209
              $region34: #{residual_block_forward.5} parent=27 // loop_footer_branch
                %208 = sbr.rel target = $region30
              $region35: #{residual_block_forward.5} parent=27 // loop_exit
                _
              %s281 = ssub.s32 16, 1
              loop: start=0, step=1, limit=1
              $region36: #{residual_block_forward.5} parent=27 // loop_pre_header
                _
              $region37: #{residual_block_forward.5} parent=27 // loop_header
                %s283 = sphi 0, %s287
                %p284 = scmp.ge.s32.totalorder %s283, 1
                %s288 = sphi %s206, %s206
                %s289 = sphi %s207, %s207
              $region38: #{residual_block_forward.5} parent=27 // loop_header_branch
                %286 = sbr.rel (%p284) target = $region42
              $region39: #{residual_block_forward.5} parent=27 // loop_body
                %v290 = vld [vmem:[%s288] sm:%s281]
                %291 = vst [vmem:[%s289] sm:%s281] %v290
                %v292 = vld [vmem:[%s288 + $0x24] sm:%s281]
                %293 = vst [vmem:[%s289 + $0xc] sm:%s281] %v292
                %v294 = vld [vmem:[%s288 + $0x48] sm:%s281]
                %295 = vst [vmem:[%s289 + $0x18] sm:%s281] %v294
                %v296 = vld [vmem:[%s288 + $0x6c] sm:%s281]
                %297 = vst [vmem:[%s289 + $0x24] sm:%s281] %v296
                %v298 = vld [vmem:[%s288 + $0x90] sm:%s281]
                %299 = vst [vmem:[%s289 + $0x30] sm:%s281] %v298
                %v300 = vld [vmem:[%s288 + $0xb4] sm:%s281]
                %301 = vst [vmem:[%s289 + $0x3c] sm:%s281] %v300
                %v302 = vld [vmem:[%s288 + $0xd8] sm:%s281]
                %303 = vst [vmem:[%s289 + $0x48] sm:%s281] %v302
                %v304 = vld [vmem:[%s288 + $0xfc] sm:%s281]
                %305 = vst [vmem:[%s289 + $0x54] sm:%s281] %v304
                %v306 = vld [vmem:[%s288 + $0x120] sm:%s281]
                %307 = vst [vmem:[%s289 + $0x60] sm:%s281] %v306
                %v308 = vld [vmem:[%s288 + $0x144] sm:%s281]
                %309 = vst [vmem:[%s289 + $0x6c] sm:%s281] %v308
                %v310 = vld [vmem:[%s288 + $0x168] sm:%s281]
                %311 = vst [vmem:[%s289 + $0x78] sm:%s281] %v310
                %v312 = vld [vmem:[%s288 + $0x18c] sm:%s281]
                %313 = vst [vmem:[%s289 + $0x84] sm:%s281] %v312
                %v314 = vld [vmem:[%s288 + $0x1b0] sm:%s281]
                %315 = vst [vmem:[%s289 + $0x90] sm:%s281] %v314
                %v316 = vld [vmem:[%s288 + $0x1d4] sm:%s281]
                %317 = vst [vmem:[%s289 + $0x9c] sm:%s281] %v316
                %v318 = vld [vmem:[%s288 + $0x1f8] sm:%s281]
                %319 = vst [vmem:[%s289 + $0xa8] sm:%s281] %v318
                %v320 = vld [vmem:[%s288 + $0x21c] sm:%s281]
                %321 = vst [vmem:[%s289 + $0xb4] sm:%s281] %v320
                %v322 = vld [vmem:[%s288 + $0x240] sm:%s281]
                %323 = vst [vmem:[%s289 + $0xc0] sm:%s281] %v322
                %v324 = vld [vmem:[%s288 + $0x264] sm:%s281]
                %325 = vst [vmem:[%s289 + $0xcc] sm:%s281] %v324
                %v326 = vld [vmem:[%s288 + $0x288] sm:%s281]
                %327 = vst [vmem:[%s289 + $0xd8] sm:%s281] %v326
                %v328 = vld [vmem:[%s288 + $0x2ac] sm:%s281]
                %329 = vst [vmem:[%s289 + $0xe4] sm:%s281] %v328
                %v330 = vld [vmem:[%s288 + $0x2d0] sm:%s281]
                %331 = vst [vmem:[%s289 + $0xf0] sm:%s281] %v330
                %v332 = vld [vmem:[%s288 + $0x2f4] sm:%s281]
                %333 = vst [vmem:[%s289 + $0xfc] sm:%s281] %v332
                %v334 = vld [vmem:[%s288 + $0x318] sm:%s281]
                %335 = vst [vmem:[%s289 + $0x108] sm:%s281] %v334
                %v336 = vld [vmem:[%s288 + $0x33c] sm:%s281]
                %337 = vst [vmem:[%s289 + $0x114] sm:%s281] %v336
                %v338 = vld [vmem:[%s288 + $0x360] sm:%s281]
                %339 = vst [vmem:[%s289 + $0x120] sm:%s281] %v338
                %v340 = vld [vmem:[%s288 + $0x384] sm:%s281]
                %341 = vst [vmem:[%s289 + $0x12c] sm:%s281] %v340
                %v342 = vld [vmem:[%s288 + $0x3a8] sm:%s281]
                %343 = vst [vmem:[%s289 + $0x138] sm:%s281] %v342
                %v344 = vld [vmem:[%s288 + $0x3cc] sm:%s281]
                %345 = vst [vmem:[%s289 + $0x144] sm:%s281] %v344
                %v346 = vld [vmem:[%s288 + $0x3f0] sm:%s281]
                %347 = vst [vmem:[%s289 + $0x150] sm:%s281] %v346
                %v348 = vld [vmem:[%s288 + $0x414] sm:%s281]
                %349 = vst [vmem:[%s289 + $0x15c] sm:%s281] %v348
                %v350 = vld [vmem:[%s288 + $0x438] sm:%s281]
                %351 = vst [vmem:[%s289 + $0x168] sm:%s281] %v350
                %v352 = vld [vmem:[%s288 + $0x45c] sm:%s281]
                %353 = vst [vmem:[%s289 + $0x174] sm:%s281] %v352
              $region40: #{residual_block_forward.5} parent=27 // loop_footer
                %s287 = sadd.s32 1, %s283
              $region41: #{residual_block_forward.5} parent=27 // loop_footer_branch
                %282 = sbr.rel target = $region37
              $region42: #{residual_block_forward.5} parent=27 // loop_exit
                _
            $region28: #{residual_block_forward.5} parent=23 // pred_fallthru
              _
          $region24: #{residual_block_forward.5} parent=19 // pred_fallthru
            _
          %354 = vnop
        $region20: #{residual_block_forward.5} parent=15 // pred_fallthru
          _
        // Predicated region
        $region43: #{residual_block_forward.5} parent=15 // pred_check
          %p355 = pneg %p80
        $region44: #{residual_block_forward.5} parent=15 // pred_check_branch
          %357 = sbr.rel (%p355) target = $region46
        $region45: #{residual_block_forward.5} parent=15 // pred_region
          %s358 = smul.u32 48, %s20
          %p359 = scmp.lt.s32.totalorder %s358, 143
          %s360 = scalar_select %p359, %s358, 143
          %p361 = scmp.lt.s32.totalorder %s19, 0
          %s362 = scalar_select %p361, %s19, 0
          %s363 = sadd.s32 %s362, %s360
          %s364 = smul.addr %s363, 4
          %s365 = scalar_lea.vmem %s1, %s364
          %s366 = smul.u32 48, %s20
        $region46: #{residual_block_forward.5} parent=15 // pred_fallthru
          _
      $region16: #{residual_block_forward.5} parent=5 // pred_fallthru
        _
      %p367 = scmp.le.s32.totalorder 1, %s11
      %p368 = scmp.lt.s32.totalorder %s11, 7
      %p369 = pnand %p367, %p368
      %p370 = pneg %p369
      // Predicated region
      $region47: #{residual_block_forward.5} parent=5 // pred_check
        _
      $region48: #{residual_block_forward.5} parent=5 // pred_check_branch
        %372 = sbr.rel (%p369) target = $region50
      $region49: #{residual_block_forward.5} parent=5 // pred_region
        %s373 = ssub.s32 %s11, 1
        %s374 = sand.u32 %s45, 1
        %s375 = sand.u32 %s45, 1
        %s376 = smul.addr %s375, 384
        %s377 = scalar_lea.vmem [#allocation3], %s376
        // Predicated region
        $region51: #{residual_block_forward.5} parent=49 // pred_check
          %p378 = pneg %p58
        $region52: #{residual_block_forward.5} parent=49 // pred_check_branch
          %380 = sbr.rel (%p378) target = $region54
        $region53: #{residual_block_forward.5} parent=49 // pred_region
          _
        $region54: #{residual_block_forward.5} parent=49 // pred_fallthru
          _
        %s381 = sand.u32 %s45, 1
        %s382 = sand.u32 %s45, 1
        %s383 = smul.addr %s382, 384
        %s384 = scalar_lea.vmem [#allocation3], %s383
        %p385 = pneg %p58
        %p386 = pneg %p55
        %s387 = smul.u32 48, %s23
        %p388 = scmp.lt.s32.totalorder %s387, 143
        %s389 = scalar_select %p388, %s387, 143
        %p390 = scmp.lt.s32.totalorder %s22, 0
        %s391 = scalar_select %p390, %s22, 0
        %s392 = sadd.s32 %s391, %s389
        %s393 = smul.addr %s392, 4
        %s394 = scalar_lea.vmem %s1, %s393
        %p395 = pneg %p86
        %p396 = pneg %p83
        %p397 = pneg %p114
        %p398 = pneg %p111
        %s399 = smul.u32 32, %s21
        %p400 = scmp.lt.s32.totalorder %s399, 63
        %s401 = scalar_select %p400, %s399, 63
        %p402 = scmp.lt.s32.totalorder %s22, 0
        %s403 = scalar_select %p402, %s22, 0
        %s404 = sadd.s32 %s403, %s401
        %s405 = smul.addr %s404, 8
        %s406 = scalar_lea.vmem %s2, %s405
        %p407 = pneg %p142
        %p408 = pneg %p139
        %p409 = scmp.lt.s32.totalorder %s21, 1
        %s410 = scalar_select %p409, %s21, 1
        %p411 = scmp.lt.s32.totalorder %s22, 0
        %s412 = scalar_select %p411, %s22, 0
        %s413 = sadd.s32 %s412, %s410
        %s414 = smul.addr %s413, 8
        %s415 = scalar_lea.vmem %s3, %s414
        %p416 = pneg %p170
        %p417 = pneg %p167
        %p418 = scmp.lt.s32.totalorder %s21, 1
        %s419 = scalar_select %p418, %s21, 1
        %p420 = scmp.lt.s32.totalorder %s22, 0
        %s421 = scalar_select %p420, %s22, 0
        %s422 = sadd.s32 %s421, %s419
        %s423 = smul.addr %s422, 8
        %s424 = scalar_lea.vmem %s4, %s423
        %s425 = smul.u32 32, %s21
        %s426 = smul.u32 3, %s23
        %s427 = smul.u32 48, %s23
        %p428 = scmp.lt.s32.totalorder %s427, 143
        %s429 = scalar_select %p428, %s427, 143
        %p430 = scmp.lt.s32.totalorder %s22, 0
        %s431 = scalar_select %p430, %s22, 0
        %s432 = sadd.s32 %s431, %s429
        %s433 = smul.addr %s432, 4
        %s434 = scalar_lea.vmem %s1, %s433
        %s435 = smul.u32 48, %s23
        %s436 = smul.u32 32, %s21
        %p437 = scmp.lt.s32.totalorder %s436, 63
        %s438 = scalar_select %p437, %s436, 63
        %p439 = scmp.lt.s32.totalorder %s22, 0
        %s440 = scalar_select %p439, %s22, 0
        %s441 = sadd.s32 %s440, %s438
        %s442 = smul.addr %s441, 8
        %s443 = scalar_lea.vmem %s2, %s442
        %s444 = smul.u32 32, %s21
        %p445 = scmp.lt.s32.totalorder %s21, 1
        %s446 = scalar_select %p445, %s21, 1
        %p447 = scmp.lt.s32.totalorder %s22, 0
        %s448 = scalar_select %p447, %s22, 0
        %s449 = sadd.s32 %s448, %s446
        %s450 = smul.addr %s449, 8
        %s451 = scalar_lea.vmem %s3, %s450
        %p452 = scmp.lt.s32.totalorder %s21, 1
        %s453 = scalar_select %p452, %s21, 1
        %p454 = scmp.lt.s32.totalorder %s22, 0
        %s455 = scalar_select %p454, %s22, 0
        %s456 = sadd.s32 %s455, %s453
        %s457 = smul.addr %s456, 8
        %s458 = scalar_lea.vmem %s4, %s457
        %p459 = scmp.eq.s32.totalorder %s23, 0
        // Predicated region
        $region55: #{residual_block_forward.5} parent=49 // pred_check
          %p460 = pneg %p459
        $region56: #{residual_block_forward.5} parent=49 // pred_check_branch
          %462 = sbr.rel (%p460) target = $region58
        $region57: #{residual_block_forward.5} parent=49 // pred_region
          %463 = vst [vmem:[#allocation2] sm:$0xff] 0.0
          %464 = vst [vmem:[#allocation2 + $0x8] sm:$0xff] 0.0
          %465 = vst [vmem:[#allocation2 + $0x10] sm:$0xff] 0.0
          %466 = vst [vmem:[#allocation2 + $0x18] sm:$0xff] 0.0
          %467 = vst [vmem:[#allocation2 + $0x20] sm:$0xff] 0.0
          %468 = vst [vmem:[#allocation2 + $0x28] sm:$0xff] 0.0
          %469 = vst [vmem:[#allocation2 + $0x30] sm:$0xff] 0.0
          %470 = vst [vmem:[#allocation2 + $0x38] sm:$0xff] 0.0
          %471 = vst [vmem:[#allocation2 + $0x40] sm:$0xff] 0.0
          %472 = vst [vmem:[#allocation2 + $0x48] sm:$0xff] 0.0
          %473 = vst [vmem:[#allocation2 + $0x50] sm:$0xff] 0.0
          %474 = vst [vmem:[#allocation2 + $0x58] sm:$0xff] 0.0
          %475 = vst [vmem:[#allocation2 + $0x60] sm:$0xff] 0.0
          %476 = vst [vmem:[#allocation2 + $0x68] sm:$0xff] 0.0
          %477 = vst [vmem:[#allocation2 + $0x70] sm:$0xff] 0.0
          %478 = vst [vmem:[#allocation2 + $0x78] sm:$0xff] 0.0
          %479 = vst [vmem:[#allocation2 + $0x80] sm:$0xff] 0.0
          %480 = vst [vmem:[#allocation2 + $0x88] sm:$0xff] 0.0
          %481 = vst [vmem:[#allocation2 + $0x90] sm:$0xff] 0.0
          %482 = vst [vmem:[#allocation2 + $0x98] sm:$0xff] 0.0
          %483 = vst [vmem:[#allocation2 + $0xa0] sm:$0xff] 0.0
          %484 = vst [vmem:[#allocation2 + $0xa8] sm:$0xff] 0.0
          %485 = vst [vmem:[#allocation2 + $0xb0] sm:$0xff] 0.0
          %486 = vst [vmem:[#allocation2 + $0xb8] sm:$0xff] 0.0
          %487 = vst [vmem:[#allocation2 + $0xc0] sm:$0xff] 0.0
          %488 = vst [vmem:[#allocation2 + $0xc8] sm:$0xff] 0.0
          %489 = vst [vmem:[#allocation2 + $0xd0] sm:$0xff] 0.0
          %490 = vst [vmem:[#allocation2 + $0xd8] sm:$0xff] 0.0
          %491 = vst [vmem:[#allocation2 + $0xe0] sm:$0xff] 0.0
          %492 = vst [vmem:[#allocation2 + $0xe8] sm:$0xff] 0.0
          %493 = vst [vmem:[#allocation2 + $0xf0] sm:$0xff] 0.0
          %494 = vst [vmem:[#allocation2 + $0xf8] sm:$0xff] 0.0
        $region58: #{residual_block_forward.5} parent=49 // pred_fallthru
          _
        %v495 = vld [vmem:[#allocation2] sm:$0xff]
        %v496 = vld [vmem:[#allocation2 + $0x8] sm:$0xff]
        %v497 = vld [vmem:[#allocation2 + $0x10] sm:$0xff]
        %v498 = vld [vmem:[#allocation2 + $0x18] sm:$0xff]
        %v499 = vld [vmem:[#allocation2 + $0x20] sm:$0xff]
        %v500 = vld [vmem:[#allocation2 + $0x28] sm:$0xff]
        %v501 = vld [vmem:[#allocation2 + $0x30] sm:$0xff]
        %v502 = vld [vmem:[#allocation2 + $0x38] sm:$0xff]
        %v503 = vld [vmem:[#allocation2 + $0x40] sm:$0xff]
        %v504 = vld [vmem:[#allocation2 + $0x48] sm:$0xff]
        %v505 = vld [vmem:[#allocation2 + $0x50] sm:$0xff]
        %v506 = vld [vmem:[#allocation2 + $0x58] sm:$0xff]
        %v507 = vld [vmem:[#allocation2 + $0x60] sm:$0xff]
        %v508 = vld [vmem:[#allocation2 + $0x68] sm:$0xff]
        %v509 = vld [vmem:[#allocation2 + $0x70] sm:$0xff]
        %v510 = vld [vmem:[#allocation2 + $0x78] sm:$0xff]
        %v511 = vld [vmem:[#allocation2 + $0x80] sm:$0xff]
        %v512 = vld [vmem:[#allocation2 + $0x88] sm:$0xff]
        %v513 = vld [vmem:[#allocation2 + $0x90] sm:$0xff]
        %v514 = vld [vmem:[#allocation2 + $0x98] sm:$0xff]
        %v515 = vld [vmem:[#allocation2 + $0xa0] sm:$0xff]
        %v516 = vld [vmem:[#allocation2 + $0xa8] sm:$0xff]
        %v517 = vld [vmem:[#allocation2 + $0xb0] sm:$0xff]
        %v518 = vld [vmem:[#allocation2 + $0xb8] sm:$0xff]
        %v519 = vld [vmem:[#allocation2 + $0xc0] sm:$0xff]
        %v520 = vld [vmem:[#allocation2 + $0xc8] sm:$0xff]
        %v521 = vld [vmem:[#allocation2 + $0xd0] sm:$0xff]
        %v522 = vld [vmem:[#allocation2 + $0xd8] sm:$0xff]
        %v523 = vld [vmem:[#allocation2 + $0xe0] sm:$0xff]
        %v524 = vld [vmem:[#allocation2 + $0xe8] sm:$0xff]
        %v525 = vld [vmem:[#allocation2 + $0xf0] sm:$0xff]
        %v526 = vld [vmem:[#allocation2 + $0xf8] sm:$0xff]
        %v527 = vld [vmem:[%s377] sm:$0xff]
        %v528 = vld [vmem:[%s377 + $0x8] sm:$0xf]
        %v529 = vld [vmem:[%s377 + $0xc] sm:$0xff]
        %v530 = vld [vmem:[%s377 + $0x14] sm:$0xf]
        %v531 = vld [vmem:[%s377 + $0x18] sm:$0xff]
        %v532 = vld [vmem:[%s377 + $0x20] sm:$0xf]
        %v533 = vld [vmem:[%s377 + $0x24] sm:$0xff]
        %v534 = vld [vmem:[%s377 + $0x2c] sm:$0xf]
        %v535 = vld [vmem:[%s377 + $0x30] sm:$0xff]
        %v536 = vld [vmem:[%s377 + $0x38] sm:$0xf]
        %v537 = vld [vmem:[%s377 + $0x3c] sm:$0xff]
        %v538 = vld [vmem:[%s377 + $0x44] sm:$0xf]
        %v539 = vld [vmem:[%s377 + $0x48] sm:$0xff]
        %v540 = vld [vmem:[%s377 + $0x50] sm:$0xf]
        %v541 = vld [vmem:[%s377 + $0x54] sm:$0xff]
        %v542 = vld [vmem:[%s377 + $0x5c] sm:$0xf]
        %v543 = vld [vmem:[%s377 + $0x60] sm:$0xff]
        %v544 = vld [vmem:[%s377 + $0x68] sm:$0xf]
        %v545 = vld [vmem:[%s377 + $0x6c] sm:$0xff]
        %v546 = vld [vmem:[%s377 + $0x74] sm:$0xf]
        %v547 = vld [vmem:[%s377 + $0x78] sm:$0xff]
        %v548 = vld [vmem:[%s377 + $0x80] sm:$0xf]
        %v549 = vld [vmem:[%s377 + $0x84] sm:$0xff]
        %v550 = vld [vmem:[%s377 + $0x8c] sm:$0xf]
        %v551 = vld [vmem:[%s377 + $0x90] sm:$0xff]
        %v552 = vld [vmem:[%s377 + $0x98] sm:$0xf]
        %v553 = vld [vmem:[%s377 + $0x9c] sm:$0xff]
        %v554 = vld [vmem:[%s377 + $0xa4] sm:$0xf]
        %v555 = vld [vmem:[%s377 + $0xa8] sm:$0xff]
        %v556 = vld [vmem:[%s377 + $0xb0] sm:$0xf]
        %v557 = vld [vmem:[%s377 + $0xb4] sm:$0xff]
        %v558 = vld [vmem:[%s377 + $0xbc] sm:$0xf]
        %v559 = vld [vmem:[%s377 + $0xc0] sm:$0xff]
        %v560 = vld [vmem:[%s377 + $0xc8] sm:$0xf]
        %v561 = vld [vmem:[%s377 + $0xcc] sm:$0xff]
        %v562 = vld [vmem:[%s377 + $0xd4] sm:$0xf]
        %v563 = vld [vmem:[%s377 + $0xd8] sm:$0xff]
        %v564 = vld [vmem:[%s377 + $0xe0] sm:$0xf]
        %v565 = vld [vmem:[%s377 + $0xe4] sm:$0xff]
        %v566 = vld [vmem:[%s377 + $0xec] sm:$0xf]
        %v567 = vld [vmem:[%s377 + $0xf0] sm:$0xff]
        %v568 = vld [vmem:[%s377 + $0xf8] sm:$0xf]
        %v569 = vld [vmem:[%s377 + $0xfc] sm:$0xff]
        %v570 = vld [vmem:[%s377 + $0x104] sm:$0xf]
        %v571 = vld [vmem:[%s377 + $0x108] sm:$0xff]
        %v572 = vld [vmem:[%s377 + $0x110] sm:$0xf]
        %v573 = vld [vmem:[%s377 + $0x114] sm:$0xff]
        %v574 = vld [vmem:[%s377 + $0x11c] sm:$0xf]
        %v575 = vld [vmem:[%s377 + $0x120] sm:$0xff]
        %v576 = vld [vmem:[%s377 + $0x128] sm:$0xf]
        %v577 = vld [vmem:[%s377 + $0x12c] sm:$0xff]
        %v578 = vld [vmem:[%s377 + $0x134] sm:$0xf]
        %v579 = vld [vmem:[%s377 + $0x138] sm:$0xff]
        %v580 = vld [vmem:[%s377 + $0x140] sm:$0xf]
        %v581 = vld [vmem:[%s377 + $0x144] sm:$0xff]
        %v582 = vld [vmem:[%s377 + $0x14c] sm:$0xf]
        %v583 = vld [vmem:[%s377 + $0x150] sm:$0xff]
        %v584 = vld [vmem:[%s377 + $0x158] sm:$0xf]
        %v585 = vld [vmem:[%s377 + $0x15c] sm:$0xff]
        %v586 = vld [vmem:[%s377 + $0x164] sm:$0xf]
        %v587 = vld [vmem:[%s377 + $0x168] sm:$0xff]
        %v588 = vld [vmem:[%s377 + $0x170] sm:$0xf]
        %v589 = vld [vmem:[%s377 + $0x174] sm:$0xff]
        %v590 = vld [vmem:[%s377 + $0x17c] sm:$0xf]
        %v591 = vld [vmem:[%s434] sm:$0xf]
        %v592 = vld [vmem:[%s434 + $0x4] sm:$0xf]
        %v593 = vld [vmem:[%s434 + $0x8] sm:$0xf]
        %v594 = vld [vmem:[%s434 + $0xc] sm:$0xf]
        %v595 = vld [vmem:[%s434 + $0x10] sm:$0xf]
        %v596 = vld [vmem:[%s434 + $0x14] sm:$0xf]
        %v597 = vld [vmem:[%s434 + $0x18] sm:$0xf]
        %v598 = vld [vmem:[%s434 + $0x1c] sm:$0xf]
        %v599 = vld [vmem:[%s434 + $0x20] sm:$0xf]
        %v600 = vld [vmem:[%s434 + $0x24] sm:$0xf]
        %v601 = vld [vmem:[%s434 + $0x28] sm:$0xf]
        %v602 = vld [vmem:[%s434 + $0x2c] sm:$0xf]
        %v603 = vld [vmem:[%s434 + $0x30] sm:$0xf]
        %v604 = vld [vmem:[%s434 + $0x34] sm:$0xf]
        %v605 = vld [vmem:[%s434 + $0x38] sm:$0xf]
        %v606 = vld [vmem:[%s434 + $0x3c] sm:$0xf]
        %v607 = vld [vmem:[%s434 + $0x40] sm:$0xf]
        %v608 = vld [vmem:[%s434 + $0x44] sm:$0xf]
        %v609 = vld [vmem:[%s434 + $0x48] sm:$0xf]
        %v610 = vld [vmem:[%s434 + $0x4c] sm:$0xf]
        %v611 = vld [vmem:[%s434 + $0x50] sm:$0xf]
        %v612 = vld [vmem:[%s434 + $0x54] sm:$0xf]
        %v613 = vld [vmem:[%s434 + $0x58] sm:$0xf]
        %v614 = vld [vmem:[%s434 + $0x5c] sm:$0xf]
        %v615 = vld [vmem:[%s434 + $0x60] sm:$0xf]
        %v616 = vld [vmem:[%s434 + $0x64] sm:$0xf]
        %v617 = vld [vmem:[%s434 + $0x68] sm:$0xf]
        %v618 = vld [vmem:[%s434 + $0x6c] sm:$0xf]
        %v619 = vld [vmem:[%s434 + $0x70] sm:$0xf]
        %v620 = vld [vmem:[%s434 + $0x74] sm:$0xf]
        %v621 = vld [vmem:[%s434 + $0x78] sm:$0xf]
        %v622 = vld [vmem:[%s434 + $0x7c] sm:$0xf]
        %v623 = vld [vmem:[%s434 + $0x80] sm:$0xf]
        %v624 = vld [vmem:[%s434 + $0x84] sm:$0xf]
        %v625 = vld [vmem:[%s434 + $0x88] sm:$0xf]
        %v626 = vld [vmem:[%s434 + $0x8c] sm:$0xf]
        %v627 = vld [vmem:[%s434 + $0x90] sm:$0xf]
        %v628 = vld [vmem:[%s434 + $0x94] sm:$0xf]
        %v629 = vld [vmem:[%s434 + $0x98] sm:$0xf]
        %v630 = vld [vmem:[%s434 + $0x9c] sm:$0xf]
        %v631 = vld [vmem:[%s434 + $0xa0] sm:$0xf]
        %v632 = vld [vmem:[%s434 + $0xa4] sm:$0xf]
        %v633 = vld [vmem:[%s434 + $0xa8] sm:$0xf]
        %v634 = vld [vmem:[%s434 + $0xac] sm:$0xf]
        %v635 = vld [vmem:[%s434 + $0xb0] sm:$0xf]
        %v636 = vld [vmem:[%s434 + $0xb4] sm:$0xf]
        %v637 = vld [vmem:[%s434 + $0xb8] sm:$0xf]
        %v638 = vld [vmem:[%s434 + $0xbc] sm:$0xf]
        %v703 = vunpack.c.l.b16 %v527
        %v704 = vunpack.c.h.b16 %v527
        %v705 = vunpack.c.l.b16 %v528
        %v706 = vunpack.c.l.b16 %v529
        %v707 = vunpack.c.h.b16 %v529
        %v708 = vunpack.c.l.b16 %v530
        %v709 = vunpack.c.l.b16 %v531
        %v710 = vunpack.c.h.b16 %v531
        %v711 = vunpack.c.l.b16 %v532
        %v712 = vunpack.c.l.b16 %v533
        %v713 = vunpack.c.h.b16 %v533
        %v714 = vunpack.c.l.b16 %v534
        %v715 = vunpack.c.l.b16 %v535
        %v716 = vunpack.c.h.b16 %v535
        %v717 = vunpack.c.l.b16 %v536
        %v718 = vunpack.c.l.b16 %v537
        %v719 = vunpack.c.h.b16 %v537
        %v720 = vunpack.c.l.b16 %v538
        %v721 = vunpack.c.l.b16 %v539
        %v722 = vunpack.c.h.b16 %v539
        %v723 = vunpack.c.l.b16 %v540
        %v724 = vunpack.c.l.b16 %v541
        %v725 = vunpack.c.h.b16 %v541
        %v726 = vunpack.c.l.b16 %v542
        %v727 = vunpack.c.l.b16 %v543
        %v728 = vunpack.c.h.b16 %v543
        %v729 = vunpack.c.l.b16 %v544
        %v730 = vunpack.c.l.b16 %v545
        %v731 = vunpack.c.h.b16 %v545
        %v732 = vunpack.c.l.b16 %v546
        %v733 = vunpack.c.l.b16 %v547
        %v734 = vunpack.c.h.b16 %v547
        %v735 = vunpack.c.l.b16 %v548
        %v736 = vunpack.c.l.b16 %v549
        %v737 = vunpack.c.h.b16 %v549
        %v738 = vunpack.c.l.b16 %v550
        %v739 = vunpack.c.l.b16 %v551
        %v740 = vunpack.c.h.b16 %v551
        %v741 = vunpack.c.l.b16 %v552
        %v742 = vunpack.c.l.b16 %v553
        %v743 = vunpack.c.h.b16 %v553
        %v744 = vunpack.c.l.b16 %v554
        %v745 = vunpack.c.l.b16 %v555
        %v746 = vunpack.c.h.b16 %v555
        %v747 = vunpack.c.l.b16 %v556
        %v748 = vunpack.c.l.b16 %v557
        %v749 = vunpack.c.h.b16 %v557
        %v750 = vunpack.c.l.b16 %v558
        %v751 = vunpack.c.l.b16 %v559
        %v752 = vunpack.c.h.b16 %v559
        %v753 = vunpack.c.l.b16 %v560
        %v754 = vunpack.c.l.b16 %v561
        %v755 = vunpack.c.h.b16 %v561
        %v756 = vunpack.c.l.b16 %v562
        %v757 = vunpack.c.l.b16 %v563
        %v758 = vunpack.c.h.b16 %v563
        %v759 = vunpack.c.l.b16 %v564
        %v760 = vunpack.c.l.b16 %v565
        %v761 = vunpack.c.h.b16 %v565
        %v762 = vunpack.c.l.b16 %v566
        %v763 = vunpack.c.l.b16 %v567
        %v764 = vunpack.c.h.b16 %v567
        %v765 = vunpack.c.l.b16 %v568
        %v766 = vunpack.c.l.b16 %v569
        %v767 = vunpack.c.h.b16 %v569
        %v768 = vunpack.c.l.b16 %v570
        %v769 = vunpack.c.l.b16 %v571
        %v770 = vunpack.c.h.b16 %v571
        %v771 = vunpack.c.l.b16 %v572
        %v772 = vunpack.c.l.b16 %v573
        %v773 = vunpack.c.h.b16 %v573
        %v774 = vunpack.c.l.b16 %v574
        %v775 = vunpack.c.l.b16 %v575
        %v776 = vunpack.c.h.b16 %v575
        %v777 = vunpack.c.l.b16 %v576
        %v778 = vunpack.c.l.b16 %v577
        %v779 = vunpack.c.h.b16 %v577
        %v780 = vunpack.c.l.b16 %v578
        %v781 = vunpack.c.l.b16 %v579
        %v782 = vunpack.c.h.b16 %v579
        %v783 = vunpack.c.l.b16 %v580
        %v784 = vunpack.c.l.b16 %v581
        %v785 = vunpack.c.h.b16 %v581
        %v786 = vunpack.c.l.b16 %v582
        %v787 = vunpack.c.l.b16 %v583
        %v788 = vunpack.c.h.b16 %v583
        %v789 = vunpack.c.l.b16 %v584
        %v790 = vunpack.c.l.b16 %v585
        %v791 = vunpack.c.h.b16 %v585
        %v792 = vunpack.c.l.b16 %v586
        %v793 = vunpack.c.l.b16 %v587
        %v794 = vunpack.c.h.b16 %v587
        %v795 = vunpack.c.l.b16 %v588
        %v796 = vunpack.c.l.b16 %v589
        %v797 = vunpack.c.h.b16 %v589
        %v798 = vunpack.c.l.b16 %v590
        %v799 = vpack.c.b16 %v706, %v703
        %v800 = vpack.c.b16 %v707, %v704
        %v801 = vpack.c.b16 %v708, %v705
        %v802 = vpack.c.b16 %v712, %v709
        %v803 = vpack.c.b16 %v713, %v710
        %v804 = vpack.c.b16 %v714, %v711
        %v805 = vpack.c.b16 %v718, %v715
        %v806 = vpack.c.b16 %v719, %v716
        %v807 = vpack.c.b16 %v720, %v717
        %v808 = vpack.c.b16 %v724, %v721
        %v809 = vpack.c.b16 %v725, %v722
        %v810 = vpack.c.b16 %v726, %v723
        %v811 = vpack.c.b16 %v730, %v727
        %v812 = vpack.c.b16 %v731, %v728
        %v813 = vpack.c.b16 %v732, %v729
        %v814 = vpack.c.b16 %v736, %v733
        %v815 = vpack.c.b16 %v737, %v734
        %v816 = vpack.c.b16 %v738, %v735
        %v817 = vpack.c.b16 %v742, %v739
        %v818 = vpack.c.b16 %v743, %v740
        %v819 = vpack.c.b16 %v744, %v741
        %v820 = vpack.c.b16 %v748, %v745
        %v821 = vpack.c.b16 %v749, %v746
        %v822 = vpack.c.b16 %v750, %v747
        %v823 = vpack.c.b16 %v754, %v751
        %v824 = vpack.c.b16 %v755, %v752
        %v825 = vpack.c.b16 %v756, %v753
        %v826 = vpack.c.b16 %v760, %v757
        %v827 = vpack.c.b16 %v761, %v758
        %v828 = vpack.c.b16 %v762, %v759
        %v829 = vpack.c.b16 %v766, %v763
        %v830 = vpack.c.b16 %v767, %v764
        %v831 = vpack.c.b16 %v768, %v765
        %v832 = vpack.c.b16 %v772, %v769
        %v833 = vpack.c.b16 %v773, %v770
        %v834 = vpack.c.b16 %v774, %v771
        %v835 = vpack.c.b16 %v778, %v775
        %v836 = vpack.c.b16 %v779, %v776
        %v837 = vpack.c.b16 %v780, %v777
        %v838 = vpack.c.b16 %v784, %v781
        %v839 = vpack.c.b16 %v785, %v782
        %v840 = vpack.c.b16 %v786, %v783
        %v841 = vpack.c.b16 %v790, %v787
        %v842 = vpack.c.b16 %v791, %v788
        %v843 = vpack.c.b16 %v792, %v789
        %v844 = vpack.c.b16 %v796, %v793
        %v845 = vpack.c.b16 %v797, %v794
        %v846 = vpack.c.b16 %v798, %v795
        %v943 = vunpack.c.l.b16 %v591
        %v944 = vunpack.c.l.b16 %v592
        %v945 = vunpack.c.l.b16 %v593
        %v946 = vunpack.c.l.b16 %v594
        %v947 = vunpack.c.l.b16 %v595
        %v948 = vunpack.c.l.b16 %v596
        %v949 = vunpack.c.l.b16 %v597
        %v950 = vunpack.c.l.b16 %v598
        %v951 = vunpack.c.l.b16 %v599
        %v952 = vunpack.c.l.b16 %v600
        %v953 = vunpack.c.l.b16 %v601
        %v954 = vunpack.c.l.b16 %v602
        %v955 = vunpack.c.l.b16 %v603
        %v956 = vunpack.c.l.b16 %v604
        %v957 = vunpack.c.l.b16 %v605
        %v958 = vunpack.c.l.b16 %v606
        %v959 = vunpack.c.l.b16 %v607
        %v960 = vunpack.c.l.b16 %v608
        %v961 = vunpack.c.l.b16 %v609
        %v962 = vunpack.c.l.b16 %v610
        %v963 = vunpack.c.l.b16 %v611
        %v964 = vunpack.c.l.b16 %v612
        %v965 = vunpack.c.l.b16 %v613
        %v966 = vunpack.c.l.b16 %v614
        %v967 = vunpack.c.l.b16 %v615
        %v968 = vunpack.c.l.b16 %v616
        %v969 = vunpack.c.l.b16 %v617
        %v970 = vunpack.c.l.b16 %v618
        %v971 = vunpack.c.l.b16 %v619
        %v972 = vunpack.c.l.b16 %v620
        %v973 = vunpack.c.l.b16 %v621
        %v974 = vunpack.c.l.b16 %v622
        %v975 = vunpack.c.l.b16 %v623
        %v976 = vunpack.c.l.b16 %v624
        %v977 = vunpack.c.l.b16 %v625
        %v978 = vunpack.c.l.b16 %v626
        %v979 = vunpack.c.l.b16 %v627
        %v980 = vunpack.c.l.b16 %v628
        %v981 = vunpack.c.l.b16 %v629
        %v982 = vunpack.c.l.b16 %v630
        %v983 = vunpack.c.l.b16 %v631
        %v984 = vunpack.c.l.b16 %v632
        %v985 = vunpack.c.l.b16 %v633
        %v986 = vunpack.c.l.b16 %v634
        %v987 = vunpack.c.l.b16 %v635
        %v988 = vunpack.c.l.b16 %v636
        %v989 = vunpack.c.l.b16 %v637
        %v990 = vunpack.c.l.b16 %v638
        %v991 = vpack.c.b16 %v944, %v943
        %v992 = vpack.c.b16 %v946, %v945
        %v993 = vpack.c.b16 %v948, %v947
        %v994 = vpack.c.b16 %v950, %v949
        %v995 = vpack.c.b16 %v952, %v951
        %v996 = vpack.c.b16 %v954, %v953
        %v997 = vpack.c.b16 %v956, %v955
        %v998 = vpack.c.b16 %v958, %v957
        %v999 = vpack.c.b16 %v960, %v959
        %v1000 = vpack.c.b16 %v962, %v961
        %v1001 = vpack.c.b16 %v964, %v963
        %v1002 = vpack.c.b16 %v966, %v965
        %v1003 = vpack.c.b16 %v968, %v967
        %v1004 = vpack.c.b16 %v970, %v969
        %v1005 = vpack.c.b16 %v972, %v971
        %v1006 = vpack.c.b16 %v974, %v973
        %v1007 = vpack.c.b16 %v976, %v975
        %v1008 = vpack.c.b16 %v978, %v977
        %v1009 = vpack.c.b16 %v980, %v979
        %v1010 = vpack.c.b16 %v982, %v981
        %v1011 = vpack.c.b16 %v984, %v983
        %v1012 = vpack.c.b16 %v986, %v985
        %v1013 = vpack.c.b16 %v988, %v987
        %v1014 = vpack.c.b16 %v990, %v989
        %1039 = vmatpush.bf16.msra.mxu0 %v998
        %1040 = vmatpush.bf16.msra.mxu0 %v997
        %1041 = vmatpush.bf16.msra.mxu0 %v996
        %1042 = vmatpush.bf16.msra.mxu0 %v995
        %1043 = vmatpush.bf16.msra.mxu0 %v994
        %1044 = vmatpush.bf16.msra.mxu0 %v993
        %1045 = vmatpush.bf16.msra.mxu0 %v992
        %1046 = vmatpush.bf16.msra.mxu0 %v991
        %1047 = vmatmul.bf16.gmra.mxu0 %v799
        %v1048 = vpop.f32.mrf.mxu0
        %v1049 = vadd.f32 0.0, %v1048
        %v1050 = vpop.f32.mrf.mxu0
        %v1051 = vadd.f32 0.0, %v1050
        %1052 = vmatmul.bf16.gmra.mxu0 %v802
        %v1053 = vpop.f32.mrf.mxu0
        %v1054 = vadd.f32 0.0, %v1053
        %v1055 = vpop.f32.mrf.mxu0
        %v1056 = vadd.f32 0.0, %v1055
        %1057 = vmatmul.bf16.gmra.mxu0 %v805
        %v1058 = vpop.f32.mrf.mxu0
        %v1059 = vadd.f32 0.0, %v1058
        %v1060 = vpop.f32.mrf.mxu0
        %v1061 = vadd.f32 0.0, %v1060
        %1062 = vmatmul.bf16.gmra.mxu0 %v808
        %v1063 = vpop.f32.mrf.mxu0
        %v1064 = vadd.f32 0.0, %v1063
        %v1065 = vpop.f32.mrf.mxu0
        %v1066 = vadd.f32 0.0, %v1065
        %1067 = vmatmul.bf16.gmra.mxu0 %v811
        %v1068 = vpop.f32.mrf.mxu0
        %v1069 = vadd.f32 0.0, %v1068
        %v1070 = vpop.f32.mrf.mxu0
        %v1071 = vadd.f32 0.0, %v1070
        %1072 = vmatmul.bf16.gmra.mxu0 %v814
        %v1073 = vpop.f32.mrf.mxu0
        %v1074 = vadd.f32 0.0, %v1073
        %v1075 = vpop.f32.mrf.mxu0
        %v1076 = vadd.f32 0.0, %v1075
        %1077 = vmatmul.bf16.gmra.mxu0 %v817
        %v1078 = vpop.f32.mrf.mxu0
        %v1079 = vadd.f32 0.0, %v1078
        %v1080 = vpop.f32.mrf.mxu0
        %v1081 = vadd.f32 0.0, %v1080
        %1082 = vmatmul.bf16.gmra.mxu0 %v820
        %v1083 = vpop.f32.mrf.mxu0
        %v1084 = vadd.f32 0.0, %v1083
        %v1085 = vpop.f32.mrf.mxu0
        %v1086 = vadd.f32 0.0, %v1085
        %1087 = vmatmul.bf16.gmra.mxu0 %v823
        %v1088 = vpop.f32.mrf.mxu0
        %v1089 = vadd.f32 0.0, %v1088
        %v1090 = vpop.f32.mrf.mxu0
        %v1091 = vadd.f32 0.0, %v1090
        %1092 = vmatmul.bf16.gmra.mxu0 %v826
        %v1093 = vpop.f32.mrf.mxu0
        %v1094 = vadd.f32 0.0, %v1093
        %v1095 = vpop.f32.mrf.mxu0
        %v1096 = vadd.f32 0.0, %v1095
        %1097 = vmatmul.bf16.gmra.mxu0 %v829
        %v1098 = vpop.f32.mrf.mxu0
        %v1099 = vadd.f32 0.0, %v1098
        %v1100 = vpop.f32.mrf.mxu0
        %v1101 = vadd.f32 0.0, %v1100
        %1102 = vmatmul.bf16.gmra.mxu0 %v832
        %v1103 = vpop.f32.mrf.mxu0
        %v1104 = vadd.f32 0.0, %v1103
        %v1105 = vpop.f32.mrf.mxu0
        %v1106 = vadd.f32 0.0, %v1105
        %1107 = vmatmul.bf16.gmra.mxu0 %v835
        %v1108 = vpop.f32.mrf.mxu0
        %v1109 = vadd.f32 0.0, %v1108
        %v1110 = vpop.f32.mrf.mxu0
        %v1111 = vadd.f32 0.0, %v1110
        %1112 = vmatmul.bf16.gmra.mxu0 %v838
        %v1113 = vpop.f32.mrf.mxu0
        %v1114 = vadd.f32 0.0, %v1113
        %v1115 = vpop.f32.mrf.mxu0
        %v1116 = vadd.f32 0.0, %v1115
        %1117 = vmatmul.bf16.gmra.mxu0 %v841
        %v1118 = vpop.f32.mrf.mxu0
        %v1119 = vadd.f32 0.0, %v1118
        %v1120 = vpop.f32.mrf.mxu0
        %v1121 = vadd.f32 0.0, %v1120
        %1122 = vmatmul.bf16.gmra.mxu0 %v844
        %v1123 = vpop.f32.mrf.mxu0
        %v1124 = vadd.f32 0.0, %v1123
        %v1125 = vpop.f32.mrf.mxu0
        %v1126 = vadd.f32 0.0, %v1125
        %1127 = vdwg.mxu0
        %1128 = vmatpush.bf16.msra.mxu0 %v1006
        %1129 = vmatpush.bf16.msra.mxu0 %v1005
        %1130 = vmatpush.bf16.msra.mxu0 %v1004
        %1131 = vmatpush.bf16.msra.mxu0 %v1003
        %1132 = vmatpush.bf16.msra.mxu0 %v1002
        %1133 = vmatpush.bf16.msra.mxu0 %v1001
        %1134 = vmatpush.bf16.msra.mxu0 %v1000
        %1135 = vmatpush.bf16.msra.mxu0 %v999
        %1136 = vmatmul.bf16.gmra.mxu0 %v800
        %v1137 = vpop.f32.mrf.mxu0
        %v1138 = vadd.f32 %v1049, %v1137
        %v1139 = vpop.f32.mrf.mxu0
        %v1140 = vadd.f32 %v1051, %v1139
        %1141 = vmatmul.bf16.gmra.mxu0 %v803
        %v1142 = vpop.f32.mrf.mxu0
        %v1143 = vadd.f32 %v1054, %v1142
        %v1144 = vpop.f32.mrf.mxu0
        %v1145 = vadd.f32 %v1056, %v1144
        %1146 = vmatmul.bf16.gmra.mxu0 %v806
        %v1147 = vpop.f32.mrf.mxu0
        %v1148 = vadd.f32 %v1059, %v1147
        %v1149 = vpop.f32.mrf.mxu0
        %v1150 = vadd.f32 %v1061, %v1149
        %1151 = vmatmul.bf16.gmra.mxu0 %v809
        %v1152 = vpop.f32.mrf.mxu0
        %v1153 = vadd.f32 %v1064, %v1152
        %v1154 = vpop.f32.mrf.mxu0
        %v1155 = vadd.f32 %v1066, %v1154
        %1156 = vmatmul.bf16.gmra.mxu0 %v812
        %v1157 = vpop.f32.mrf.mxu0
        %v1158 = vadd.f32 %v1069, %v1157
        %v1159 = vpop.f32.mrf.mxu0
        %v1160 = vadd.f32 %v1071, %v1159
        %1161 = vmatmul.bf16.gmra.mxu0 %v815
        %v1162 = vpop.f32.mrf.mxu0
        %v1163 = vadd.f32 %v1074, %v1162
        %v1164 = vpop.f32.mrf.mxu0
        %v1165 = vadd.f32 %v1076, %v1164
        %1166 = vmatmul.bf16.gmra.mxu0 %v818
        %v1167 = vpop.f32.mrf.mxu0
        %v1168 = vadd.f32 %v1079, %v1167
        %v1169 = vpop.f32.mrf.mxu0
        %v1170 = vadd.f32 %v1081, %v1169
        %1171 = vmatmul.bf16.gmra.mxu0 %v821
        %v1172 = vpop.f32.mrf.mxu0
        %v1173 = vadd.f32 %v1084, %v1172
        %v1174 = vpop.f32.mrf.mxu0
        %v1175 = vadd.f32 %v1086, %v1174
        %1176 = vmatmul.bf16.gmra.mxu0 %v824
        %v1177 = vpop.f32.mrf.mxu0
        %v1178 = vadd.f32 %v1089, %v1177
        %v1179 = vpop.f32.mrf.mxu0
        %v1180 = vadd.f32 %v1091, %v1179
        %1181 = vmatmul.bf16.gmra.mxu0 %v827
        %v1182 = vpop.f32.mrf.mxu0
        %v1183 = vadd.f32 %v1094, %v1182
        %v1184 = vpop.f32.mrf.mxu0
        %v1185 = vadd.f32 %v1096, %v1184
        %1186 = vmatmul.bf16.gmra.mxu0 %v830
        %v1187 = vpop.f32.mrf.mxu0
        %v1188 = vadd.f32 %v1099, %v1187
        %v1189 = vpop.f32.mrf.mxu0
        %v1190 = vadd.f32 %v1101, %v1189
        %1191 = vmatmul.bf16.gmra.mxu0 %v833
        %v1192 = vpop.f32.mrf.mxu0
        %v1193 = vadd.f32 %v1104, %v1192
        %v1194 = vpop.f32.mrf.mxu0
        %v1195 = vadd.f32 %v1106, %v1194
        %1196 = vmatmul.bf16.gmra.mxu0 %v836
        %v1197 = vpop.f32.mrf.mxu0
        %v1198 = vadd.f32 %v1109, %v1197
        %v1199 = vpop.f32.mrf.mxu0
        %v1200 = vadd.f32 %v1111, %v1199
        %1201 = vmatmul.bf16.gmra.mxu0 %v839
        %v1202 = vpop.f32.mrf.mxu0
        %v1203 = vadd.f32 %v1114, %v1202
        %v1204 = vpop.f32.mrf.mxu0
        %v1205 = vadd.f32 %v1116, %v1204
        %1206 = vmatmul.bf16.gmra.mxu0 %v842
        %v1207 = vpop.f32.mrf.mxu0
        %v1208 = vadd.f32 %v1119, %v1207
        %v1209 = vpop.f32.mrf.mxu0
        %v1210 = vadd.f32 %v1121, %v1209
        %1211 = vmatmul.bf16.gmra.mxu0 %v845
        %v1212 = vpop.f32.mrf.mxu0
        %v1213 = vadd.f32 %v1124, %v1212
        %v1214 = vpop.f32.mrf.mxu0
        %v1215 = vadd.f32 %v1126, %v1214
        %1216 = vdwg.mxu0
        %1217 = vmatpush.bf16.msra.mxu0 %v1014
        %1218 = vmatpush.bf16.msra.mxu0 %v1013
        %1219 = vmatpush.bf16.msra.mxu0 %v1012
        %1220 = vmatpush.bf16.msra.mxu0 %v1011
        %1221 = vmatpush.bf16.msra.mxu0 %v1010
        %1222 = vmatpush.bf16.msra.mxu0 %v1009
        %1223 = vmatpush.bf16.msra.mxu0 %v1008
        %1224 = vmatpush.bf16.msra.mxu0 %v1007
        %1225 = vmatmul.bf16.gmra.mxu0 %v801
        %v1226 = vpop.f32.mrf.mxu0
        %v1227 = vadd.f32 %v1138, %v1226
        %v1228 = vpop.f32.mrf.mxu0
        %v1229 = vadd.f32 %v1140, %v1228
        %1230 = vmatmul.bf16.gmra.mxu0 %v804
        %v1231 = vpop.f32.mrf.mxu0
        %v1232 = vadd.f32 %v1143, %v1231
        %v1233 = vpop.f32.mrf.mxu0
        %v1234 = vadd.f32 %v1145, %v1233
        %1235 = vmatmul.bf16.gmra.mxu0 %v807
        %v1236 = vpop.f32.mrf.mxu0
        %v1237 = vadd.f32 %v1148, %v1236
        %v1238 = vpop.f32.mrf.mxu0
        %v1239 = vadd.f32 %v1150, %v1238
        %1240 = vmatmul.bf16.gmra.mxu0 %v810
        %v1241 = vpop.f32.mrf.mxu0
        %v1242 = vadd.f32 %v1153, %v1241
        %v1243 = vpop.f32.mrf.mxu0
        %v1244 = vadd.f32 %v1155, %v1243
        %1245 = vmatmul.bf16.gmra.mxu0 %v813
        %v1246 = vpop.f32.mrf.mxu0
        %v1247 = vadd.f32 %v1158, %v1246
        %v1248 = vpop.f32.mrf.mxu0
        %v1249 = vadd.f32 %v1160, %v1248
        %1250 = vmatmul.bf16.gmra.mxu0 %v816
        %v1251 = vpop.f32.mrf.mxu0
        %v1252 = vadd.f32 %v1163, %v1251
        %v1253 = vpop.f32.mrf.mxu0
        %v1254 = vadd.f32 %v1165, %v1253
        %1255 = vmatmul.bf16.gmra.mxu0 %v819
        %v1256 = vpop.f32.mrf.mxu0
        %v1257 = vadd.f32 %v1168, %v1256
        %v1258 = vpop.f32.mrf.mxu0
        %v1259 = vadd.f32 %v1170, %v1258
        %1260 = vmatmul.bf16.gmra.mxu0 %v822
        %v1261 = vpop.f32.mrf.mxu0
        %v1262 = vadd.f32 %v1173, %v1261
        %v1263 = vpop.f32.mrf.mxu0
        %v1264 = vadd.f32 %v1175, %v1263
        %1265 = vmatmul.bf16.gmra.mxu0 %v825
        %v1266 = vpop.f32.mrf.mxu0
        %v1267 = vadd.f32 %v1178, %v1266
        %v1268 = vpop.f32.mrf.mxu0
        %v1269 = vadd.f32 %v1180, %v1268
        %1270 = vmatmul.bf16.gmra.mxu0 %v828
        %v1271 = vpop.f32.mrf.mxu0
        %v1272 = vadd.f32 %v1183, %v1271
        %v1273 = vpop.f32.mrf.mxu0
        %v1274 = vadd.f32 %v1185, %v1273
        %1275 = vmatmul.bf16.gmra.mxu0 %v831
        %v1276 = vpop.f32.mrf.mxu0
        %v1277 = vadd.f32 %v1188, %v1276
        %v1278 = vpop.f32.mrf.mxu0
        %v1279 = vadd.f32 %v1190, %v1278
        %1280 = vmatmul.bf16.gmra.mxu0 %v834
        %v1281 = vpop.f32.mrf.mxu0
        %v1282 = vadd.f32 %v1193, %v1281
        %v1283 = vpop.f32.mrf.mxu0
        %v1284 = vadd.f32 %v1195, %v1283
        %1285 = vmatmul.bf16.gmra.mxu0 %v837
        %v1286 = vpop.f32.mrf.mxu0
        %v1287 = vadd.f32 %v1198, %v1286
        %v1288 = vpop.f32.mrf.mxu0
        %v1289 = vadd.f32 %v1200, %v1288
        %1290 = vmatmul.bf16.gmra.mxu0 %v840
        %v1291 = vpop.f32.mrf.mxu0
        %v1292 = vadd.f32 %v1203, %v1291
        %v1293 = vpop.f32.mrf.mxu0
        %v1294 = vadd.f32 %v1205, %v1293
        %1295 = vmatmul.bf16.gmra.mxu0 %v843
        %v1296 = vpop.f32.mrf.mxu0
        %v1297 = vadd.f32 %v1208, %v1296
        %v1298 = vpop.f32.mrf.mxu0
        %v1299 = vadd.f32 %v1210, %v1298
        %1300 = vmatmul.bf16.gmra.mxu0 %v846
        %v1301 = vpop.f32.mrf.mxu0
        %v1302 = vadd.f32 %v1213, %v1301
        %v1303 = vpop.f32.mrf.mxu0
        %v1304 = vadd.f32 %v1215, %v1303
        %1305 = vdwg.mxu0
        %v1306 = vadd.f32 %v495, %v1227
        %v1307 = vadd.f32 %v496, %v1229
        %v1308 = vadd.f32 %v497, %v1232
        %v1309 = vadd.f32 %v498, %v1234
        %v1310 = vadd.f32 %v499, %v1237
        %v1311 = vadd.f32 %v500, %v1239
        %v1312 = vadd.f32 %v501, %v1242
        %v1313 = vadd.f32 %v502, %v1244
        %v1314 = vadd.f32 %v503, %v1247
        %v1315 = vadd.f32 %v504, %v1249
        %v1316 = vadd.f32 %v505, %v1252
        %v1317 = vadd.f32 %v506, %v1254
        %v1318 = vadd.f32 %v507, %v1257
        %v1319 = vadd.f32 %v508, %v1259
        %v1320 = vadd.f32 %v509, %v1262
        %v1321 = vadd.f32 %v510, %v1264
        %v1322 = vadd.f32 %v511, %v1267
        %v1323 = vadd.f32 %v512, %v1269
        %v1324 = vadd.f32 %v513, %v1272
        %v1325 = vadd.f32 %v514, %v1274
        %v1326 = vadd.f32 %v515, %v1277
        %v1327 = vadd.f32 %v516, %v1279
        %v1328 = vadd.f32 %v517, %v1282
        %v1329 = vadd.f32 %v518, %v1284
        %v1330 = vadd.f32 %v519, %v1287
        %v1331 = vadd.f32 %v520, %v1289
        %v1332 = vadd.f32 %v521, %v1292
        %v1333 = vadd.f32 %v522, %v1294
        %v1334 = vadd.f32 %v523, %v1297
        %v1335 = vadd.f32 %v524, %v1299
        %v1336 = vadd.f32 %v525, %v1302
        %v1337 = vadd.f32 %v526, %v1304
        %1338 = vst [vmem:[#allocation2] sm:$0xff] %v1306
        %1339 = vst [vmem:[#allocation2 + $0x8] sm:$0xff] %v1307
        %1340 = vst [vmem:[#allocation2 + $0x10] sm:$0xff] %v1308
        %1341 = vst [vmem:[#allocation2 + $0x18] sm:$0xff] %v1309
        %1342 = vst [vmem:[#allocation2 + $0x20] sm:$0xff] %v1310
        %1343 = vst [vmem:[#allocation2 + $0x28] sm:$0xff] %v1311
        %1344 = vst [vmem:[#allocation2 + $0x30] sm:$0xff] %v1312
        %1345 = vst [vmem:[#allocation2 + $0x38] sm:$0xff] %v1313
        %1346 = vst [vmem:[#allocation2 + $0x40] sm:$0xff] %v1314
        %1347 = vst [vmem:[#allocation2 + $0x48] sm:$0xff] %v1315
        %1348 = vst [vmem:[#allocation2 + $0x50] sm:$0xff] %v1316
        %1349 = vst [vmem:[#allocation2 + $0x58] sm:$0xff] %v1317
        %1350 = vst [vmem:[#allocation2 + $0x60] sm:$0xff] %v1318
        %1351 = vst [vmem:[#allocation2 + $0x68] sm:$0xff] %v1319
        %1352 = vst [vmem:[#allocation2 + $0x70] sm:$0xff] %v1320
        %1353 = vst [vmem:[#allocation2 + $0x78] sm:$0xff] %v1321
        %1354 = vst [vmem:[#allocation2 + $0x80] sm:$0xff] %v1322
        %1355 = vst [vmem:[#allocation2 + $0x88] sm:$0xff] %v1323
        %1356 = vst [vmem:[#allocation2 + $0x90] sm:$0xff] %v1324
        %1357 = vst [vmem:[#allocation2 + $0x98] sm:$0xff] %v1325
        %1358 = vst [vmem:[#allocation2 + $0xa0] sm:$0xff] %v1326
        %1359 = vst [vmem:[#allocation2 + $0xa8] sm:$0xff] %v1327
        %1360 = vst [vmem:[#allocation2 + $0xb0] sm:$0xff] %v1328
        %1361 = vst [vmem:[#allocation2 + $0xb8] sm:$0xff] %v1329
        %1362 = vst [vmem:[#allocation2 + $0xc0] sm:$0xff] %v1330
        %1363 = vst [vmem:[#allocation2 + $0xc8] sm:$0xff] %v1331
        %1364 = vst [vmem:[#allocation2 + $0xd0] sm:$0xff] %v1332
        %1365 = vst [vmem:[#allocation2 + $0xd8] sm:$0xff] %v1333
        %1366 = vst [vmem:[#allocation2 + $0xe0] sm:$0xff] %v1334
        %1367 = vst [vmem:[#allocation2 + $0xe8] sm:$0xff] %v1335
        %1368 = vst [vmem:[#allocation2 + $0xf0] sm:$0xff] %v1336
        %1369 = vst [vmem:[#allocation2 + $0xf8] sm:$0xff] %v1337
        %p1370 = scmp.eq.s32.totalorder %s23, 2
        // Predicated region
        $region59: #{residual_block_forward.5} parent=49 // pred_check
          %p1371 = pneg %p1370
        $region60: #{residual_block_forward.5} parent=49 // pred_check_branch
          %1373 = sbr.rel (%p1371) target = $region62
        $region61: #{residual_block_forward.5} parent=49 // pred_region
          %v1374 = vld [vmem:[#allocation2] sm:$0xff]
          %v1375 = vld [vmem:[#allocation2 + $0x8] sm:$0xff]
          %v1376 = vld [vmem:[#allocation2 + $0x10] sm:$0xff]
          %v1377 = vld [vmem:[#allocation2 + $0x18] sm:$0xff]
          %v1378 = vld [vmem:[#allocation2 + $0x20] sm:$0xff]
          %v1379 = vld [vmem:[#allocation2 + $0x28] sm:$0xff]
          %v1380 = vld [vmem:[#allocation2 + $0x30] sm:$0xff]
          %v1381 = vld [vmem:[#allocation2 + $0x38] sm:$0xff]
          %v1382 = vld [vmem:[#allocation2 + $0x40] sm:$0xff]
          %v1383 = vld [vmem:[#allocation2 + $0x48] sm:$0xff]
          %v1384 = vld [vmem:[#allocation2 + $0x50] sm:$0xff]
          %v1385 = vld [vmem:[#allocation2 + $0x58] sm:$0xff]
          %v1386 = vld [vmem:[#allocation2 + $0x60] sm:$0xff]
          %v1387 = vld [vmem:[#allocation2 + $0x68] sm:$0xff]
          %v1388 = vld [vmem:[#allocation2 + $0x70] sm:$0xff]
          %v1389 = vld [vmem:[#allocation2 + $0x78] sm:$0xff]
          %v1390 = vld [vmem:[#allocation2 + $0x80] sm:$0xff]
          %v1391 = vld [vmem:[#allocation2 + $0x88] sm:$0xff]
          %v1392 = vld [vmem:[#allocation2 + $0x90] sm:$0xff]
          %v1393 = vld [vmem:[#allocation2 + $0x98] sm:$0xff]
          %v1394 = vld [vmem:[#allocation2 + $0xa0] sm:$0xff]
          %v1395 = vld [vmem:[#allocation2 + $0xa8] sm:$0xff]
          %v1396 = vld [vmem:[#allocation2 + $0xb0] sm:$0xff]
          %v1397 = vld [vmem:[#allocation2 + $0xb8] sm:$0xff]
          %v1398 = vld [vmem:[#allocation2 + $0xc0] sm:$0xff]
          %v1399 = vld [vmem:[#allocation2 + $0xc8] sm:$0xff]
          %v1400 = vld [vmem:[#allocation2 + $0xd0] sm:$0xff]
          %v1401 = vld [vmem:[#allocation2 + $0xd8] sm:$0xff]
          %v1402 = vld [vmem:[#allocation2 + $0xe0] sm:$0xff]
          %v1403 = vld [vmem:[#allocation2 + $0xe8] sm:$0xff]
          %v1404 = vld [vmem:[#allocation2 + $0xf0] sm:$0xff]
          %v1405 = vld [vmem:[#allocation2 + $0xf8] sm:$0xff]
          %1406 = vst [vmem:[%s443] sm:$0xff] %v1374
          %1407 = vst [vmem:[%s443 + $0x8] sm:$0xff] %v1375
          %1408 = vst [vmem:[%s443 + $0x10] sm:$0xff] %v1376
          %1409 = vst [vmem:[%s443 + $0x18] sm:$0xff] %v1377
          %1410 = vst [vmem:[%s443 + $0x20] sm:$0xff] %v1378
          %1411 = vst [vmem:[%s443 + $0x28] sm:$0xff] %v1379
          %1412 = vst [vmem:[%s443 + $0x30] sm:$0xff] %v1380
          %1413 = vst [vmem:[%s443 + $0x38] sm:$0xff] %v1381
          %1414 = vst [vmem:[%s443 + $0x40] sm:$0xff] %v1382
          %1415 = vst [vmem:[%s443 + $0x48] sm:$0xff] %v1383
          %1416 = vst [vmem:[%s443 + $0x50] sm:$0xff] %v1384
          %1417 = vst [vmem:[%s443 + $0x58] sm:$0xff] %v1385
          %1418 = vst [vmem:[%s443 + $0x60] sm:$0xff] %v1386
          %1419 = vst [vmem:[%s443 + $0x68] sm:$0xff] %v1387
          %1420 = vst [vmem:[%s443 + $0x70] sm:$0xff] %v1388
          %1421 = vst [vmem:[%s443 + $0x78] sm:$0xff] %v1389
          %1422 = vst [vmem:[%s443 + $0x80] sm:$0xff] %v1390
          %1423 = vst [vmem:[%s443 + $0x88] sm:$0xff] %v1391
          %1424 = vst [vmem:[%s443 + $0x90] sm:$0xff] %v1392
          %1425 = vst [vmem:[%s443 + $0x98] sm:$0xff] %v1393
          %1426 = vst [vmem:[%s443 + $0xa0] sm:$0xff] %v1394
          %1427 = vst [vmem:[%s443 + $0xa8] sm:$0xff] %v1395
          %1428 = vst [vmem:[%s443 + $0xb0] sm:$0xff] %v1396
          %1429 = vst [vmem:[%s443 + $0xb8] sm:$0xff] %v1397
          %1430 = vst [vmem:[%s443 + $0xc0] sm:$0xff] %v1398
          %1431 = vst [vmem:[%s443 + $0xc8] sm:$0xff] %v1399
          %1432 = vst [vmem:[%s443 + $0xd0] sm:$0xff] %v1400
          %1433 = vst [vmem:[%s443 + $0xd8] sm:$0xff] %v1401
          %1434 = vst [vmem:[%s443 + $0xe0] sm:$0xff] %v1402
          %1435 = vst [vmem:[%s443 + $0xe8] sm:$0xff] %v1403
          %1436 = vst [vmem:[%s443 + $0xf0] sm:$0xff] %v1404
          %1437 = vst [vmem:[%s443 + $0xf8] sm:$0xff] %v1405
          %v1438 = vadd.f32 %v1374, %v1375
          %v1439 = vadd.f32 %v1438, %v1376
          %v1440 = vadd.f32 %v1439, %v1377
          %v1441 = vadd.f32 %v1440, %v1378
          %v1442 = vadd.f32 %v1441, %v1379
          %v1443 = vadd.f32 %v1442, %v1380
          %v1444 = vadd.f32 %v1443, %v1381
          %v1445 = vadd.f32 %v1444, %v1382
          %v1446 = vadd.f32 %v1445, %v1383
          %v1447 = vadd.f32 %v1446, %v1384
          %v1448 = vadd.f32 %v1447, %v1385
          %v1449 = vadd.f32 %v1448, %v1386
          %v1450 = vadd.f32 %v1449, %v1387
          %v1451 = vadd.f32 %v1450, %v1388
          %v1452 = vadd.f32 %v1451, %v1389
          %v1453 = vadd.f32 %v1452, %v1390
          %v1454 = vadd.f32 %v1453, %v1391
          %v1455 = vadd.f32 %v1454, %v1392
          %v1456 = vadd.f32 %v1455, %v1393
          %v1457 = vadd.f32 %v1456, %v1394
          %v1458 = vadd.f32 %v1457, %v1395
          %v1459 = vadd.f32 %v1458, %v1396
          %v1460 = vadd.f32 %v1459, %v1397
          %v1461 = vadd.f32 %v1460, %v1398
          %v1462 = vadd.f32 %v1461, %v1399
          %v1463 = vadd.f32 %v1462, %v1400
          %v1464 = vadd.f32 %v1463, %v1401
          %v1465 = vadd.f32 %v1464, %v1402
          %v1466 = vadd.f32 %v1465, %v1403
          %v1467 = vadd.f32 %v1466, %v1404
          %v1468 = vadd.f32 %v1467, %v1405
          %v1469 = vrot.slane %v1468, 4
          %v1470 = vadd.f32 %v1468, %v1469
          %v1471 = vrot.slane %v1470, 2
          %v1472 = vadd.f32 %v1470, %v1471
          %v1473 = vrot.slane %v1472, 1
          %v1474 = vadd.f32 %v1472, %v1473
          %v1475 = vmul.f32 %v1374, %v1374
          %v1476 = vmul.f32 %v1375, %v1375
          %v1477 = vmul.f32 %v1376, %v1376
          %v1478 = vmul.f32 %v1377, %v1377
          %v1479 = vmul.f32 %v1378, %v1378
          %v1480 = vmul.f32 %v1379, %v1379
          %v1481 = vmul.f32 %v1380, %v1380
          %v1482 = vmul.f32 %v1381, %v1381
          %v1483 = vmul.f32 %v1382, %v1382
          %v1484 = vmul.f32 %v1383, %v1383
          %v1485 = vmul.f32 %v1384, %v1384
          %v1486 = vmul.f32 %v1385, %v1385
          %v1487 = vmul.f32 %v1386, %v1386
          %v1488 = vmul.f32 %v1387, %v1387
          %v1489 = vmul.f32 %v1388, %v1388
          %v1490 = vmul.f32 %v1389, %v1389
          %v1491 = vmul.f32 %v1390, %v1390
          %v1492 = vmul.f32 %v1391, %v1391
          %v1493 = vmul.f32 %v1392, %v1392
          %v1494 = vmul.f32 %v1393, %v1393
          %v1495 = vmul.f32 %v1394, %v1394
          %v1496 = vmul.f32 %v1395, %v1395
          %v1497 = vmul.f32 %v1396, %v1396
          %v1498 = vmul.f32 %v1397, %v1397
          %v1499 = vmul.f32 %v1398, %v1398
          %v1500 = vmul.f32 %v1399, %v1399
          %v1501 = vmul.f32 %v1400, %v1400
          %v1502 = vmul.f32 %v1401, %v1401
          %v1503 = vmul.f32 %v1402, %v1402
          %v1504 = vmul.f32 %v1403, %v1403
          %v1505 = vmul.f32 %v1404, %v1404
          %v1506 = vmul.f32 %v1405, %v1405
          %v1507 = vadd.f32 %v1475, %v1476
          %v1508 = vadd.f32 %v1507, %v1477
          %v1509 = vadd.f32 %v1508, %v1478
          %v1510 = vadd.f32 %v1509, %v1479
          %v1511 = vadd.f32 %v1510, %v1480
          %v1512 = vadd.f32 %v1511, %v1481
          %v1513 = vadd.f32 %v1512, %v1482
          %v1514 = vadd.f32 %v1513, %v1483
          %v1515 = vadd.f32 %v1514, %v1484
          %v1516 = vadd.f32 %v1515, %v1485
          %v1517 = vadd.f32 %v1516, %v1486
          %v1518 = vadd.f32 %v1517, %v1487
          %v1519 = vadd.f32 %v1518, %v1488
          %v1520 = vadd.f32 %v1519, %v1489
          %v1521 = vadd.f32 %v1520, %v1490
          %v1522 = vadd.f32 %v1521, %v1491
          %v1523 = vadd.f32 %v1522, %v1492
          %v1524 = vadd.f32 %v1523, %v1493
          %v1525 = vadd.f32 %v1524, %v1494
          %v1526 = vadd.f32 %v1525, %v1495
          %v1527 = vadd.f32 %v1526, %v1496
          %v1528 = vadd.f32 %v1527, %v1497
          %v1529 = vadd.f32 %v1528, %v1498
          %v1530 = vadd.f32 %v1529, %v1499
          %v1531 = vadd.f32 %v1530, %v1500
          %v1532 = vadd.f32 %v1531, %v1501
          %v1533 = vadd.f32 %v1532, %v1502
          %v1534 = vadd.f32 %v1533, %v1503
          %v1535 = vadd.f32 %v1534, %v1504
          %v1536 = vadd.f32 %v1535, %v1505
          %v1537 = vadd.f32 %v1536, %v1506
          %v1538 = vrot.slane %v1537, 4
          %v1539 = vadd.f32 %v1537, %v1538
          %v1540 = vrot.slane %v1539, 2
          %v1541 = vadd.f32 %v1539, %v1540
          %v1542 = vrot.slane %v1541, 1
          %v1543 = vadd.f32 %v1541, %v1542
          %1544 = vst [vmem:[%s451] sm:$0xff] %v1474
          %1545 = vst [vmem:[%s458] sm:$0xff] %v1543
        $region62: #{residual_block_forward.5} parent=49 // pred_fallthru
          _
        %s1546 = smul.u32 32, %s21
        %p1547 = scmp.lt.s32.totalorder %s1546, 63
        %s1548 = scalar_select %p1547, %s1546, 63
        %p1549 = scmp.lt.s32.totalorder %s22, 0
        %s1550 = scalar_select %p1549, %s22, 0
        %s1551 = sadd.s32 %s1550, %s1548
        %s1552 = smul.addr %s1551, 8
        %s1553 = scalar_lea.vmem %s2, %s1552
        %p1554 = scmp.lt.s32.totalorder %s21, 1
        %s1555 = scalar_select %p1554, %s21, 1
        %p1556 = scmp.lt.s32.totalorder %s22, 0
        %s1557 = scalar_select %p1556, %s22, 0
        %s1558 = sadd.s32 %s1557, %s1555
        %s1559 = smul.addr %s1558, 8
        %s1560 = scalar_lea.vmem %s3, %s1559
        %p1561 = scmp.lt.s32.totalorder %s21, 1
        %s1562 = scalar_select %p1561, %s21, 1
        %p1563 = scmp.lt.s32.totalorder %s22, 0
        %s1564 = scalar_select %p1563, %s22, 0
        %s1565 = sadd.s32 %s1564, %s1562
        %s1566 = smul.addr %s1565, 8
        %s1567 = scalar_lea.vmem %s4, %s1566
        // Predicated region
        $region63: #{residual_block_forward.5} parent=49 // pred_check
          %p1568 = pneg %p111
        $region64: #{residual_block_forward.5} parent=49 // pred_check_branch
          %1570 = sbr.rel (%p1568) target = $region66
        $region65: #{residual_block_forward.5} parent=49 // pred_region
          %s1571 = smul.u32 32, %s21
        $region66: #{residual_block_forward.5} parent=49 // pred_fallthru
          _
        // Predicated region
        $region67: #{residual_block_forward.5} parent=49 // pred_check
          %p1572 = pneg %p139
        $region68: #{residual_block_forward.5} parent=49 // pred_check_branch
          %1574 = sbr.rel (%p1572) target = $region70
        $region69: #{residual_block_forward.5} parent=49 // pred_region
          _
        $region70: #{residual_block_forward.5} parent=49 // pred_fallthru
          _
        // Predicated region
        $region71: #{residual_block_forward.5} parent=49 // pred_check
          %p1575 = pneg %p167
        $region72: #{residual_block_forward.5} parent=49 // pred_check_branch
          %1577 = sbr.rel (%p1575) target = $region74
        $region73: #{residual_block_forward.5} parent=49 // pred_region
          _
        $region74: #{residual_block_forward.5} parent=49 // pred_fallthru
          _
      $region50: #{residual_block_forward.5} parent=5 // pred_fallthru
        _
      %p1578 = scmp.le.s32.totalorder 2, %s11
      // Predicated region
      $region75: #{residual_block_forward.5} parent=5 // pred_check
        %p1579 = pneg %p1578
      $region76: #{residual_block_forward.5} parent=5 // pred_check_branch
        %1581 = sbr.rel (%p1579) target = $region78
      $region77: #{residual_block_forward.5} parent=5 // pred_region
        %s1582 = ssub.s32 %s11, 2
        // Predicated region
        $region79: #{residual_block_forward.5} parent=77 // pred_check
          %p1583 = pneg %p117
        $region80: #{residual_block_forward.5} parent=77 // pred_check_branch
          %1585 = sbr.rel (%p1583) target = $region82
        $region81: #{residual_block_forward.5} parent=77 // pred_region
          %s1586 = smul.u32 32, %s24
          %p1587 = scmp.lt.s32.totalorder %s1586, 63
          %s1588 = scalar_select %p1587, %s1586, 63
          %p1589 = scmp.lt.s32.totalorder %s25, 0
          %s1590 = scalar_select %p1589, %s25, 0
          %s1591 = sadd.s32 %s1590, %s1588
          %s1592 = smul.addr %s1591, 8
          %s1593 = scalar_lea.vmem %s2, %s1592
        $region82: #{residual_block_forward.5} parent=77 // pred_fallthru
          _
        // Predicated region
        $region83: #{residual_block_forward.5} parent=77 // pred_check
          %p1594 = pneg %p145
        $region84: #{residual_block_forward.5} parent=77 // pred_check_branch
          %1596 = sbr.rel (%p1594) target = $region86
        $region85: #{residual_block_forward.5} parent=77 // pred_region
          %p1597 = scmp.lt.s32.totalorder %s24, 1
          %s1598 = scalar_select %p1597, %s24, 1
          %p1599 = scmp.lt.s32.totalorder %s25, 0
          %s1600 = scalar_select %p1599, %s25, 0
          %s1601 = sadd.s32 %s1600, %s1598
          %s1602 = smul.addr %s1601, 8
          %s1603 = scalar_lea.vmem %s3, %s1602
        $region86: #{residual_block_forward.5} parent=77 // pred_fallthru
          _
        // Predicated region
        $region87: #{residual_block_forward.5} parent=77 // pred_check
          %p1604 = pneg %p173
        $region88: #{residual_block_forward.5} parent=77 // pred_check_branch
          %1606 = sbr.rel (%p1604) target = $region90
        $region89: #{residual_block_forward.5} parent=77 // pred_region
          %p1607 = scmp.lt.s32.totalorder %s24, 1
          %s1608 = scalar_select %p1607, %s24, 1
          %p1609 = scmp.lt.s32.totalorder %s25, 0
          %s1610 = scalar_select %p1609, %s25, 0
          %s1611 = sadd.s32 %s1610, %s1608
          %s1612 = smul.addr %s1611, 8
          %s1613 = scalar_lea.vmem %s4, %s1612
        $region90: #{residual_block_forward.5} parent=77 // pred_fallthru
          _
      $region78: #{residual_block_forward.5} parent=5 // pred_fallthru
        _
    $region6: #{residual_block_forward.5} parent=1 // loop_footer
      %s15 = sadd.s32 1, %s11
    $region7: #{residual_block_forward.5} parent=1 // loop_footer_branch
      %10 = sbr.rel target = $region3
    $region8: #{residual_block_forward.5} parent=1 // loop_exit
      _

// kernel: residual_block_forward.7
$region0: #{residual_block_forward.7}
  #allocation0 [shape = 'u32[]', space=smem, size = 0x4, offset = 0x4, fixed_abs, tag = 'smem constant byte address 0x4 - core index']
  #allocation1 [shape = 'u32[72,128]{1,0:T(1,128)}', space=vmem, size = 0x9000, scoped, tag = 'internal scratch']
  %s0 = inlined_call_operand.vmem [shape: f32[512,128], index: 0, kind: input, shape index: {}]
  %s1 = inlined_call_operand.vmem [shape: f32[512,128], index: 1, kind: input, shape index: {}]
  %s2 = inlined_call_operand.vmem [shape: f32[1,128], index: 2, kind: input, shape index: {}]
  %s3 = inlined_call_operand.vmem [shape: f32[1,128], index: 3, kind: input, shape index: {}]
  %s4 = inlined_call_operand.vmem [shape: f32[1,128], index: 4, kind: input, shape index: {}]
  %s5 = inlined_call_operand.vmem [shape: f32[1,128], index: 5, kind: input, shape index: {}]
  %s6 = inlined_call_operand.vmem [shape: f32[512,128], index: 6, kind: output, shape index: {}]
  %s7 = sld [smem:[#allocation0]]
  $region34: #{residual_block_forward.7} parent=0
    _
  %s9 = ssub.s32 1, %s7
  %s10 = scalar_select 0, %s9, %s7
  // Predicated region
  $region2: #{residual_block_forward.7} parent=0 // pred_check
    _
  $region3: #{residual_block_forward.7} parent=0 // pred_check_branch
    %12 = sbr.rel (0) target = $region5
  $region4: #{residual_block_forward.7} parent=0 // pred_region
    _
  $region5: #{residual_block_forward.7} parent=0 // pred_fallthru
    _
  // Predicated region
  $region6: #{residual_block_forward.7} parent=0 // pred_check
    _
  $region7: #{residual_block_forward.7} parent=0 // pred_check_branch
    %14 = sbr.rel (0) target = $region9
  $region8: #{residual_block_forward.7} parent=0 // pred_region
    _
  $region9: #{residual_block_forward.7} parent=0 // pred_fallthru
    _
  // Predicated region
  $region10: #{residual_block_forward.7} parent=0 // pred_check
    _
  $region11: #{residual_block_forward.7} parent=0 // pred_check_branch
    %16 = sbr.rel (0) target = $region13
  $region12: #{residual_block_forward.7} parent=0 // pred_region
    _
  $region13: #{residual_block_forward.7} parent=0 // pred_fallthru
    _
  // Predicated region
  $region14: #{residual_block_forward.7} parent=0 // pred_check
    _
  $region15: #{residual_block_forward.7} parent=0 // pred_check_branch
    %18 = sbr.rel (0) target = $region17
  $region16: #{residual_block_forward.7} parent=0 // pred_region
    _
  $region17: #{residual_block_forward.7} parent=0 // pred_fallthru
    _
  // Predicated region
  $region18: #{residual_block_forward.7} parent=0 // pred_check
    _
  $region19: #{residual_block_forward.7} parent=0 // pred_check_branch
    %20 = sbr.rel (0) target = $region21
  $region20: #{residual_block_forward.7} parent=0 // pred_region
    _
  $region21: #{residual_block_forward.7} parent=0 // pred_fallthru
    _
  // Predicated region
  $region22: #{residual_block_forward.7} parent=0 // pred_check
    _
  $region23: #{residual_block_forward.7} parent=0 // pred_check_branch
    %22 = sbr.rel (0) target = $region25
  $region24: #{residual_block_forward.7} parent=0 // pred_region
    _
  $region25: #{residual_block_forward.7} parent=0 // pred_fallthru
    _
  %v23 = vld [vmem:[%s0] sm:$0xff]
  %v24 = vld [vmem:[%s0 + $0x8] sm:$0xff]
  %v25 = vld [vmem:[%s0 + $0x10] sm:$0xff]
  %v26 = vld [vmem:[%s0 + $0x18] sm:$0xff]
  %v27 = vld [vmem:[%s0 + $0x20] sm:$0xff]
  %v28 = vld [vmem:[%s0 + $0x28] sm:$0xff]
  %v29 = vld [vmem:[%s0 + $0x30] sm:$0xff]
  %v30 = vld [vmem:[%s0 + $0x38] sm:$0xff]
  %v31 = vld [vmem:[%s0 + $0x40] sm:$0xff]
  %v32 = vld [vmem:[%s0 + $0x48] sm:$0xff]
  %v33 = vld [vmem:[%s0 + $0x50] sm:$0xff]
  %v34 = vld [vmem:[%s0 + $0x58] sm:$0xff]
  %v35 = vld [vmem:[%s0 + $0x60] sm:$0xff]
  %v36 = vld [vmem:[%s0 + $0x68] sm:$0xff]
  %v37 = vld [vmem:[%s0 + $0x70] sm:$0xff]
  %v38 = vld [vmem:[%s0 + $0x78] sm:$0xff]
  %v39 = vld [vmem:[%s0 + $0x80] sm:$0xff]
  %v40 = vld [vmem:[%s0 + $0x88] sm:$0xff]
  %v41 = vld [vmem:[%s0 + $0x90] sm:$0xff]
  %v42 = vld [vmem:[%s0 + $0x98] sm:$0xff]
  %v43 = vld [vmem:[%s0 + $0xa0] sm:$0xff]
  %v44 = vld [vmem:[%s0 + $0xa8] sm:$0xff]
  %v45 = vld [vmem:[%s0 + $0xb0] sm:$0xff]
  %v46 = vld [vmem:[%s0 + $0xb8] sm:$0xff]
  %v47 = vld [vmem:[%s0 + $0xc0] sm:$0xff]
  %v48 = vld [vmem:[%s0 + $0xc8] sm:$0xff]
  %v49 = vld [vmem:[%s0 + $0xd0] sm:$0xff]
  %v50 = vld [vmem:[%s0 + $0xd8] sm:$0xff]
  %v51 = vld [vmem:[%s0 + $0xe0] sm:$0xff]
  %v52 = vld [vmem:[%s0 + $0xe8] sm:$0xff]
  %v53 = vld [vmem:[%s0 + $0xf0] sm:$0xff]
  %v54 = vld [vmem:[%s0 + $0xf8] sm:$0xff]
  %v55 = vld [vmem:[%s0 + $0x100] sm:$0xff]
  %v56 = vld [vmem:[%s0 + $0x108] sm:$0xff]
  %v57 = vld [vmem:[%s0 + $0x110] sm:$0xff]
  %v58 = vld [vmem:[%s0 + $0x118] sm:$0xff]
  %v59 = vld [vmem:[%s0 + $0x120] sm:$0xff]
  %v60 = vld [vmem:[%s0 + $0x128] sm:$0xff]
  %v61 = vld [vmem:[%s0 + $0x130] sm:$0xff]
  %v62 = vld [vmem:[%s0 + $0x138] sm:$0xff]
  %v63 = vld [vmem:[%s0 + $0x140] sm:$0xff]
  %v64 = vld [vmem:[%s0 + $0x148] sm:$0xff]
  %v65 = vld [vmem:[%s0 + $0x150] sm:$0xff]
  %v66 = vld [vmem:[%s0 + $0x158] sm:$0xff]
  %v67 = vld [vmem:[%s0 + $0x160] sm:$0xff]
  %v68 = vld [vmem:[%s0 + $0x168] sm:$0xff]
  %v69 = vld [vmem:[%s0 + $0x170] sm:$0xff]
  %v70 = vld [vmem:[%s0 + $0x178] sm:$0xff]
  %v71 = vld [vmem:[%s0 + $0x180] sm:$0xff]
  %v72 = vld [vmem:[%s0 + $0x188] sm:$0xff]
  %v73 = vld [vmem:[%s0 + $0x190] sm:$0xff]
  %v74 = vld [vmem:[%s0 + $0x198] sm:$0xff]
  %v75 = vld [vmem:[%s0 + $0x1a0] sm:$0xff]
  %v76 = vld [vmem:[%s0 + $0x1a8] sm:$0xff]
  %v77 = vld [vmem:[%s0 + $0x1b0] sm:$0xff]
  %v78 = vld [vmem:[%s0 + $0x1b8] sm:$0xff]
  %v79 = vld [vmem:[%s0 + $0x1c0] sm:$0xff]
  %v80 = vld [vmem:[%s0 + $0x1c8] sm:$0xff]
  %v81 = vld [vmem:[%s0 + $0x1d0] sm:$0xff]
  %v82 = vld [vmem:[%s0 + $0x1d8] sm:$0xff]
  %v83 = vld [vmem:[%s0 + $0x1e0] sm:$0xff]
  %v84 = vld [vmem:[%s0 + $0x1e8] sm:$0xff]
  %v85 = vld [vmem:[%s0 + $0x1f0] sm:$0xff]
  %v86 = vld [vmem:[%s0 + $0x1f8] sm:$0xff]
  %v87 = vld [vmem:[%s2] sm:$0x1]
  %v89 = vperm.slane %v87, 0
  %v91 = vmul.f32 %v23, %v89
  %v92 = vmul.f32 %v24, %v89
  %v93 = vmul.f32 %v25, %v89
  %v94 = vmul.f32 %v26, %v89
  %v95 = vmul.f32 %v27, %v89
  %v96 = vmul.f32 %v28, %v89
  %v97 = vmul.f32 %v29, %v89
  %v98 = vmul.f32 %v30, %v89
  %v99 = vmul.f32 %v31, %v89
  %v100 = vmul.f32 %v32, %v89
  %v101 = vmul.f32 %v33, %v89
  %v102 = vmul.f32 %v34, %v89
  %v103 = vmul.f32 %v35, %v89
  %v104 = vmul.f32 %v36, %v89
  %v105 = vmul.f32 %v37, %v89
  %v106 = vmul.f32 %v38, %v89
  %v107 = vmul.f32 %v39, %v89
  %v108 = vmul.f32 %v40, %v89
  %v109 = vmul.f32 %v41, %v89
  %v110 = vmul.f32 %v42, %v89
  %v111 = vmul.f32 %v43, %v89
  %v112 = vmul.f32 %v44, %v89
  %v113 = vmul.f32 %v45, %v89
  %v114 = vmul.f32 %v46, %v89
  %v115 = vmul.f32 %v47, %v89
  %v116 = vmul.f32 %v48, %v89
  %v117 = vmul.f32 %v49, %v89
  %v118 = vmul.f32 %v50, %v89
  %v119 = vmul.f32 %v51, %v89
  %v120 = vmul.f32 %v52, %v89
  %v121 = vmul.f32 %v53, %v89
  %v122 = vmul.f32 %v54, %v89
  %v123 = vmul.f32 %v55, %v89
  %v124 = vmul.f32 %v56, %v89
  %v125 = vmul.f32 %v57, %v89
  %v126 = vmul.f32 %v58, %v89
  %v127 = vmul.f32 %v59, %v89
  %v128 = vmul.f32 %v60, %v89
  %v129 = vmul.f32 %v61, %v89
  %v130 = vmul.f32 %v62, %v89
  %v131 = vmul.f32 %v63, %v89
  %v132 = vmul.f32 %v64, %v89
  %v133 = vmul.f32 %v65, %v89
  %v134 = vmul.f32 %v66, %v89
  %v135 = vmul.f32 %v67, %v89
  %v136 = vmul.f32 %v68, %v89
  %v137 = vmul.f32 %v69, %v89
  %v138 = vmul.f32 %v70, %v89
  %v139 = vmul.f32 %v71, %v89
  %v140 = vmul.f32 %v72, %v89
  %v141 = vmul.f32 %v73, %v89
  %v142 = vmul.f32 %v74, %v89
  %v143 = vmul.f32 %v75, %v89
  %v144 = vmul.f32 %v76, %v89
  %v145 = vmul.f32 %v77, %v89
  %v146 = vmul.f32 %v78, %v89
  %v147 = vmul.f32 %v79, %v89
  %v148 = vmul.f32 %v80, %v89
  %v149 = vmul.f32 %v81, %v89
  %v150 = vmul.f32 %v82, %v89
  %v151 = vmul.f32 %v83, %v89
  %v152 = vmul.f32 %v84, %v89
  %v153 = vmul.f32 %v85, %v89
  %v154 = vmul.f32 %v86, %v89
  %v155 = vld [vmem:[%s3] sm:$0x1]
  %v157 = vperm.slane %v155, 0
  %v159 = vadd.f32 %v91, %v157
  %v160 = vadd.f32 %v92, %v157
  %v161 = vadd.f32 %v93, %v157
  %v162 = vadd.f32 %v94, %v157
  %v163 = vadd.f32 %v95, %v157
  %v164 = vadd.f32 %v96, %v157
  %v165 = vadd.f32 %v97, %v157
  %v166 = vadd.f32 %v98, %v157
  %v167 = vadd.f32 %v99, %v157
  %v168 = vadd.f32 %v100, %v157
  %v169 = vadd.f32 %v101, %v157
  %v170 = vadd.f32 %v102, %v157
  %v171 = vadd.f32 %v103, %v157
  %v172 = vadd.f32 %v104, %v157
  %v173 = vadd.f32 %v105, %v157
  %v174 = vadd.f32 %v106, %v157
  %v175 = vadd.f32 %v107, %v157
  %v176 = vadd.f32 %v108, %v157
  %v177 = vadd.f32 %v109, %v157
  %v178 = vadd.f32 %v110, %v157
  %v179 = vadd.f32 %v111, %v157
  %v180 = vadd.f32 %v112, %v157
  %v181 = vadd.f32 %v113, %v157
  %v182 = vadd.f32 %v114, %v157
  %v183 = vadd.f32 %v115, %v157
  %v184 = vadd.f32 %v116, %v157
  %v185 = vadd.f32 %v117, %v157
  %v186 = vadd.f32 %v118, %v157
  %v187 = vadd.f32 %v119, %v157
  %v188 = vadd.f32 %v120, %v157
  %v189 = vadd.f32 %v121, %v157
  %v190 = vadd.f32 %v122, %v157
  %v191 = vadd.f32 %v123, %v157
  %v192 = vadd.f32 %v124, %v157
  %v193 = vadd.f32 %v125, %v157
  %v194 = vadd.f32 %v126, %v157
  %v195 = vadd.f32 %v127, %v157
  %v196 = vadd.f32 %v128, %v157
  %v197 = vadd.f32 %v129, %v157
  %v198 = vadd.f32 %v130, %v157
  %v199 = vadd.f32 %v131, %v157
  %v200 = vadd.f32 %v132, %v157
  %v201 = vadd.f32 %v133, %v157
  %v202 = vadd.f32 %v134, %v157
  %v203 = vadd.f32 %v135, %v157
  %v204 = vadd.f32 %v136, %v157
  %v205 = vadd.f32 %v137, %v157
  %v206 = vadd.f32 %v138, %v157
  %v207 = vadd.f32 %v139, %v157
  %v208 = vadd.f32 %v140, %v157
  %v209 = vadd.f32 %v141, %v157
  %v210 = vadd.f32 %v142, %v157
  %v211 = vadd.f32 %v143, %v157
  %v212 = vadd.f32 %v144, %v157
  %v213 = vadd.f32 %v145, %v157
  %v214 = vadd.f32 %v146, %v157
  %v215 = vadd.f32 %v147, %v157
  %v216 = vadd.f32 %v148, %v157
  %v217 = vadd.f32 %v149, %v157
  %v218 = vadd.f32 %v150, %v157
  %v219 = vadd.f32 %v151, %v157
  %v220 = vadd.f32 %v152, %v157
  %v221 = vadd.f32 %v153, %v157
  %v222 = vadd.f32 %v154, %v157
  %v223 = vld [vmem:[%s1] sm:$0xff]
  %v224 = vld [vmem:[%s1 + $0x8] sm:$0xff]
  %v225 = vld [vmem:[%s1 + $0x10] sm:$0xff]
  %v226 = vld [vmem:[%s1 + $0x18] sm:$0xff]
  %v227 = vld [vmem:[%s1 + $0x20] sm:$0xff]
  %v228 = vld [vmem:[%s1 + $0x28] sm:$0xff]
  %v229 = vld [vmem:[%s1 + $0x30] sm:$0xff]
  %v230 = vld [vmem:[%s1 + $0x38] sm:$0xff]
  %v231 = vld [vmem:[%s1 + $0x40] sm:$0xff]
  %v232 = vld [vmem:[%s1 + $0x48] sm:$0xff]
  %v233 = vld [vmem:[%s1 + $0x50] sm:$0xff]
  %v234 = vld [vmem:[%s1 + $0x58] sm:$0xff]
  %v235 = vld [vmem:[%s1 + $0x60] sm:$0xff]
  %v236 = vld [vmem:[%s1 + $0x68] sm:$0xff]
  %v237 = vld [vmem:[%s1 + $0x70] sm:$0xff]
  %v238 = vld [vmem:[%s1 + $0x78] sm:$0xff]
  %v239 = vld [vmem:[%s1 + $0x80] sm:$0xff]
  %v240 = vld [vmem:[%s1 + $0x88] sm:$0xff]
  %v241 = vld [vmem:[%s1 + $0x90] sm:$0xff]
  %v242 = vld [vmem:[%s1 + $0x98] sm:$0xff]
  %v243 = vld [vmem:[%s1 + $0xa0] sm:$0xff]
  %v244 = vld [vmem:[%s1 + $0xa8] sm:$0xff]
  %v245 = vld [vmem:[%s1 + $0xb0] sm:$0xff]
  %v246 = vld [vmem:[%s1 + $0xb8] sm:$0xff]
  %v247 = vld [vmem:[%s1 + $0xc0] sm:$0xff]
  %v248 = vld [vmem:[%s1 + $0xc8] sm:$0xff]
  %v249 = vld [vmem:[%s1 + $0xd0] sm:$0xff]
  %v250 = vld [vmem:[%s1 + $0xd8] sm:$0xff]
  %v251 = vld [vmem:[%s1 + $0xe0] sm:$0xff]
  %v252 = vld [vmem:[%s1 + $0xe8] sm:$0xff]
  %v253 = vld [vmem:[%s1 + $0xf0] sm:$0xff]
  %v254 = vld [vmem:[%s1 + $0xf8] sm:$0xff]
  %v255 = vld [vmem:[%s1 + $0x100] sm:$0xff]
  %v256 = vld [vmem:[%s1 + $0x108] sm:$0xff]
  %v257 = vld [vmem:[%s1 + $0x110] sm:$0xff]
  %v258 = vld [vmem:[%s1 + $0x118] sm:$0xff]
  %v259 = vld [vmem:[%s1 + $0x120] sm:$0xff]
  %v260 = vld [vmem:[%s1 + $0x128] sm:$0xff]
  %v261 = vld [vmem:[%s1 + $0x130] sm:$0xff]
  %v262 = vld [vmem:[%s1 + $0x138] sm:$0xff]
  %v263 = vld [vmem:[%s1 + $0x140] sm:$0xff]
  %v264 = vld [vmem:[%s1 + $0x148] sm:$0xff]
  %v265 = vld [vmem:[%s1 + $0x150] sm:$0xff]
  %v266 = vld [vmem:[%s1 + $0x158] sm:$0xff]
  %v267 = vld [vmem:[%s1 + $0x160] sm:$0xff]
  %v268 = vld [vmem:[%s1 + $0x168] sm:$0xff]
  %v269 = vld [vmem:[%s1 + $0x170] sm:$0xff]
  %v270 = vld [vmem:[%s1 + $0x178] sm:$0xff]
  %v271 = vld [vmem:[%s1 + $0x180] sm:$0xff]
  %v272 = vld [vmem:[%s1 + $0x188] sm:$0xff]
  %v273 = vld [vmem:[%s1 + $0x190] sm:$0xff]
  %v274 = vld [vmem:[%s1 + $0x198] sm:$0xff]
  %v275 = vld [vmem:[%s1 + $0x1a0] sm:$0xff]
  %v276 = vld [vmem:[%s1 + $0x1a8] sm:$0xff]
  %v277 = vld [vmem:[%s1 + $0x1b0] sm:$0xff]
  %v278 = vld [vmem:[%s1 + $0x1b8] sm:$0xff]
  %v279 = vld [vmem:[%s1 + $0x1c0] sm:$0xff]
  %v280 = vld [vmem:[%s1 + $0x1c8] sm:$0xff]
  %v281 = vld [vmem:[%s1 + $0x1d0] sm:$0xff]
  %v282 = vld [vmem:[%s1 + $0x1d8] sm:$0xff]
  %v283 = vld [vmem:[%s1 + $0x1e0] sm:$0xff]
  %v284 = vld [vmem:[%s1 + $0x1e8] sm:$0xff]
  %v285 = vld [vmem:[%s1 + $0x1f0] sm:$0xff]
  %v286 = vld [vmem:[%s1 + $0x1f8] sm:$0xff]
  %v287 = vld [vmem:[%s4] sm:$0x1]
  %v289 = vperm.slane %v287, 0
  %v291 = vmul.f32 %v223, %v289
  %v292 = vmul.f32 %v224, %v289
  %v293 = vmul.f32 %v225, %v289
  %v294 = vmul.f32 %v226, %v289
  %v295 = vmul.f32 %v227, %v289
  %v296 = vmul.f32 %v228, %v289
  %v297 = vmul.f32 %v229, %v289
  %v298 = vmul.f32 %v230, %v289
  %v299 = vmul.f32 %v231, %v289
  %v300 = vmul.f32 %v232, %v289
  %v301 = vmul.f32 %v233, %v289
  %v302 = vmul.f32 %v234, %v289
  %v303 = vmul.f32 %v235, %v289
  %v304 = vmul.f32 %v236, %v289
  %v305 = vmul.f32 %v237, %v289
  %v306 = vmul.f32 %v238, %v289
  %v307 = vmul.f32 %v239, %v289
  %v308 = vmul.f32 %v240, %v289
  %v309 = vmul.f32 %v241, %v289
  %v310 = vmul.f32 %v242, %v289
  %v311 = vmul.f32 %v243, %v289
  %v312 = vmul.f32 %v244, %v289
  %v313 = vmul.f32 %v245, %v289
  %v314 = vmul.f32 %v246, %v289
  %v315 = vmul.f32 %v247, %v289
  %v316 = vmul.f32 %v248, %v289
  %v317 = vmul.f32 %v249, %v289
  %v318 = vmul.f32 %v250, %v289
  %v319 = vmul.f32 %v251, %v289
  %v320 = vmul.f32 %v252, %v289
  %v321 = vmul.f32 %v253, %v289
  %v322 = vmul.f32 %v254, %v289
  %v323 = vmul.f32 %v255, %v289
  %v324 = vmul.f32 %v256, %v289
  %v325 = vmul.f32 %v257, %v289
  %v326 = vmul.f32 %v258, %v289
  %v327 = vmul.f32 %v259, %v289
  %v328 = vmul.f32 %v260, %v289
  %v329 = vmul.f32 %v261, %v289
  %v330 = vmul.f32 %v262, %v289
  %v331 = vmul.f32 %v263, %v289
  %v332 = vmul.f32 %v264, %v289
  %v333 = vmul.f32 %v265, %v289
  %v334 = vmul.f32 %v266, %v289
  %v335 = vmul.f32 %v267, %v289
  %v336 = vmul.f32 %v268, %v289
  %v337 = vmul.f32 %v269, %v289
  %v338 = vmul.f32 %v270, %v289
  %v339 = vmul.f32 %v271, %v289
  %v340 = vmul.f32 %v272, %v289
  %v341 = vmul.f32 %v273, %v289
  %v342 = vmul.f32 %v274, %v289
  %v343 = vmul.f32 %v275, %v289
  %v344 = vmul.f32 %v276, %v289
  %v345 = vmul.f32 %v277, %v289
  %v346 = vmul.f32 %v278, %v289
  %v347 = vmul.f32 %v279, %v289
  %v348 = vmul.f32 %v280, %v289
  %v349 = vmul.f32 %v281, %v289
  %v350 = vmul.f32 %v282, %v289
  %v351 = vmul.f32 %v283, %v289
  %v352 = vmul.f32 %v284, %v289
  %v353 = vmul.f32 %v285, %v289
  %v354 = vmul.f32 %v286, %v289
  %v355 = vld [vmem:[%s5] sm:$0x1]
  %v357 = vperm.slane %v355, 0
  %v359 = vadd.f32 %v291, %v357
  %v360 = vadd.f32 %v292, %v357
  %v361 = vadd.f32 %v293, %v357
  %v362 = vadd.f32 %v294, %v357
  %v363 = vadd.f32 %v295, %v357
  %v364 = vadd.f32 %v296, %v357
  %v365 = vadd.f32 %v297, %v357
  %v366 = vadd.f32 %v298, %v357
  %v367 = vadd.f32 %v299, %v357
  %v368 = vadd.f32 %v300, %v357
  %v369 = vadd.f32 %v301, %v357
  %v370 = vadd.f32 %v302, %v357
  %v371 = vadd.f32 %v303, %v357
  %v372 = vadd.f32 %v304, %v357
  %v373 = vadd.f32 %v305, %v357
  %v374 = vadd.f32 %v306, %v357
  %v375 = vadd.f32 %v307, %v357
  %v376 = vadd.f32 %v308, %v357
  %v377 = vadd.f32 %v309, %v357
  %v378 = vadd.f32 %v310, %v357
  %v379 = vadd.f32 %v311, %v357
  %v380 = vadd.f32 %v312, %v357
  %v381 = vadd.f32 %v313, %v357
  %v382 = vadd.f32 %v314, %v357
  %v383 = vadd.f32 %v315, %v357
  %v384 = vadd.f32 %v316, %v357
  %v385 = vadd.f32 %v317, %v357
  %v386 = vadd.f32 %v318, %v357
  %v387 = vadd.f32 %v319, %v357
  %v388 = vadd.f32 %v320, %v357
  %v389 = vadd.f32 %v321, %v357
  %v390 = vadd.f32 %v322, %v357
  %v391 = vadd.f32 %v323, %v357
  %v392 = vadd.f32 %v324, %v357
  %v393 = vadd.f32 %v325, %v357
  %v394 = vadd.f32 %v326, %v357
  %v395 = vadd.f32 %v327, %v357
  %v396 = vadd.f32 %v328, %v357
  %v397 = vadd.f32 %v329, %v357
  %v398 = vadd.f32 %v330, %v357
  %v399 = vadd.f32 %v331, %v357
  %v400 = vadd.f32 %v332, %v357
  %v401 = vadd.f32 %v333, %v357
  %v402 = vadd.f32 %v334, %v357
  %v403 = vadd.f32 %v335, %v357
  %v404 = vadd.f32 %v336, %v357
  %v405 = vadd.f32 %v337, %v357
  %v406 = vadd.f32 %v338, %v357
  %v407 = vadd.f32 %v339, %v357
  %v408 = vadd.f32 %v340, %v357
  %v409 = vadd.f32 %v341, %v357
  %v410 = vadd.f32 %v342, %v357
  %v411 = vadd.f32 %v343, %v357
  %v412 = vadd.f32 %v344, %v357
  %v413 = vadd.f32 %v345, %v357
  %v414 = vadd.f32 %v346, %v357
  %v415 = vadd.f32 %v347, %v357
  %v416 = vadd.f32 %v348, %v357
  %v417 = vadd.f32 %v349, %v357
  %v418 = vadd.f32 %v350, %v357
  %v419 = vadd.f32 %v351, %v357
  %v420 = vadd.f32 %v352, %v357
  %v421 = vadd.f32 %v353, %v357
  %v422 = vadd.f32 %v354, %v357
  %v423 = vadd.f32 %v159, %v359
  %v424 = vadd.f32 %v160, %v360
  %v425 = vadd.f32 %v161, %v361
  %v426 = vadd.f32 %v162, %v362
  %v427 = vadd.f32 %v163, %v363
  %v428 = vadd.f32 %v164, %v364
  %v429 = vadd.f32 %v165, %v365
  %v430 = vadd.f32 %v166, %v366
  %v431 = vadd.f32 %v167, %v367
  %v432 = vadd.f32 %v168, %v368
  %v433 = vadd.f32 %v169, %v369
  %v434 = vadd.f32 %v170, %v370
  %v435 = vadd.f32 %v171, %v371
  %v436 = vadd.f32 %v172, %v372
  %v437 = vadd.f32 %v173, %v373
  %v438 = vadd.f32 %v174, %v374
  %v439 = vadd.f32 %v175, %v375
  %v440 = vadd.f32 %v176, %v376
  %v441 = vadd.f32 %v177, %v377
  %v442 = vadd.f32 %v178, %v378
  %v443 = vadd.f32 %v179, %v379
  %v444 = vadd.f32 %v180, %v380
  %v445 = vadd.f32 %v181, %v381
  %v446 = vadd.f32 %v182, %v382
  %v447 = vadd.f32 %v183, %v383
  %v448 = vadd.f32 %v184, %v384
  %v449 = vadd.f32 %v185, %v385
  %v450 = vadd.f32 %v186, %v386
  %v451 = vadd.f32 %v187, %v387
  %v452 = vadd.f32 %v188, %v388
  %v453 = vadd.f32 %v189, %v389
  %v454 = vadd.f32 %v190, %v390
  %v455 = vadd.f32 %v191, %v391
  %v456 = vadd.f32 %v192, %v392
  %v457 = vadd.f32 %v193, %v393
  %v458 = vadd.f32 %v194, %v394
  %v459 = vadd.f32 %v195, %v395
  %v460 = vadd.f32 %v196, %v396
  %v461 = vadd.f32 %v197, %v397
  %v462 = vadd.f32 %v198, %v398
  %v463 = vadd.f32 %v199, %v399
  %v464 = vadd.f32 %v200, %v400
  %v465 = vadd.f32 %v201, %v401
  %v466 = vadd.f32 %v202, %v402
  %v467 = vadd.f32 %v203, %v403
  %v468 = vadd.f32 %v204, %v404
  %v469 = vadd.f32 %v205, %v405
  %v470 = vadd.f32 %v206, %v406
  %v471 = vadd.f32 %v207, %v407
  %v472 = vadd.f32 %v208, %v408
  %v473 = vadd.f32 %v209, %v409
  %v474 = vadd.f32 %v210, %v410
  %v475 = vadd.f32 %v211, %v411
  %v476 = vadd.f32 %v212, %v412
  %v477 = vadd.f32 %v213, %v413
  %v478 = vadd.f32 %v214, %v414
  %v479 = vadd.f32 %v215, %v415
  %v480 = vadd.f32 %v216, %v416
  %v481 = vadd.f32 %v217, %v417
  %v482 = vadd.f32 %v218, %v418
  %v483 = vadd.f32 %v219, %v419
  %v484 = vadd.f32 %v220, %v420
  %v485 = vadd.f32 %v221, %v421
  %v486 = vadd.f32 %v222, %v422
  %v487 = vmax.f32 %v423, 0.0
  %v488 = vmax.f32 %v424, 0.0
  %v489 = vmax.f32 %v425, 0.0
  %v490 = vmax.f32 %v426, 0.0
  %v491 = vmax.f32 %v427, 0.0
  %v492 = vmax.f32 %v428, 0.0
  %v493 = vmax.f32 %v429, 0.0
  %v494 = vmax.f32 %v430, 0.0
  %v495 = vmax.f32 %v431, 0.0
  %v496 = vmax.f32 %v432, 0.0
  %v497 = vmax.f32 %v433, 0.0
  %v498 = vmax.f32 %v434, 0.0
  %v499 = vmax.f32 %v435, 0.0
  %v500 = vmax.f32 %v436, 0.0
  %v501 = vmax.f32 %v437, 0.0
  %v502 = vmax.f32 %v438, 0.0
  %v503 = vmax.f32 %v439, 0.0
  %v504 = vmax.f32 %v440, 0.0
  %v505 = vmax.f32 %v441, 0.0
  %v506 = vmax.f32 %v442, 0.0
  %v507 = vmax.f32 %v443, 0.0
  %v508 = vmax.f32 %v444, 0.0
  %v509 = vmax.f32 %v445, 0.0
  %v510 = vmax.f32 %v446, 0.0
  %v511 = vmax.f32 %v447, 0.0
  %v512 = vmax.f32 %v448, 0.0
  %v513 = vmax.f32 %v449, 0.0
  %v514 = vmax.f32 %v450, 0.0
  %v515 = vmax.f32 %v451, 0.0
  %v516 = vmax.f32 %v452, 0.0
  %v517 = vmax.f32 %v453, 0.0
  %v518 = vmax.f32 %v454, 0.0
  %v519 = vmax.f32 %v455, 0.0
  %v520 = vmax.f32 %v456, 0.0
  %v521 = vmax.f32 %v457, 0.0
  %v522 = vmax.f32 %v458, 0.0
  %v523 = vmax.f32 %v459, 0.0
  %v524 = vmax.f32 %v460, 0.0
  %v525 = vmax.f32 %v461, 0.0
  %v526 = vmax.f32 %v462, 0.0
  %v527 = vmax.f32 %v463, 0.0
  %v528 = vmax.f32 %v464, 0.0
  %v529 = vmax.f32 %v465, 0.0
  %v530 = vmax.f32 %v466, 0.0
  %v531 = vmax.f32 %v467, 0.0
  %v532 = vmax.f32 %v468, 0.0
  %v533 = vmax.f32 %v469, 0.0
  %v534 = vmax.f32 %v470, 0.0
  %v535 = vmax.f32 %v471, 0.0
  %v536 = vmax.f32 %v472, 0.0
  %v537 = vmax.f32 %v473, 0.0
  %v538 = vmax.f32 %v474, 0.0
  %v539 = vmax.f32 %v475, 0.0
  %v540 = vmax.f32 %v476, 0.0
  %v541 = vmax.f32 %v477, 0.0
  %v542 = vmax.f32 %v478, 0.0
  %v543 = vmax.f32 %v479, 0.0
  %v544 = vmax.f32 %v480, 0.0
  %v545 = vmax.f32 %v481, 0.0
  %v546 = vmax.f32 %v482, 0.0
  %v547 = vmax.f32 %v483, 0.0
  %v548 = vmax.f32 %v484, 0.0
  %v549 = vmax.f32 %v485, 0.0
  %v550 = vmax.f32 %v486, 0.0
  %551 = vst [vmem:[%s6] sm:$0xff] %v487
  %552 = vst [vmem:[%s6 + $0x8] sm:$0xff] %v488
  %553 = vst [vmem:[%s6 + $0x10] sm:$0xff] %v489
  %554 = vst [vmem:[%s6 + $0x18] sm:$0xff] %v490
  %555 = vst [vmem:[%s6 + $0x20] sm:$0xff] %v491
  %556 = vst [vmem:[%s6 + $0x28] sm:$0xff] %v492
  %557 = vst [vmem:[%s6 + $0x30] sm:$0xff] %v493
  %558 = vst [vmem:[%s6 + $0x38] sm:$0xff] %v494
  %559 = vst [vmem:[%s6 + $0x40] sm:$0xff] %v495
  %560 = vst [vmem:[%s6 + $0x48] sm:$0xff] %v496
  %561 = vst [vmem:[%s6 + $0x50] sm:$0xff] %v497
  %562 = vst [vmem:[%s6 + $0x58] sm:$0xff] %v498
  %563 = vst [vmem:[%s6 + $0x60] sm:$0xff] %v499
  %564 = vst [vmem:[%s6 + $0x68] sm:$0xff] %v500
  %565 = vst [vmem:[%s6 + $0x70] sm:$0xff] %v501
  %566 = vst [vmem:[%s6 + $0x78] sm:$0xff] %v502
  %567 = vst [vmem:[%s6 + $0x80] sm:$0xff] %v503
  %568 = vst [vmem:[%s6 + $0x88] sm:$0xff] %v504
  %569 = vst [vmem:[%s6 + $0x90] sm:$0xff] %v505
  %570 = vst [vmem:[%s6 + $0x98] sm:$0xff] %v506
  %571 = vst [vmem:[%s6 + $0xa0] sm:$0xff] %v507
  %572 = vst [vmem:[%s6 + $0xa8] sm:$0xff] %v508
  %573 = vst [vmem:[%s6 + $0xb0] sm:$0xff] %v509
  %574 = vst [vmem:[%s6 + $0xb8] sm:$0xff] %v510
  %575 = vst [vmem:[%s6 + $0xc0] sm:$0xff] %v511
  %576 = vst [vmem:[%s6 + $0xc8] sm:$0xff] %v512
  %577 = vst [vmem:[%s6 + $0xd0] sm:$0xff] %v513
  %578 = vst [vmem:[%s6 + $0xd8] sm:$0xff] %v514
  %579 = vst [vmem:[%s6 + $0xe0] sm:$0xff] %v515
  %580 = vst [vmem:[%s6 + $0xe8] sm:$0xff] %v516
  %581 = vst [vmem:[%s6 + $0xf0] sm:$0xff] %v517
  %582 = vst [vmem:[%s6 + $0xf8] sm:$0xff] %v518
  %583 = vst [vmem:[%s6 + $0x100] sm:$0xff] %v519
  %584 = vst [vmem:[%s6 + $0x108] sm:$0xff] %v520
  %585 = vst [vmem:[%s6 + $0x110] sm:$0xff] %v521
  %586 = vst [vmem:[%s6 + $0x118] sm:$0xff] %v522
  %587 = vst [vmem:[%s6 + $0x120] sm:$0xff] %v523
  %588 = vst [vmem:[%s6 + $0x128] sm:$0xff] %v524
  %589 = vst [vmem:[%s6 + $0x130] sm:$0xff] %v525
  %590 = vst [vmem:[%s6 + $0x138] sm:$0xff] %v526
  %591 = vst [vmem:[%s6 + $0x140] sm:$0xff] %v527
  %592 = vst [vmem:[%s6 + $0x148] sm:$0xff] %v528
  %593 = vst [vmem:[%s6 + $0x150] sm:$0xff] %v529
  %594 = vst [vmem:[%s6 + $0x158] sm:$0xff] %v530
  %595 = vst [vmem:[%s6 + $0x160] sm:$0xff] %v531
  %596 = vst [vmem:[%s6 + $0x168] sm:$0xff] %v532
  %597 = vst [vmem:[%s6 + $0x170] sm:$0xff] %v533
  %598 = vst [vmem:[%s6 + $0x178] sm:$0xff] %v534
  %599 = vst [vmem:[%s6 + $0x180] sm:$0xff] %v535
  %600 = vst [vmem:[%s6 + $0x188] sm:$0xff] %v536
  %601 = vst [vmem:[%s6 + $0x190] sm:$0xff] %v537
  %602 = vst [vmem:[%s6 + $0x198] sm:$0xff] %v538
  %603 = vst [vmem:[%s6 + $0x1a0] sm:$0xff] %v539
  %604 = vst [vmem:[%s6 + $0x1a8] sm:$0xff] %v540
  %605 = vst [vmem:[%s6 + $0x1b0] sm:$0xff] %v541
  %606 = vst [vmem:[%s6 + $0x1b8] sm:$0xff] %v542
  %607 = vst [vmem:[%s6 + $0x1c0] sm:$0xff] %v543
  %608 = vst [vmem:[%s6 + $0x1c8] sm:$0xff] %v544
  %609 = vst [vmem:[%s6 + $0x1d0] sm:$0xff] %v545
  %610 = vst [vmem:[%s6 + $0x1d8] sm:$0xff] %v546
  %611 = vst [vmem:[%s6 + $0x1e0] sm:$0xff] %v547
  %612 = vst [vmem:[%s6 + $0x1e8] sm:$0xff] %v548
  %613 = vst [vmem:[%s6 + $0x1f0] sm:$0xff] %v549
  %614 = vst [vmem:[%s6 + $0x1f8] sm:$0xff] %v550
  // Predicated region
  $region26: #{residual_block_forward.7} parent=0 // pred_check
    _
  $region27: #{residual_block_forward.7} parent=0 // pred_check_branch
    %616 = sbr.rel (0) target = $region29
  $region28: #{residual_block_forward.7} parent=0 // pred_region
    _
  $region29: #{residual_block_forward.7} parent=0 // pred_fallthru
    _
  // Predicated region
  $region30: #{residual_block_forward.7} parent=0 // pred_check
    _
  $region31: #{residual_block_forward.7} parent=0 // pred_check_branch
    %618 = sbr.rel (0) target = $region33
  $region32: #{residual_block_forward.7} parent=0 // pred_region
    _
  $region33: #{residual_block_forward.7} parent=0 // pred_fallthru
    _

</llo_original>
